<compile_context>
chip_gen: v7x
topology: tpu7x:2x2x1
jax: 0.10.0
libtpu: 0.0.40
codegen_flags: <defaults>
</compile_context>

<pallas_src>
import functools

import jax
import jax.numpy as jnp
from jax.experimental import pallas as pl
from jax.experimental.pallas import tpu as pltpu


def _round_up(x, m):
    return ((x + m - 1) // m) * m


def resblock_kernel(x_ref, w1_ref, w2_ref, b1_ref, b2_ref,
                    se1_ref, se2_ref, mask_ref, o_ref, *, shifts):
    f32 = jnp.float32
    mask = mask_ref[...]                                    # (1, WL): 1.0 on interior pixels

    def conv3x3(src, w_ref):
        # im2col: stack the 9 lane-rotated taps on the sublane axis -> (9C, WL),
        # then a single MXU matmul with K = 9*C.
        taps = [src if s == 0 else pltpu.roll(src, s, axis=1) for s in shifts]
        stack = jnp.concatenate(taps, axis=0)
        return jnp.dot(w_ref[...], stack, preferred_element_type=f32)

    xe = x_ref[...].astype(f32)                             # (C, WL) zero-padded input slab

    # ---- conv1 (BN1 scale folded into weights) -> +bias -> ReLU -> mask ----
    # TODO(synk): training-mode Dropout2d would need pltpu.prng_* channel masks.
    h1 = jnp.maximum(conv3x3(xe, w1_ref) + b1_ref[...], 0.0) * mask

    # ---- conv2 (BN2 scale folded) -> +bias -> mask --------------------------
    x2 = (conv3x3(h1, w2_ref) + b2_ref[...]) * mask         # (C, WL), 0 off-interior

    # ---- Squeeze-and-Excitation (VPU math; 1/(H*W) folded into se1) ---------
    pooled = jnp.sum(x2, axis=1, keepdims=True)                                       # (C, 1)
    hidden = jnp.maximum(jnp.sum(pooled * se1_ref[...], axis=0, keepdims=True), 0.0)  # (1, Cr)
    gate = jax.nn.sigmoid(jnp.sum(se2_ref[...] * hidden, axis=1, keepdims=True))      # (C, 1)

    # ---- residual add + ReLU (Dropout2d #2 is identity at inference) --------
    o_ref[...] = jnp.maximum(x2 * gate + xe, 0.0).astype(o_ref.dtype)


def resblock_forward(x, conv1_w, conv2_w,
                     bn1_scale, bn1_bias, bn2_scale, bn2_bias,
                     fc1_w, fc2_w):
    """Inference-mode ResBlock forward.

    x:                (B, C, H, W)
    conv1_w, conv2_w: (C, C, 3, 3)  OIHW, already spectrally normalised
    bn?_scale/bias:   (C,)          folded BatchNorm affine (running stats;
                                    any conv bias is absorbed into the bias)
    fc1_w:            (C//r, C)     SE first linear (torch layout, no bias)
    fc2_w:            (C, C//r)     SE second linear (torch layout, no bias)
    """
    B, C, H, W = x.shape
    Cr = fc1_w.shape[0]
    Hp, Wp = H + 2, W + 2
    HWp = Hp * Wp
    WL = _round_up(HWp, 128)               # lane-dense working / output width
    dtype = x.dtype

    # 3x3 stencil offsets in the flattened padded image; roll-based conv is
    # only valid when wrap-around stays inside masked lanes.
    offsets = tuple((ky - 1) * Wp + (kx - 1) for ky in range(3) for kx in range(3))
    max_shift = max(abs(d) for d in offsets)
    assert HWp + max_shift <= WL, "roll-based conv needs HWp + max|shift| <= WL"
    shifts = tuple((-d) % WL for d in offsets)   # roll amount so rolled[p] = src[p+d]

    # Zero-pad spatially, flatten, zero-extend lanes to WL.
    xp = jnp.pad(x, ((0, 0), (0, 0), (1, 1), (1, 1))).reshape(B, C, HWp)
    x_ext = jnp.pad(xp, ((0, 0), (0, 0), (0, WL - HWp)))

    # Conv weights -> (Cout, 9*Cin), tap-major (k = ky*3+kx), BN scale folded in.
    def fold_weight(conv_w, bn_scale):
        w = conv_w * bn_scale[:, None, None, None]
        return w.transpose(0, 2, 3, 1).reshape(C, 9 * C).astype(jnp.float32)

    w1 = fold_weight(conv1_w, bn1_scale)
    w2 = fold_weight(conv2_w, bn2_scale)

    # Interior-pixel mask over the WL-wide working axis.
    p = jnp.arange(WL)
    hh, ww = p // Wp, p % Wp
    interior = (p < HWp) & (hh >= 1) & (hh <= H) & (ww >= 1) & (ww <= W)
    mask = interior.astype(jnp.float32).reshape(1, WL)

    col = lambda v: v.astype(jnp.float32).reshape(C, 1)
    se1 = (fc1_w.T * (1.0 / float(H * W))).astype(jnp.float32)   # (C, Cr), 1/HW folded
    se2 = fc2_w.astype(jnp.float32)                              # (C, Cr)

    kernel = functools.partial(resblock_kernel, shifts=shifts)

    flops = B * 2 * 2 * C * (9 * C) * WL                  # two im2col matmuls / batch
    bytes_accessed = 4 * (x_ext.size + w1.size + w2.size + B * C * WL
                          + 4 * C + 2 * C * Cr + WL)
    cost = pl.CostEstimate(flops=flops, transcendentals=B * C * 2,
                           bytes_accessed=bytes_accessed)

    out_ext = pl.pallas_call(
        kernel,
        out_shape=jax.ShapeDtypeStruct((B, C, WL), dtype),
        grid_spec=pltpu.PrefetchScalarGridSpec(
            num_scalar_prefetch=0,
            grid=(B,),
            in_specs=[
                pl.BlockSpec((None, C, WL), lambda b: (b, 0, 0)),   # x slab
                pl.BlockSpec((C, 9 * C), lambda b: (0, 0)),         # conv1 (BN1 folded)
                pl.BlockSpec((C, 9 * C), lambda b: (0, 0)),         # conv2 (BN2 folded)
                pl.BlockSpec((C, 1), lambda b: (0, 0)),             # bn1 bias
                pl.BlockSpec((C, 1), lambda b: (0, 0)),             # bn2 bias
                pl.BlockSpec((C, Cr), lambda b: (0, 0)),            # SE fc1 (1/HW folded)
                pl.BlockSpec((C, Cr), lambda b: (0, 0)),            # SE fc2
                pl.BlockSpec((1, WL), lambda b: (0, 0)),            # interior mask
            ],
            out_specs=pl.BlockSpec((None, C, WL), lambda b: (b, 0, 0)),
        ),
        compiler_params=pltpu.CompilerParams(
            dimension_semantics=("parallel",),
            vmem_limit_bytes=32 * 1024 * 1024),
        cost_estimate=cost,
    )(x_ext, w1, w2, col(bn1_bias), col(bn2_bias), se1, se2, mask)

    # Drop the lane extension / padding ring -> (B, C, H, W).
    return out_ext[:, :, :HWp].reshape(B, C, Hp, Wp)[:, :, 1:-1, 1:-1]


def spectral_normalize(w, n_iter=20):
    """PyTorch spectral_norm weight reparametrisation (power iteration)."""
    wm = w.reshape(w.shape[0], -1)
    v = jnp.ones((wm.shape[1],), jnp.float32) / jnp.sqrt(float(wm.shape[1]))
    u = wm @ v
    for _ in range(n_iter):
        u = wm @ v
        u = u / (jnp.linalg.norm(u) + 1e-12)
        v = wm.T @ u
        v = v / (jnp.linalg.norm(v) + 1e-12)
    sigma = u @ (wm @ v)
    return w / sigma


def ref_resblock(x, w1, w2, bn1_s, bn1_b, bn2_s, bn2_b, fc1_w, fc2_w):
    """Plain-JAX reference of the inference-mode ResBlock forward."""
    dn = ('NCHW', 'OIHW', 'NCHW')
    conv = lambda t, w: jax.lax.conv_general_dilated(
        t, w, window_strides=(1, 1), padding='SAME', dimension_numbers=dn,
        precision=jax.lax.Precision.HIGHEST)
    bc = lambda v: v[None, :, None, None]
    h = jax.nn.relu(conv(x, w1) * bc(bn1_s) + bc(bn1_b))
    h = conv(h, w2) * bc(bn2_s) + bc(bn2_b)
    pooled = h.mean(axis=(2, 3))                      # (B, C)
    z = jax.nn.relu(pooled @ fc1_w.T)                 # (B, Cr)
    s = jax.nn.sigmoid(z @ fc2_w.T)                   # (B, C)
    h = h * s[:, :, None, None]
    return jax.nn.relu(h + x)


if __name__ == "__main__":
    jax.config.update("jax_default_matmul_precision", "highest")

    # ResBlock(channels=32) on a small 8x8 feature map, batch 2.
    B, C, H, W = 2, 32, 8, 8
    reduction = 16
    Cr = C // reduction
    eps = 1e-5

    keys = jax.random.split(jax.random.PRNGKey(0), 13)

    x = jax.random.normal(keys[0], (B, C, H, W), dtype=jnp.float32)

    conv1_w = spectral_normalize(
        jax.random.normal(keys[1], (C, C, 3, 3), jnp.float32) * 0.1)
    conv2_w = spectral_normalize(
        jax.random.normal(keys[2], (C, C, 3, 3), jnp.float32) * 0.1)

    # Inference-mode BatchNorm folded to per-channel scale / bias.
    def bn_params(kg, kb, km, kv):
        gamma = 1.0 + 0.1 * jax.random.normal(kg, (C,), jnp.float32)
        beta = 0.1 * jax.random.normal(kb, (C,), jnp.float32)
        mean = 0.1 * jax.random.normal(km, (C,), jnp.float32)
        var = 0.5 + jax.random.uniform(kv, (C,), jnp.float32)
        scale = gamma / jnp.sqrt(var + eps)
        return scale, beta - mean * scale

    bn1_s, bn1_b = bn_params(keys[3], keys[4], keys[5], keys[6])
    bn2_s, bn2_b = bn_params(keys[7], keys[8], keys[9], keys[10])

    fc1_w = jax.random.normal(keys[11], (Cr, C), jnp.float32) * 0.3   # (Cr, C)
    fc2_w = jax.random.normal(keys[12], (C, Cr), jnp.float32) * 0.3   # (C, Cr)

    out = resblock_forward(x, conv1_w, conv2_w,
                           bn1_s, bn1_b, bn2_s, bn2_b, fc1_w, fc2_w)
    jax.block_until_ready(out)

    ref = ref_resblock(x, conv1_w, conv2_w,
                       bn1_s, bn1_b, bn2_s, bn2_b, fc1_w, fc2_w)
    assert out.shape == (B, C, H, W)
    err = float(jnp.max(jnp.abs(out - ref)))
    assert jnp.allclose(out, ref, atol=1e-3, rtol=1e-3), f"max abs err {err}"

    print("KERNEL_OK")
</pallas_src>

<mosaic_0001>
module attributes {stable_mosaic.version = 11 : i64} {
  func.func @resblock_kernel(%arg0: i32, %arg1: memref<1x32x128xf32, #tpu.memory_space<vmem>>, %arg2: memref<32x288xf32, #tpu.memory_space<vmem>>, %arg3: memref<32x288xf32, #tpu.memory_space<vmem>>, %arg4: memref<32x1xf32, #tpu.memory_space<vmem>>, %arg5: memref<32x1xf32, #tpu.memory_space<vmem>>, %arg6: memref<32x2xf32, #tpu.memory_space<vmem>>, %arg7: memref<32x2xf32, #tpu.memory_space<vmem>>, %arg8: memref<1x128xf32, #tpu.memory_space<vmem>>, %arg9: memref<1x32x128xf32, #tpu.memory_space<vmem>>) attributes {dimension_semantics = [#tpu.dimension_semantics<parallel>], iteration_bounds = array<i64: 2>, scalar_prefetch = 0 : i64, scratch_operands = 0 : i64, tpu.core_type = #tpu.core_type<tc>, window_params = [{transform_indices = @transform_0, window_bounds = array<i64: 1, 32, 128>}, {pipeline_mode = #tpu.pipeline_mode<synchronous>, transform_indices = @transform_1, window_bounds = array<i64: 32, 288>}, {pipeline_mode = #tpu.pipeline_mode<synchronous>, transform_indices = @transform_2, window_bounds = array<i64: 32, 288>}, {pipeline_mode = #tpu.pipeline_mode<synchronous>, transform_indices = @transform_3, window_bounds = array<i64: 32, 1>}, {pipeline_mode = #tpu.pipeline_mode<synchronous>, transform_indices = @transform_4, window_bounds = array<i64: 32, 1>}, {pipeline_mode = #tpu.pipeline_mode<synchronous>, transform_indices = @transform_5, window_bounds = array<i64: 32, 2>}, {pipeline_mode = #tpu.pipeline_mode<synchronous>, transform_indices = @transform_6, window_bounds = array<i64: 32, 2>}, {pipeline_mode = #tpu.pipeline_mode<synchronous>, transform_indices = @transform_7, window_bounds = array<i64: 1, 128>}, {transform_indices = @transform_8, window_bounds = array<i64: 1, 32, 128>}]} {
    %c0 = arith.constant 0 : index
    %c0_0 = arith.constant 0 : index
    %0 = vector.load %arg8[%c0, %c0_0] : memref<1x128xf32, #tpu.memory_space<vmem>>, vector<1x128xf32>
    %c0_1 = arith.constant 0 : index
    %c0_2 = arith.constant 0 : index
    %c0_3 = arith.constant 0 : index
    %1 = vector.load %arg1[%c0_1, %c0_2, %c0_3] : memref<1x32x128xf32, #tpu.memory_space<vmem>>, vector<1x32x128xf32>
    %2 = vector.shape_cast %1 : vector<1x32x128xf32> to vector<32x128xf32>
    %c11_i32 = arith.constant 11 : i32
    %3 = tpu.dynamic_rotate %2 by %c11_i32 dim 1 : vector<32x128xf32>, i32 -> vector<32x128xf32>
    %c10_i32 = arith.constant 10 : i32
    %4 = tpu.dynamic_rotate %2 by %c10_i32 dim 1 : vector<32x128xf32>, i32 -> vector<32x128xf32>
    %c9_i32 = arith.constant 9 : i32
    %5 = tpu.dynamic_rotate %2 by %c9_i32 dim 1 : vector<32x128xf32>, i32 -> vector<32x128xf32>
    %c1_i32 = arith.constant 1 : i32
    %6 = tpu.dynamic_rotate %2 by %c1_i32 dim 1 : vector<32x128xf32>, i32 -> vector<32x128xf32>
    %c127_i32 = arith.constant 127 : i32
    %7 = tpu.dynamic_rotate %2 by %c127_i32 dim 1 : vector<32x128xf32>, i32 -> vector<32x128xf32>
    %c119_i32 = arith.constant 119 : i32
    %8 = tpu.dynamic_rotate %2 by %c119_i32 dim 1 : vector<32x128xf32>, i32 -> vector<32x128xf32>
    %c118_i32 = arith.constant 118 : i32
    %9 = tpu.dynamic_rotate %2 by %c118_i32 dim 1 : vector<32x128xf32>, i32 -> vector<32x128xf32>
    %c117_i32 = arith.constant 117 : i32
    %10 = tpu.dynamic_rotate %2 by %c117_i32 dim 1 : vector<32x128xf32>, i32 -> vector<32x128xf32>
    %11 = tpu.concatenate %3, %4, %5, %6, %2, %7, %8, %9, %10 in 0 : vector<32x128xf32>, vector<32x128xf32>, vector<32x128xf32>, vector<32x128xf32>, vector<32x128xf32>, vector<32x128xf32>, vector<32x128xf32>, vector<32x128xf32>, vector<32x128xf32> -> vector<288x128xf32>
    %c0_4 = arith.constant 0 : index
    %c0_5 = arith.constant 0 : index
    %12 = vector.load %arg2[%c0_4, %c0_5] : memref<32x288xf32, #tpu.memory_space<vmem>>, vector<32x288xf32>
    %cst = arith.constant dense<0.000000e+00> : vector<32x128xf32>
    %13 = tpu.matmul %12, %11, %cst {dimension_numbers = #tpu.dot_dimension_numbers<[1], [0], [0], [1], [0, 0, 1, 1], [], []>, precision = #tpu.contract_precision<fp32>} : vector<32x288xf32>, vector<288x128xf32>, vector<32x128xf32> -> vector<32x128xf32>
    %c0_6 = arith.constant 0 : index
    %c0_7 = arith.constant 0 : index
    %14 = vector.load %arg4[%c0_6, %c0_7] : memref<32x1xf32, #tpu.memory_space<vmem>>, vector<32x1xf32>
    %15 = vector.broadcast %14 : vector<32x1xf32> to vector<32x128xf32>
    %16 = arith.addf %13, %15 : vector<32x128xf32>
    %cst_8 = arith.constant 0.000000e+00 : f32
    %17 = vector.broadcast %cst_8 : f32 to vector<32x128xf32>
    %18 = arith.maximumf %16, %17 : vector<32x128xf32>
    %19 = vector.broadcast %0 : vector<1x128xf32> to vector<32x128xf32>
    %20 = arith.mulf %18, %19 : vector<32x128xf32>
    %c11_i32_9 = arith.constant 11 : i32
    %21 = tpu.dynamic_rotate %20 by %c11_i32_9 dim 1 : vector<32x128xf32>, i32 -> vector<32x128xf32>
    %c10_i32_10 = arith.constant 10 : i32
    %22 = tpu.dynamic_rotate %20 by %c10_i32_10 dim 1 : vector<32x128xf32>, i32 -> vector<32x128xf32>
    %c9_i32_11 = arith.constant 9 : i32
    %23 = tpu.dynamic_rotate %20 by %c9_i32_11 dim 1 : vector<32x128xf32>, i32 -> vector<32x128xf32>
    %c1_i32_12 = arith.constant 1 : i32
    %24 = tpu.dynamic_rotate %20 by %c1_i32_12 dim 1 : vector<32x128xf32>, i32 -> vector<32x128xf32>
    %c127_i32_13 = arith.constant 127 : i32
    %25 = tpu.dynamic_rotate %20 by %c127_i32_13 dim 1 : vector<32x128xf32>, i32 -> vector<32x128xf32>
    %c119_i32_14 = arith.constant 119 : i32
    %26 = tpu.dynamic_rotate %20 by %c119_i32_14 dim 1 : vector<32x128xf32>, i32 -> vector<32x128xf32>
    %c118_i32_15 = arith.constant 118 : i32
    %27 = tpu.dynamic_rotate %20 by %c118_i32_15 dim 1 : vector<32x128xf32>, i32 -> vector<32x128xf32>
    %c117_i32_16 = arith.constant 117 : i32
    %28 = tpu.dynamic_rotate %20 by %c117_i32_16 dim 1 : vector<32x128xf32>, i32 -> vector<32x128xf32>
    %29 = tpu.concatenate %21, %22, %23, %24, %20, %25, %26, %27, %28 in 0 : vector<32x128xf32>, vector<32x128xf32>, vector<32x128xf32>, vector<32x128xf32>, vector<32x128xf32>, vector<32x128xf32>, vector<32x128xf32>, vector<32x128xf32>, vector<32x128xf32> -> vector<288x128xf32>
    %c0_17 = arith.constant 0 : index
    %c0_18 = arith.constant 0 : index
    %30 = vector.load %arg3[%c0_17, %c0_18] : memref<32x288xf32, #tpu.memory_space<vmem>>, vector<32x288xf32>
    %cst_19 = arith.constant dense<0.000000e+00> : vector<32x128xf32>
    %31 = tpu.matmul %30, %29, %cst_19 {dimension_numbers = #tpu.dot_dimension_numbers<[1], [0], [0], [1], [0, 0, 1, 1], [], []>, precision = #tpu.contract_precision<fp32>} : vector<32x288xf32>, vector<288x128xf32>, vector<32x128xf32> -> vector<32x128xf32>
    %c0_20 = arith.constant 0 : index
    %c0_21 = arith.constant 0 : index
    %32 = vector.load %arg5[%c0_20, %c0_21] : memref<32x1xf32, #tpu.memory_space<vmem>>, vector<32x1xf32>
    %33 = vector.broadcast %32 : vector<32x1xf32> to vector<32x128xf32>
    %34 = arith.addf %31, %33 : vector<32x128xf32>
    %35 = vector.broadcast %0 : vector<1x128xf32> to vector<32x128xf32>
    %36 = arith.mulf %34, %35 : vector<32x128xf32>
    %cst_22 = arith.constant dense<0.000000e+00> : vector<32xf32>
    %37 = vector.multi_reduction <add>, %36, %cst_22 [1] : vector<32x128xf32> to vector<32xf32>
    %38 = vector.shape_cast %37 : vector<32xf32> to vector<32x1xf32>
    %c0_23 = arith.constant 0 : index
    %c0_24 = arith.constant 0 : index
    %39 = vector.load %arg6[%c0_23, %c0_24] : memref<32x2xf32, #tpu.memory_space<vmem>>, vector<32x2xf32>
    %40 = vector.broadcast %38 : vector<32x1xf32> to vector<32x2xf32>
    %41 = arith.mulf %40, %39 : vector<32x2xf32>
    %cst_25 = arith.constant dense<0.000000e+00> : vector<2xf32>
    %42 = vector.multi_reduction <add>, %41, %cst_25 [0] : vector<32x2xf32> to vector<2xf32>
    %43 = vector.shape_cast %42 : vector<2xf32> to vector<1x2xf32>
    %cst_26 = arith.constant 0.000000e+00 : f32
    %44 = vector.broadcast %cst_26 : f32 to vector<1x2xf32>
    %45 = arith.maximumf %43, %44 : vector<1x2xf32>
    %c0_27 = arith.constant 0 : index
    %c0_28 = arith.constant 0 : index
    %46 = vector.load %arg7[%c0_27, %c0_28] : memref<32x2xf32, #tpu.memory_space<vmem>>, vector<32x2xf32>
    %47 = vector.broadcast %45 : vector<1x2xf32> to vector<32x2xf32>
    %48 = arith.mulf %46, %47 : vector<32x2xf32>
    %cst_29 = arith.constant dense<0.000000e+00> : vector<32xf32>
    %49 = vector.multi_reduction <add>, %48, %cst_29 [1] : vector<32x2xf32> to vector<32xf32>
    %50 = vector.shape_cast %49 : vector<32xf32> to vector<32x1xf32>
    %51 = arith.negf %50 : vector<32x1xf32>
    %52 = math.exp %51 : vector<32x1xf32>
    %cst_30 = arith.constant 1.000000e+00 : f32
    %53 = vector.broadcast %cst_30 : f32 to vector<32x1xf32>
    %54 = arith.addf %53, %52 : vector<32x1xf32>
    %55 = arith.divf %53, %54 : vector<32x1xf32>
    %56 = vector.broadcast %55 : vector<32x1xf32> to vector<32x128xf32>
    %57 = arith.mulf %36, %56 : vector<32x128xf32>
    %58 = arith.addf %57, %2 : vector<32x128xf32>
    %cst_31 = arith.constant 0.000000e+00 : f32
    %59 = vector.broadcast %cst_31 : f32 to vector<32x128xf32>
    %60 = arith.maximumf %58, %59 : vector<32x128xf32>
    %c0_32 = arith.constant 0 : index
    %c0_33 = arith.constant 0 : index
    %c0_34 = arith.constant 0 : index
    %61 = vector.load %arg9[%c0_32, %c0_33, %c0_34] : memref<1x32x128xf32, #tpu.memory_space<vmem>>, vector<1x32x128xf32>
    %62 = vector.shape_cast %61 : vector<1x32x128xf32> to vector<32x128xf32>
    %63 = vector.shape_cast %60 : vector<32x128xf32> to vector<1x32x128xf32>
    tpu.vector_store %arg9[%c0_32, %c0_33, %c0_34], %63 {strides = array<i32>} : memref<1x32x128xf32, #tpu.memory_space<vmem>>, vector<1x32x128xf32>,
    return
  }
  func.func @transform_0(%arg0: i32) -> (i32, i32, i32) {
    %c0_i32 = arith.constant 0 : i32
    %c0_i32_0 = arith.constant 0 : i32
    %c0_i32_1 = arith.constant 0 : i32
    return %arg0, %c0_i32, %c0_i32_0 : i32, i32, i32
  }
  func.func @transform_1(%arg0: i32) -> (i32, i32) {
    %c0_i32 = arith.constant 0 : i32
    %c0_i32_0 = arith.constant 0 : i32
    %c0_i32_1 = arith.constant 0 : i32
    return %c0_i32, %c0_i32_0 : i32, i32
  }
  func.func @transform_2(%arg0: i32) -> (i32, i32) {
    %c0_i32 = arith.constant 0 : i32
    %c0_i32_0 = arith.constant 0 : i32
    %c0_i32_1 = arith.constant 0 : i32
    return %c0_i32, %c0_i32_0 : i32, i32
  }
  func.func @transform_3(%arg0: i32) -> (i32, i32) {
    %c0_i32 = arith.constant 0 : i32
    %c0_i32_0 = arith.constant 0 : i32
    %c0_i32_1 = arith.constant 0 : i32
    return %c0_i32, %c0_i32_0 : i32, i32
  }
  func.func @transform_4(%arg0: i32) -> (i32, i32) {
    %c0_i32 = arith.constant 0 : i32
    %c0_i32_0 = arith.constant 0 : i32
    %c0_i32_1 = arith.constant 0 : i32
    return %c0_i32, %c0_i32_0 : i32, i32
  }
  func.func @transform_5(%arg0: i32) -> (i32, i32) {
    %c0_i32 = arith.constant 0 : i32
    %c0_i32_0 = arith.constant 0 : i32
    %c0_i32_1 = arith.constant 0 : i32
    return %c0_i32, %c0_i32_0 : i32, i32
  }
  func.func @transform_6(%arg0: i32) -> (i32, i32) {
    %c0_i32 = arith.constant 0 : i32
    %c0_i32_0 = arith.constant 0 : i32
    %c0_i32_1 = arith.constant 0 : i32
    return %c0_i32, %c0_i32_0 : i32, i32
  }
  func.func @transform_7(%arg0: i32) -> (i32, i32) {
    %c0_i32 = arith.constant 0 : i32
    %c0_i32_0 = arith.constant 0 : i32
    %c0_i32_1 = arith.constant 0 : i32
    return %c0_i32, %c0_i32_0 : i32, i32
  }
  func.func @transform_8(%arg0: i32) -> (i32, i32, i32) {
    %c0_i32 = arith.constant 0 : i32
    %c0_i32_0 = arith.constant 0 : i32
    %c0_i32_1 = arith.constant 0 : i32
    return %arg0, %c0_i32, %c0_i32_0 : i32, i32, i32
  }
}

</mosaic_0001>

<llo_original>
// kernel: tpu_custom_call.1
$region0: #{tpu_custom_call.1}
  #allocation0 [shape = 'u32[]', space=smem, size = 0x4, offset = 0x4, fixed_abs, tag = 'smem constant byte address 0x4 - core index']
  #allocation1 [shape = 'u32[144,128]{1,0:T(1,128)}', space=vmem, size = 0x12000, scoped, tag = 'internal scratch']
  %s0 = inlined_call_operand.hbm [shape: f32[2,32,128], index: 0, kind: input, shape index: {}]
  %s1 = inlined_call_operand.vmem [shape: f32[32,288], index: 1, kind: input, shape index: {}]
  %s2 = inlined_call_operand.hbm [shape: f32[32,288], index: 2, kind: input, shape index: {}]
  %s3 = inlined_call_operand.vmem [shape: f32[32,1], index: 3, kind: input, shape index: {}]
  %s4 = inlined_call_operand.vmem [shape: f32[32,1], index: 4, kind: input, shape index: {}]
  %s5 = inlined_call_operand.vmem [shape: f32[32,2], index: 5, kind: input, shape index: {}]
  %s6 = inlined_call_operand.vmem [shape: f32[32,2], index: 6, kind: input, shape index: {}]
  %s7 = inlined_call_operand.vmem [shape: f32[1,128], index: 7, kind: input, shape index: {}]
  %s8 = inlined_call_operand.hbm [shape: f32[2,32,128], index: 8, kind: output, shape index: {}]
  %s9 = sld [smem:[#allocation0]]
  $region73: #{tpu_custom_call.1} parent=0
    _
  %s11 = ssub.s32 1, %s9
  %s12 = scalar_select 0, %s11, %s9
  $region1: #{tpu_custom_call.1} parent=0
    #allocation2 [shape = 'u8[32768]{0}', space=vmem, size = 0x8000, scoped, tag = 'input window, operand 0']
    #allocation3 [shape = 's32[2]{0}', space=sflag, size = 0x8, scoped, tag = 'scoped memory for tpu_custom_call.1']
    #allocation4 [shape = 's32[2]{0}', space=sflag, size = 0x8, scoped, tag = 'scoped memory for tpu_custom_call.1']
    #allocation5 [shape = 'u8[49152]{0}', space=vmem, size = 0xc000, scoped, tag = 'input window, operand 2, single buffered']
    #allocation6 [shape = 's32[1]{0}', space=sflag, size = 0x4, scoped, tag = 'scoped memory for tpu_custom_call.1']
    #allocation7 [shape = 'u8[32768]{0}', space=vmem, size = 0x8000, scoped, tag = 'output window, operand 0']
    %13 = vsyncpa [#allocation3], 0
    %s14 = scalar_lea.sflag [#allocation3], 1
    %15 = vsyncpa %s14, 0
    %16 = vsyncpa [#allocation6], 0
    %17 = vsyncpa [#allocation4], 0
    %s18 = scalar_lea.sflag [#allocation4], 1
    %19 = vsyncpa %s18, 0
    loop: start=0, step=1, limit=4
    $region2: #{tpu_custom_call.1} parent=1 // loop_pre_header
      _
    $region3: #{tpu_custom_call.1} parent=1 // loop_header
      %s21 = sphi 0, %s25
      %p22 = scmp.ge.s32.totalorder %s21, 4
      %s31 = sphi 0, %s33
      %s34 = sphi 0, %s31
      %s35 = sphi 0, %s34
      %s51 = sphi 0, %s35
      %s55 = sphi 0, %s55
      %s57 = sphi 0, %s55
      %s58 = sphi 0, %s57
      %s72 = sphi 0, %s58
      %s76 = sphi 0, %s76
      %s78 = sphi 0, %s76
      %s79 = sphi 0, %s78
      %s93 = sphi 0, %s79
      %s97 = sphi 0, %s97
      %s99 = sphi 0, %s97
      %s100 = sphi 0, %s99
      %s114 = sphi 0, %s100
      %s118 = sphi 0, %s118
      %s120 = sphi 0, %s118
      %s121 = sphi 0, %s120
      %s135 = sphi 0, %s121
      %s139 = sphi 0, %s139
      %s141 = sphi 0, %s139
      %s142 = sphi 0, %s141
      %s156 = sphi 0, %s142
      %s160 = sphi 0, %s160
      %s162 = sphi 0, %s160
      %s163 = sphi 0, %s162
      %s177 = sphi 0, %s163
      %s181 = sphi 0, %s181
      %s183 = sphi 0, %s181
      %s184 = sphi 0, %s183
      %s198 = sphi 0, %s184
      %s204 = sphi 0, %s206
      %s207 = sphi 0, %s204
      %s208 = sphi 0, %s207
      %s224 = sphi 0, %s208
    $region4: #{tpu_custom_call.1} parent=1 // loop_header_branch
      %24 = sbr.rel (%p22) target = $region8
    $region5: #{tpu_custom_call.1} parent=1 // loop_body
      %s26 = ssub.s32 %s21, 1
      %s27 = ssub.s32 %s21, 2
      %s28 = sadd.s32 %s21, 1
      %s29 = ssub.s32 %s21, %s28
      %p30 = scmp.eq.s32.totalorder %s29, 0
      %s32 = sadd.s32 %s31, 1
      %s33 = scalar_select %p30, %s31, %s32
      %p36 = pneg %p30
      %p37 = scmp.eq.s32.totalorder %s21, 1
      %p38 = por %p36, %p37
      %p39 = scmp.ne.s32.totalorder %s31, %s34
      %p40 = scmp.eq.s32.totalorder %s21, 0
      %p41 = por %p39, %p40
      %p42 = scmp.ne.s32.totalorder %s31, %s34
      %p43 = scmp.eq.s32.totalorder %s26, 1
      %p44 = por %p42, %p43
      %p45 = scmp.ne.s32.totalorder %s34, %s35
      %p46 = scmp.eq.s32.totalorder %s26, 0
      %p47 = por %p45, %p46
      %p48 = scmp.ne.s32.totalorder %s34, %s35
      %p49 = scmp.eq.s32.totalorder %s27, 1
      %p50 = por %p48, %p49
      %p52 = scmp.ne.s32.totalorder %s35, %s51
      %p53 = scmp.eq.s32.totalorder %s27, 0
      %p54 = por %p52, %p53
      %s56 = sadd.s32 %s55, 1
      %p59 = scmp.eq.s32.totalorder %s21, 1
      %p60 = scmp.ne.s32.totalorder %s55, %s57
      %p61 = scmp.eq.s32.totalorder %s21, 0
      %p62 = por %p60, %p61
      %p63 = scmp.ne.s32.totalorder %s55, %s57
      %p64 = scmp.eq.s32.totalorder %s26, 1
      %p65 = por %p63, %p64
      %p66 = scmp.ne.s32.totalorder %s57, %s58
      %p67 = scmp.eq.s32.totalorder %s26, 0
      %p68 = por %p66, %p67
      %p69 = scmp.ne.s32.totalorder %s57, %s58
      %p70 = scmp.eq.s32.totalorder %s27, 1
      %p71 = por %p69, %p70
      %p73 = scmp.ne.s32.totalorder %s58, %s72
      %p74 = scmp.eq.s32.totalorder %s27, 0
      %p75 = por %p73, %p74
      %s77 = sadd.s32 %s76, 1
      %p80 = scmp.eq.s32.totalorder %s21, 1
      %p81 = scmp.ne.s32.totalorder %s76, %s78
      %p82 = scmp.eq.s32.totalorder %s21, 0
      %p83 = por %p81, %p82
      %p84 = scmp.ne.s32.totalorder %s76, %s78
      %p85 = scmp.eq.s32.totalorder %s26, 1
      %p86 = por %p84, %p85
      %p87 = scmp.ne.s32.totalorder %s78, %s79
      %p88 = scmp.eq.s32.totalorder %s26, 0
      %p89 = por %p87, %p88
      %p90 = scmp.ne.s32.totalorder %s78, %s79
      %p91 = scmp.eq.s32.totalorder %s27, 1
      %p92 = por %p90, %p91
      %p94 = scmp.ne.s32.totalorder %s79, %s93
      %p95 = scmp.eq.s32.totalorder %s27, 0
      %p96 = por %p94, %p95
      %s98 = sadd.s32 %s97, 1
      %p101 = scmp.eq.s32.totalorder %s21, 1
      %p102 = scmp.ne.s32.totalorder %s97, %s99
      %p103 = scmp.eq.s32.totalorder %s21, 0
      %p104 = por %p102, %p103
      %p105 = scmp.ne.s32.totalorder %s97, %s99
      %p106 = scmp.eq.s32.totalorder %s26, 1
      %p107 = por %p105, %p106
      %p108 = scmp.ne.s32.totalorder %s99, %s100
      %p109 = scmp.eq.s32.totalorder %s26, 0
      %p110 = por %p108, %p109
      %p111 = scmp.ne.s32.totalorder %s99, %s100
      %p112 = scmp.eq.s32.totalorder %s27, 1
      %p113 = por %p111, %p112
      %p115 = scmp.ne.s32.totalorder %s100, %s114
      %p116 = scmp.eq.s32.totalorder %s27, 0
      %p117 = por %p115, %p116
      %s119 = sadd.s32 %s118, 1
      %p122 = scmp.eq.s32.totalorder %s21, 1
      %p123 = scmp.ne.s32.totalorder %s118, %s120
      %p124 = scmp.eq.s32.totalorder %s21, 0
      %p125 = por %p123, %p124
      %p126 = scmp.ne.s32.totalorder %s118, %s120
      %p127 = scmp.eq.s32.totalorder %s26, 1
      %p128 = por %p126, %p127
      %p129 = scmp.ne.s32.totalorder %s120, %s121
      %p130 = scmp.eq.s32.totalorder %s26, 0
      %p131 = por %p129, %p130
      %p132 = scmp.ne.s32.totalorder %s120, %s121
      %p133 = scmp.eq.s32.totalorder %s27, 1
      %p134 = por %p132, %p133
      %p136 = scmp.ne.s32.totalorder %s121, %s135
      %p137 = scmp.eq.s32.totalorder %s27, 0
      %p138 = por %p136, %p137
      %s140 = sadd.s32 %s139, 1
      %p143 = scmp.eq.s32.totalorder %s21, 1
      %p144 = scmp.ne.s32.totalorder %s139, %s141
      %p145 = scmp.eq.s32.totalorder %s21, 0
      %p146 = por %p144, %p145
      %p147 = scmp.ne.s32.totalorder %s139, %s141
      %p148 = scmp.eq.s32.totalorder %s26, 1
      %p149 = por %p147, %p148
      %p150 = scmp.ne.s32.totalorder %s141, %s142
      %p151 = scmp.eq.s32.totalorder %s26, 0
      %p152 = por %p150, %p151
      %p153 = scmp.ne.s32.totalorder %s141, %s142
      %p154 = scmp.eq.s32.totalorder %s27, 1
      %p155 = por %p153, %p154
      %p157 = scmp.ne.s32.totalorder %s142, %s156
      %p158 = scmp.eq.s32.totalorder %s27, 0
      %p159 = por %p157, %p158
      %s161 = sadd.s32 %s160, 1
      %p164 = scmp.eq.s32.totalorder %s21, 1
      %p165 = scmp.ne.s32.totalorder %s160, %s162
      %p166 = scmp.eq.s32.totalorder %s21, 0
      %p167 = por %p165, %p166
      %p168 = scmp.ne.s32.totalorder %s160, %s162
      %p169 = scmp.eq.s32.totalorder %s26, 1
      %p170 = por %p168, %p169
      %p171 = scmp.ne.s32.totalorder %s162, %s163
      %p172 = scmp.eq.s32.totalorder %s26, 0
      %p173 = por %p171, %p172
      %p174 = scmp.ne.s32.totalorder %s162, %s163
      %p175 = scmp.eq.s32.totalorder %s27, 1
      %p176 = por %p174, %p175
      %p178 = scmp.ne.s32.totalorder %s163, %s177
      %p179 = scmp.eq.s32.totalorder %s27, 0
      %p180 = por %p178, %p179
      %s182 = sadd.s32 %s181, 1
      %p185 = scmp.eq.s32.totalorder %s21, 1
      %p186 = scmp.ne.s32.totalorder %s181, %s183
      %p187 = scmp.eq.s32.totalorder %s21, 0
      %p188 = por %p186, %p187
      %p189 = scmp.ne.s32.totalorder %s181, %s183
      %p190 = scmp.eq.s32.totalorder %s26, 1
      %p191 = por %p189, %p190
      %p192 = scmp.ne.s32.totalorder %s183, %s184
      %p193 = scmp.eq.s32.totalorder %s26, 0
      %p194 = por %p192, %p193
      %p195 = scmp.ne.s32.totalorder %s183, %s184
      %p196 = scmp.eq.s32.totalorder %s27, 1
      %p197 = por %p195, %p196
      %p199 = scmp.ne.s32.totalorder %s184, %s198
      %p200 = scmp.eq.s32.totalorder %s27, 0
      %p201 = por %p199, %p200
      %s202 = ssub.s32 %s21, %s28
      %p203 = scmp.eq.s32.totalorder %s202, 0
      %s205 = sadd.s32 %s204, 1
      %s206 = scalar_select %p203, %s204, %s205
      %p209 = pneg %p203
      %p210 = scmp.eq.s32.totalorder %s21, 1
      %p211 = por %p209, %p210
      %p212 = scmp.ne.s32.totalorder %s204, %s207
      %p213 = scmp.eq.s32.totalorder %s21, 0
      %p214 = por %p212, %p213
      %p215 = scmp.ne.s32.totalorder %s204, %s207
      %p216 = scmp.eq.s32.totalorder %s26, 1
      %p217 = por %p215, %p216
      %p218 = scmp.ne.s32.totalorder %s207, %s208
      %p219 = scmp.eq.s32.totalorder %s26, 0
      %p220 = por %p218, %p219
      %p221 = scmp.ne.s32.totalorder %s207, %s208
      %p222 = scmp.eq.s32.totalorder %s27, 1
      %p223 = por %p221, %p222
      %p225 = scmp.ne.s32.totalorder %s208, %s224
      %p226 = scmp.eq.s32.totalorder %s27, 0
      %p227 = por %p225, %p226
      %p228 = scmp.le.s32.totalorder 1, %s21
      %p229 = scmp.lt.s32.totalorder %s21, 3
      %p230 = pnand %p228, %p229
      %p231 = pneg %p230
      // Predicated region
      $region9: #{tpu_custom_call.1} parent=5 // pred_check
        _
      $region10: #{tpu_custom_call.1} parent=5 // pred_check_branch
        %233 = sbr.rel (%p230) target = $region12
      $region11: #{tpu_custom_call.1} parent=5 // pred_region
        %s234 = ssub.s32 %s21, 1
        // Predicated region
        $region13: #{tpu_custom_call.1} parent=11 // pred_check
          %p235 = pneg %p68
        $region14: #{tpu_custom_call.1} parent=11 // pred_check_branch
          %237 = sbr.rel (%p235) target = $region16
        $region15: #{tpu_custom_call.1} parent=11 // pred_region
          _
        $region16: #{tpu_custom_call.1} parent=11 // pred_fallthru
          _
        // Predicated region
        $region17: #{tpu_custom_call.1} parent=11 // pred_check
          %p238 = pneg %p89
        $region18: #{tpu_custom_call.1} parent=11 // pred_check_branch
          %240 = sbr.rel (%p238) target = $region20
        $region19: #{tpu_custom_call.1} parent=11 // pred_region
          %s242 = ssub.s32 1536, 1536
          %243 = vsyncadd [#allocation6], %s242
          %s244 = sshll.u32 [#allocation5], 4
          %s245 = int_to_ptr.vmem [resolvable:$true] %s244
          %250 = dma.hbm_to_vmem [thread:$0]  %s2, 1536, %s245, [#allocation6], 384, 384, 24
        $region20: #{tpu_custom_call.1} parent=11 // pred_fallthru
          _
        // Predicated region
        $region21: #{tpu_custom_call.1} parent=11 // pred_check
          %p251 = pneg %p110
        $region22: #{tpu_custom_call.1} parent=11 // pred_check_branch
          %253 = sbr.rel (%p251) target = $region24
        $region23: #{tpu_custom_call.1} parent=11 // pred_region
          _
        $region24: #{tpu_custom_call.1} parent=11 // pred_fallthru
          _
        // Predicated region
        $region25: #{tpu_custom_call.1} parent=11 // pred_check
          %p254 = pneg %p131
        $region26: #{tpu_custom_call.1} parent=11 // pred_check_branch
          %256 = sbr.rel (%p254) target = $region28
        $region27: #{tpu_custom_call.1} parent=11 // pred_region
          _
        $region28: #{tpu_custom_call.1} parent=11 // pred_fallthru
          _
        // Predicated region
        $region29: #{tpu_custom_call.1} parent=11 // pred_check
          %p257 = pneg %p152
        $region30: #{tpu_custom_call.1} parent=11 // pred_check_branch
          %259 = sbr.rel (%p257) target = $region32
        $region31: #{tpu_custom_call.1} parent=11 // pred_region
          _
        $region32: #{tpu_custom_call.1} parent=11 // pred_fallthru
          _
        // Predicated region
        $region33: #{tpu_custom_call.1} parent=11 // pred_check
          %p260 = pneg %p173
        $region34: #{tpu_custom_call.1} parent=11 // pred_check_branch
          %262 = sbr.rel (%p260) target = $region36
        $region35: #{tpu_custom_call.1} parent=11 // pred_region
          _
        $region36: #{tpu_custom_call.1} parent=11 // pred_fallthru
          _
        // Predicated region
        $region37: #{tpu_custom_call.1} parent=11 // pred_check
          %p263 = pneg %p194
        $region38: #{tpu_custom_call.1} parent=11 // pred_check_branch
          %265 = sbr.rel (%p263) target = $region40
        $region39: #{tpu_custom_call.1} parent=11 // pred_region
          _
        $region40: #{tpu_custom_call.1} parent=11 // pred_fallthru
          _
      $region12: #{tpu_custom_call.1} parent=5 // pred_fallthru
        _
      %p266 = scmp.lt.s32.totalorder %s21, 2
      // Predicated region
      $region41: #{tpu_custom_call.1} parent=5 // pred_check
        %p267 = pneg %p266
      $region42: #{tpu_custom_call.1} parent=5 // pred_check_branch
        %269 = sbr.rel (%p267) target = $region44
      $region43: #{tpu_custom_call.1} parent=5 // pred_region
        // Predicated region
        $region45: #{tpu_custom_call.1} parent=43 // pred_check
          %p270 = pneg %p41
        $region46: #{tpu_custom_call.1} parent=43 // pred_check_branch
          %272 = sbr.rel (%p270) target = $region48
        $region47: #{tpu_custom_call.1} parent=43 // pred_region
          %s273 = sand.u32 %s31, 1
          %s274 = scalar_lea.sflag [#allocation3], %s273
          %s275 = sand.u32 %s31, 1
          %s276 = smul.addr %s275, 32
          %s277 = scalar_lea.vmem [#allocation2], %s276
          %s279 = ssub.s32 512, 512
          %280 = vsyncadd %s274, %s279
          %s281 = smul.addr %s21, 4
          %s282 = smul.addr %s281, 128
          %s283 = scalar_lea.hbm %s0, %s282
          %s284 = sshll.u32 %s277, 4
          %s285 = int_to_ptr.vmem [resolvable:$true] %s284
          %290 = dma.hbm_to_vmem [thread:$0]  %s283, 512, %s285, %s274, 128, 128, 8
        $region48: #{tpu_custom_call.1} parent=43 // pred_fallthru
          _
      $region44: #{tpu_custom_call.1} parent=5 // pred_fallthru
        _
      %p291 = scmp.le.s32.totalorder 1, %s21
      %p292 = scmp.lt.s32.totalorder %s21, 3
      %p293 = pnand %p291, %p292
      %p294 = pneg %p293
      // Predicated region
      $region49: #{tpu_custom_call.1} parent=5 // pred_check
        _
      $region50: #{tpu_custom_call.1} parent=5 // pred_check_branch
        %296 = sbr.rel (%p293) target = $region52
      $region51: #{tpu_custom_call.1} parent=5 // pred_region
        %s297 = ssub.s32 %s21, 1
        %s298 = sand.u32 %s34, 1
        %s299 = scalar_lea.sflag [#allocation3], %s298
        %s300 = sand.u32 %s34, 1
        %s301 = smul.addr %s300, 32
        %s302 = scalar_lea.vmem [#allocation2], %s301
        // Predicated region
        $region53: #{tpu_custom_call.1} parent=51 // pred_check
          %p303 = pneg %p47
        $region54: #{tpu_custom_call.1} parent=51 // pred_check_branch
          %305 = sbr.rel (%p303) target = $region56
        $region55: #{tpu_custom_call.1} parent=51 // pred_region
          %306 = dma.done %s299, 512
        $region56: #{tpu_custom_call.1} parent=51 // pred_fallthru
          _
        // Predicated region
        $region57: #{tpu_custom_call.1} parent=51 // pred_check
          %p307 = pneg %p89
        $region58: #{tpu_custom_call.1} parent=51 // pred_check_branch
          %309 = sbr.rel (%p307) target = $region60
        $region59: #{tpu_custom_call.1} parent=51 // pred_region
          %310 = dma.done [#allocation6], 1536
        $region60: #{tpu_custom_call.1} parent=51 // pred_fallthru
          _
        %s311 = sand.u32 %s34, 1
        %s312 = scalar_lea.sflag [#allocation3], %s311
        %s313 = sand.u32 %s34, 1
        %s314 = smul.addr %s313, 32
        %s315 = scalar_lea.vmem [#allocation2], %s314
        %p316 = pneg %p47
        %p317 = pneg %p44
        %p318 = pneg %p68
        %p319 = pneg %p65
        %p320 = pneg %p89
        %p321 = pneg %p86
        %p322 = pneg %p110
        %p323 = pneg %p107
        %p324 = pneg %p131
        %p325 = pneg %p128
        %p326 = pneg %p152
        %p327 = pneg %p149
        %p328 = pneg %p173
        %p329 = pneg %p170
        %p330 = pneg %p194
        %p331 = pneg %p191
        %p332 = pneg %p220
        %p333 = pneg %p217
        %s334 = sand.u32 %s207, 1
        %s335 = scalar_lea.sflag [#allocation4], %s334
        %s336 = sand.u32 %s207, 1
        %s337 = smul.addr %s336, 32
        %s338 = scalar_lea.vmem [#allocation7], %s337
        %v339 = vld [vmem:[%s7] sm:$0x1]
        %v340 = vld [vmem:[%s302] sm:$0xff]
        %v341 = vld [vmem:[%s302 + $0x8] sm:$0xff]
        %v342 = vld [vmem:[%s302 + $0x10] sm:$0xff]
        %v343 = vld [vmem:[%s302 + $0x18] sm:$0xff]
        %344 = vrot.lane.b32.xlu0 %v340, 11
        %v345 = vpop.permute.xlu0 %344
        %346 = vrot.lane.b32.xlu0 %v341, 11
        %v347 = vpop.permute.xlu0 %346
        %348 = vrot.lane.b32.xlu0 %v342, 11
        %v349 = vpop.permute.xlu0 %348
        %350 = vrot.lane.b32.xlu0 %v343, 11
        %v351 = vpop.permute.xlu0 %350
        %352 = vrot.lane.b32.xlu0 %v340, 10
        %v353 = vpop.permute.xlu0 %352
        %354 = vrot.lane.b32.xlu0 %v341, 10
        %v355 = vpop.permute.xlu0 %354
        %356 = vrot.lane.b32.xlu0 %v342, 10
        %v357 = vpop.permute.xlu0 %356
        %358 = vrot.lane.b32.xlu0 %v343, 10
        %v359 = vpop.permute.xlu0 %358
        %360 = vrot.lane.b32.xlu0 %v340, 9
        %v361 = vpop.permute.xlu0 %360
        %362 = vrot.lane.b32.xlu0 %v341, 9
        %v363 = vpop.permute.xlu0 %362
        %364 = vrot.lane.b32.xlu0 %v342, 9
        %v365 = vpop.permute.xlu0 %364
        %366 = vrot.lane.b32.xlu0 %v343, 9
        %v367 = vpop.permute.xlu0 %366
        %368 = vrot.lane.b32.xlu0 %v340, 1
        %v369 = vpop.permute.xlu0 %368
        %370 = vrot.lane.b32.xlu0 %v341, 1
        %v371 = vpop.permute.xlu0 %370
        %372 = vrot.lane.b32.xlu0 %v342, 1
        %v373 = vpop.permute.xlu0 %372
        %374 = vrot.lane.b32.xlu0 %v343, 1
        %v375 = vpop.permute.xlu0 %374
        %376 = vrot.lane.b32.xlu0 %v340, 127
        %v377 = vpop.permute.xlu0 %376
        %378 = vrot.lane.b32.xlu0 %v341, 127
        %v379 = vpop.permute.xlu0 %378
        %380 = vrot.lane.b32.xlu0 %v342, 127
        %v381 = vpop.permute.xlu0 %380
        %382 = vrot.lane.b32.xlu0 %v343, 127
        %v383 = vpop.permute.xlu0 %382
        %384 = vrot.lane.b32.xlu0 %v340, 119
        %v385 = vpop.permute.xlu0 %384
        %386 = vrot.lane.b32.xlu0 %v341, 119
        %v387 = vpop.permute.xlu0 %386
        %388 = vrot.lane.b32.xlu0 %v342, 119
        %v389 = vpop.permute.xlu0 %388
        %390 = vrot.lane.b32.xlu0 %v343, 119
        %v391 = vpop.permute.xlu0 %390
        %392 = vrot.lane.b32.xlu0 %v340, 118
        %v393 = vpop.permute.xlu0 %392
        %394 = vrot.lane.b32.xlu0 %v341, 118
        %v395 = vpop.permute.xlu0 %394
        %396 = vrot.lane.b32.xlu0 %v342, 118
        %v397 = vpop.permute.xlu0 %396
        %398 = vrot.lane.b32.xlu0 %v343, 118
        %v399 = vpop.permute.xlu0 %398
        %400 = vrot.lane.b32.xlu0 %v340, 117
        %v401 = vpop.permute.xlu0 %400
        %402 = vrot.lane.b32.xlu0 %v341, 117
        %v403 = vpop.permute.xlu0 %402
        %404 = vrot.lane.b32.xlu0 %v342, 117
        %v405 = vpop.permute.xlu0 %404
        %406 = vrot.lane.b32.xlu0 %v343, 117
        %v407 = vpop.permute.xlu0 %406
        %v408 = vld [vmem:[%s1] sm:$0xff]
        %v409 = vld [vmem:[%s1 + $0x8] sm:$0xff]
        %v410 = vld [vmem:[%s1 + $0x10] sm:$0xff]
        %v411 = vld [vmem:[%s1 + $0x18] sm:$0xff]
        %v412 = vld [vmem:[%s1 + $0x20] sm:$0xff]
        %v413 = vld [vmem:[%s1 + $0x28] sm:$0xff]
        %v414 = vld [vmem:[%s1 + $0x30] sm:$0xff]
        %v415 = vld [vmem:[%s1 + $0x38] sm:$0xff]
        %v416 = vld [vmem:[%s1 + $0x40] sm:$0xff]
        %v417 = vld [vmem:[%s1 + $0x48] sm:$0xff]
        %v418 = vld [vmem:[%s1 + $0x50] sm:$0xff]
        %v419 = vld [vmem:[%s1 + $0x58] sm:$0xff]
        %v420 = vld [vmem:[%s3] sm:$0xff]
        %v421 = vld [vmem:[%s3 + $0x8] sm:$0xff]
        %v422 = vld [vmem:[%s3 + $0x10] sm:$0xff]
        %v423 = vld [vmem:[%s3 + $0x18] sm:$0xff]
        %425 = vset.pattern.permute.xlu0 0
        %426 = vperm.xlu0 %425, %v420
        %v427 = vpop.permute.xlu0 %426
        %430 = vset.pattern.permute.xlu0 0
        %431 = vperm.xlu0 %430, %v421
        %v432 = vpop.permute.xlu0 %431
        %435 = vset.pattern.permute.xlu0 0
        %436 = vperm.xlu0 %435, %v422
        %v437 = vpop.permute.xlu0 %436
        %440 = vset.pattern.permute.xlu0 0
        %441 = vperm.xlu0 %440, %v423
        %v442 = vpop.permute.xlu0 %441
        %vm444 = vcmask 261120
        %v446 = vsel %vm444, %v410, 0
        %v449 = vsel %vm444, %v413, 0
        %v452 = vsel %vm444, %v416, 0
        %v455 = vsel %vm444, %v419, 0
        %457 = vmatprep.subr.mxu0 0.0
        %v458 = vand.u32 %v345, 4294901760
        %459 = vmatpush1.msra.mxu0 %v458
        %460 = vmatprep.subr.mxu0 0.0
        %v461 = vand.u32 %v347, 4294901760
        %462 = vmatpush1.msra.mxu0 %v461
        %463 = vmatprep.subr.mxu0 0.0
        %v464 = vand.u32 %v349, 4294901760
        %465 = vmatpush1.msra.mxu0 %v464
        %466 = vmatprep.subr.mxu0 0.0
        %v467 = vand.u32 %v351, 4294901760
        %468 = vmatpush1.msra.mxu0 %v467
        %469 = vmatprep.subr.mxu0 0.0
        %v470 = vand.u32 %v353, 4294901760
        %471 = vmatpush1.msra.mxu0 %v470
        %472 = vmatprep.subr.mxu0 0.0
        %v473 = vand.u32 %v355, 4294901760
        %474 = vmatpush1.msra.mxu0 %v473
        %475 = vmatprep.subr.mxu0 0.0
        %v476 = vand.u32 %v357, 4294901760
        %477 = vmatpush1.msra.mxu0 %v476
        %478 = vmatprep.subr.mxu0 0.0
        %v479 = vand.u32 %v359, 4294901760
        %480 = vmatpush1.msra.mxu0 %v479
        %481 = vmatprep.subr.mxu0 0.0
        %v482 = vand.u32 %v361, 4294901760
        %483 = vmatpush1.msra.mxu0 %v482
        %484 = vmatprep.subr.mxu0 0.0
        %v485 = vand.u32 %v363, 4294901760
        %486 = vmatpush1.msra.mxu0 %v485
        %487 = vmatprep.subr.mxu0 0.0
        %v488 = vand.u32 %v365, 4294901760
        %489 = vmatpush1.msra.mxu0 %v488
        %490 = vmatprep.subr.mxu0 0.0
        %v491 = vand.u32 %v367, 4294901760
        %492 = vmatpush1.msra.mxu0 %v491
        %493 = vmatprep.subr.mxu0 0.0
        %v494 = vand.u32 %v369, 4294901760
        %495 = vmatpush1.msra.mxu0 %v494
        %496 = vmatprep.subr.mxu0 0.0
        %v497 = vand.u32 %v371, 4294901760
        %498 = vmatpush1.msra.mxu0 %v497
        %499 = vmatprep.subr.mxu0 0.0
        %v500 = vand.u32 %v373, 4294901760
        %501 = vmatpush1.msra.mxu0 %v500
        %502 = vmatprep.subr.mxu0 0.0
        %v503 = vand.u32 %v375, 4294901760
        %504 = vmatpush1.msra.mxu0 %v503
        %505 = vmatprep.subr.mxu0 0.0
        %v506 = vand.u32 %v340, 4294901760
        %507 = vmatpush1.msra.mxu0 %v506
        %508 = vmatprep.subr.mxu0 0.0
        %v509 = vand.u32 %v341, 4294901760
        %510 = vmatpush1.msra.mxu0 %v509
        %511 = vmatprep.subr.mxu0 0.0
        %v512 = vand.u32 %v342, 4294901760
        %513 = vmatpush1.msra.mxu0 %v512
        %514 = vmatprep.subr.mxu0 0.0
        %v515 = vand.u32 %v343, 4294901760
        %516 = vmatpush1.msra.mxu0 %v515
        %517 = vmatprep.subr.mxu0 0.0
        %v518 = vand.u32 %v377, 4294901760
        %519 = vmatpush1.msra.mxu0 %v518
        %520 = vmatprep.subr.mxu0 0.0
        %v521 = vand.u32 %v379, 4294901760
        %522 = vmatpush1.msra.mxu0 %v521
        %523 = vmatprep.subr.mxu0 0.0
        %v524 = vand.u32 %v381, 4294901760
        %525 = vmatpush1.msra.mxu0 %v524
        %526 = vmatprep.subr.mxu0 0.0
        %v527 = vand.u32 %v383, 4294901760
        %528 = vmatpush1.msra.mxu0 %v527
        %529 = vmatprep.subr.mxu0 0.0
        %v530 = vand.u32 %v385, 4294901760
        %531 = vmatpush1.msra.mxu0 %v530
        %532 = vmatprep.subr.mxu0 0.0
        %v533 = vand.u32 %v387, 4294901760
        %534 = vmatpush1.msra.mxu0 %v533
        %535 = vmatprep.subr.mxu0 0.0
        %v536 = vand.u32 %v389, 4294901760
        %537 = vmatpush1.msra.mxu0 %v536
        %538 = vmatprep.subr.mxu0 0.0
        %v539 = vand.u32 %v391, 4294901760
        %540 = vmatpush1.msra.mxu0 %v539
        %541 = vmatprep.subr.mxu0 0.0
        %v542 = vand.u32 %v393, 4294901760
        %543 = vmatpush1.msra.mxu0 %v542
        %544 = vmatprep.subr.mxu0 0.0
        %v545 = vand.u32 %v395, 4294901760
        %546 = vmatpush1.msra.mxu0 %v545
        %547 = vmatprep.subr.mxu0 0.0
        %v548 = vand.u32 %v397, 4294901760
        %549 = vmatpush1.msra.mxu0 %v548
        %550 = vmatprep.subr.mxu0 0.0
        %v551 = vand.u32 %v399, 4294901760
        %552 = vmatpush1.msra.mxu0 %v551
        %v553 = vand.u32 %v409, 4294901760
        %v554 = vsub.f32 %v409, %v553
        %v555 = vand.u32 %v554, 4294901760
        %v556 = vsub.f32 %v554, %v555
        %v557 = vand.u32 %v556, 4294901760
        %558 = vmatprep.mubr.f32.mxu0 %v557
        %v559 = vand.u32 %v408, 4294901760
        %v560 = vsub.f32 %v408, %v559
        %v561 = vand.u32 %v560, 4294901760
        %v562 = vsub.f32 %v560, %v561
        %v563 = vand.u32 %v562, 4294901760
        %564 = vmatmul.mubr.f32.gmra.mrb[0].mxu0 %v563
        %v565 = vpop.f32.mrb[0].mxu0
        %v566 = vadd.f32 %v427, %v565
        %v567 = vpop.f32.mrb[0].mxu0
        %v568 = vand.u32 %v412, 4294901760
        %v569 = vsub.f32 %v412, %v568
        %v570 = vand.u32 %v569, 4294901760
        %v571 = vsub.f32 %v569, %v570
        %v572 = vand.u32 %v571, 4294901760
        %573 = vmatprep.mubr.f32.mxu0 %v572
        %v574 = vand.u32 %v411, 4294901760
        %v575 = vsub.f32 %v411, %v574
        %v576 = vand.u32 %v575, 4294901760
        %v577 = vsub.f32 %v575, %v576
        %v578 = vand.u32 %v577, 4294901760
        %579 = vmatmul.mubr.f32.gmra.mrb[0].mxu0 %v578
        %v580 = vpop.f32.mrb[0].mxu0
        %v581 = vadd.f32 %v432, %v580
        %v582 = vpop.f32.mrb[0].mxu0
        %v583 = vand.u32 %v415, 4294901760
        %v584 = vsub.f32 %v415, %v583
        %v585 = vand.u32 %v584, 4294901760
        %v586 = vsub.f32 %v584, %v585
        %v587 = vand.u32 %v586, 4294901760
        %588 = vmatprep.mubr.f32.mxu0 %v587
        %v589 = vand.u32 %v414, 4294901760
        %v590 = vsub.f32 %v414, %v589
        %v591 = vand.u32 %v590, 4294901760
        %v592 = vsub.f32 %v590, %v591
        %v593 = vand.u32 %v592, 4294901760
        %594 = vmatmul.mubr.f32.gmra.mrb[0].mxu0 %v593
        %v595 = vpop.f32.mrb[0].mxu0
        %v596 = vadd.f32 %v437, %v595
        %v597 = vpop.f32.mrb[0].mxu0
        %v598 = vand.u32 %v418, 4294901760
        %v599 = vsub.f32 %v418, %v598
        %v600 = vand.u32 %v599, 4294901760
        %v601 = vsub.f32 %v599, %v600
        %v602 = vand.u32 %v601, 4294901760
        %603 = vmatprep.mubr.f32.mxu0 %v602
        %v604 = vand.u32 %v417, 4294901760
        %v605 = vsub.f32 %v417, %v604
        %v606 = vand.u32 %v605, 4294901760
        %v607 = vsub.f32 %v605, %v606
        %v608 = vand.u32 %v607, 4294901760
        %609 = vmatmul.mubr.f32.gmra.mrb[0].mxu0 %v608
        %v610 = vpop.f32.mrb[0].mxu0
        %v611 = vadd.f32 %v442, %v610
        %v612 = vpop.f32.mrb[0].mxu0
        %613 = vdwg.mxu0
        %614 = vmatprep.subr.mxu0 0.0
        %v615 = vand.u32 %v345, 4294901760
        %v616 = vsub.f32 %v345, %v615
        %v617 = vand.u32 %v616, 4294901760
        %v618 = vsub.f32 %v616, %v617
        %v619 = vand.u32 %v618, 4294901760
        %620 = vmatpush1.msra.mxu0 %v619
        %621 = vmatprep.subr.mxu0 0.0
        %v622 = vand.u32 %v347, 4294901760
        %v623 = vsub.f32 %v347, %v622
        %v624 = vand.u32 %v623, 4294901760
        %v625 = vsub.f32 %v623, %v624
        %v626 = vand.u32 %v625, 4294901760
        %627 = vmatpush1.msra.mxu0 %v626
        %628 = vmatprep.subr.mxu0 0.0
        %v629 = vand.u32 %v349, 4294901760
        %v630 = vsub.f32 %v349, %v629
        %v631 = vand.u32 %v630, 4294901760
        %v632 = vsub.f32 %v630, %v631
        %v633 = vand.u32 %v632, 4294901760
        %634 = vmatpush1.msra.mxu0 %v633
        %635 = vmatprep.subr.mxu0 0.0
        %v636 = vand.u32 %v351, 4294901760
        %v637 = vsub.f32 %v351, %v636
        %v638 = vand.u32 %v637, 4294901760
        %v639 = vsub.f32 %v637, %v638
        %v640 = vand.u32 %v639, 4294901760
        %641 = vmatpush1.msra.mxu0 %v640
        %642 = vmatprep.subr.mxu0 0.0
        %v643 = vand.u32 %v353, 4294901760
        %v644 = vsub.f32 %v353, %v643
        %v645 = vand.u32 %v644, 4294901760
        %v646 = vsub.f32 %v644, %v645
        %v647 = vand.u32 %v646, 4294901760
        %648 = vmatpush1.msra.mxu0 %v647
        %649 = vmatprep.subr.mxu0 0.0
        %v650 = vand.u32 %v355, 4294901760
        %v651 = vsub.f32 %v355, %v650
        %v652 = vand.u32 %v651, 4294901760
        %v653 = vsub.f32 %v651, %v652
        %v654 = vand.u32 %v653, 4294901760
        %655 = vmatpush1.msra.mxu0 %v654
        %656 = vmatprep.subr.mxu0 0.0
        %v657 = vand.u32 %v357, 4294901760
        %v658 = vsub.f32 %v357, %v657
        %v659 = vand.u32 %v658, 4294901760
        %v660 = vsub.f32 %v658, %v659
        %v661 = vand.u32 %v660, 4294901760
        %662 = vmatpush1.msra.mxu0 %v661
        %663 = vmatprep.subr.mxu0 0.0
        %v664 = vand.u32 %v359, 4294901760
        %v665 = vsub.f32 %v359, %v664
        %v666 = vand.u32 %v665, 4294901760
        %v667 = vsub.f32 %v665, %v666
        %v668 = vand.u32 %v667, 4294901760
        %669 = vmatpush1.msra.mxu0 %v668
        %670 = vmatprep.subr.mxu0 0.0
        %v671 = vand.u32 %v361, 4294901760
        %v672 = vsub.f32 %v361, %v671
        %v673 = vand.u32 %v672, 4294901760
        %v674 = vsub.f32 %v672, %v673
        %v675 = vand.u32 %v674, 4294901760
        %676 = vmatpush1.msra.mxu0 %v675
        %677 = vmatprep.subr.mxu0 0.0
        %v678 = vand.u32 %v363, 4294901760
        %v679 = vsub.f32 %v363, %v678
        %v680 = vand.u32 %v679, 4294901760
        %v681 = vsub.f32 %v679, %v680
        %v682 = vand.u32 %v681, 4294901760
        %683 = vmatpush1.msra.mxu0 %v682
        %684 = vmatprep.subr.mxu0 0.0
        %v685 = vand.u32 %v365, 4294901760
        %v686 = vsub.f32 %v365, %v685
        %v687 = vand.u32 %v686, 4294901760
        %v688 = vsub.f32 %v686, %v687
        %v689 = vand.u32 %v688, 4294901760
        %690 = vmatpush1.msra.mxu0 %v689
        %691 = vmatprep.subr.mxu0 0.0
        %v692 = vand.u32 %v367, 4294901760
        %v693 = vsub.f32 %v367, %v692
        %v694 = vand.u32 %v693, 4294901760
        %v695 = vsub.f32 %v693, %v694
        %v696 = vand.u32 %v695, 4294901760
        %697 = vmatpush1.msra.mxu0 %v696
        %698 = vmatprep.subr.mxu0 0.0
        %v699 = vand.u32 %v369, 4294901760
        %v700 = vsub.f32 %v369, %v699
        %v701 = vand.u32 %v700, 4294901760
        %v702 = vsub.f32 %v700, %v701
        %v703 = vand.u32 %v702, 4294901760
        %704 = vmatpush1.msra.mxu0 %v703
        %705 = vmatprep.subr.mxu0 0.0
        %v706 = vand.u32 %v371, 4294901760
        %v707 = vsub.f32 %v371, %v706
        %v708 = vand.u32 %v707, 4294901760
        %v709 = vsub.f32 %v707, %v708
        %v710 = vand.u32 %v709, 4294901760
        %711 = vmatpush1.msra.mxu0 %v710
        %712 = vmatprep.subr.mxu0 0.0
        %v713 = vand.u32 %v373, 4294901760
        %v714 = vsub.f32 %v373, %v713
        %v715 = vand.u32 %v714, 4294901760
        %v716 = vsub.f32 %v714, %v715
        %v717 = vand.u32 %v716, 4294901760
        %718 = vmatpush1.msra.mxu0 %v717
        %719 = vmatprep.subr.mxu0 0.0
        %v720 = vand.u32 %v375, 4294901760
        %v721 = vsub.f32 %v375, %v720
        %v722 = vand.u32 %v721, 4294901760
        %v723 = vsub.f32 %v721, %v722
        %v724 = vand.u32 %v723, 4294901760
        %725 = vmatpush1.msra.mxu0 %v724
        %726 = vmatprep.subr.mxu0 0.0
        %v727 = vand.u32 %v340, 4294901760
        %v728 = vsub.f32 %v340, %v727
        %v729 = vand.u32 %v728, 4294901760
        %v730 = vsub.f32 %v728, %v729
        %v731 = vand.u32 %v730, 4294901760
        %732 = vmatpush1.msra.mxu0 %v731
        %733 = vmatprep.subr.mxu0 0.0
        %v734 = vand.u32 %v341, 4294901760
        %v735 = vsub.f32 %v341, %v734
        %v736 = vand.u32 %v735, 4294901760
        %v737 = vsub.f32 %v735, %v736
        %v738 = vand.u32 %v737, 4294901760
        %739 = vmatpush1.msra.mxu0 %v738
        %740 = vmatprep.subr.mxu0 0.0
        %v741 = vand.u32 %v342, 4294901760
        %v742 = vsub.f32 %v342, %v741
        %v743 = vand.u32 %v742, 4294901760
        %v744 = vsub.f32 %v742, %v743
        %v745 = vand.u32 %v744, 4294901760
        %746 = vmatpush1.msra.mxu0 %v745
        %747 = vmatprep.subr.mxu0 0.0
        %v748 = vand.u32 %v343, 4294901760
        %v749 = vsub.f32 %v343, %v748
        %v750 = vand.u32 %v749, 4294901760
        %v751 = vsub.f32 %v749, %v750
        %v752 = vand.u32 %v751, 4294901760
        %753 = vmatpush1.msra.mxu0 %v752
        %754 = vmatprep.subr.mxu0 0.0
        %v755 = vand.u32 %v377, 4294901760
        %v756 = vsub.f32 %v377, %v755
        %v757 = vand.u32 %v756, 4294901760
        %v758 = vsub.f32 %v756, %v757
        %v759 = vand.u32 %v758, 4294901760
        %760 = vmatpush1.msra.mxu0 %v759
        %761 = vmatprep.subr.mxu0 0.0
        %v762 = vand.u32 %v379, 4294901760
        %v763 = vsub.f32 %v379, %v762
        %v764 = vand.u32 %v763, 4294901760
        %v765 = vsub.f32 %v763, %v764
        %v766 = vand.u32 %v765, 4294901760
        %767 = vmatpush1.msra.mxu0 %v766
        %768 = vmatprep.subr.mxu0 0.0
        %v769 = vand.u32 %v381, 4294901760
        %v770 = vsub.f32 %v381, %v769
        %v771 = vand.u32 %v770, 4294901760
        %v772 = vsub.f32 %v770, %v771
        %v773 = vand.u32 %v772, 4294901760
        %774 = vmatpush1.msra.mxu0 %v773
        %775 = vmatprep.subr.mxu0 0.0
        %v776 = vand.u32 %v383, 4294901760
        %v777 = vsub.f32 %v383, %v776
        %v778 = vand.u32 %v777, 4294901760
        %v779 = vsub.f32 %v777, %v778
        %v780 = vand.u32 %v779, 4294901760
        %781 = vmatpush1.msra.mxu0 %v780
        %782 = vmatprep.subr.mxu0 0.0
        %v783 = vand.u32 %v385, 4294901760
        %v784 = vsub.f32 %v385, %v783
        %v785 = vand.u32 %v784, 4294901760
        %v786 = vsub.f32 %v784, %v785
        %v787 = vand.u32 %v786, 4294901760
        %788 = vmatpush1.msra.mxu0 %v787
        %789 = vmatprep.subr.mxu0 0.0
        %v790 = vand.u32 %v387, 4294901760
        %v791 = vsub.f32 %v387, %v790
        %v792 = vand.u32 %v791, 4294901760
        %v793 = vsub.f32 %v791, %v792
        %v794 = vand.u32 %v793, 4294901760
        %795 = vmatpush1.msra.mxu0 %v794
        %796 = vmatprep.subr.mxu0 0.0
        %v797 = vand.u32 %v389, 4294901760
        %v798 = vsub.f32 %v389, %v797
        %v799 = vand.u32 %v798, 4294901760
        %v800 = vsub.f32 %v798, %v799
        %v801 = vand.u32 %v800, 4294901760
        %802 = vmatpush1.msra.mxu0 %v801
        %803 = vmatprep.subr.mxu0 0.0
        %v804 = vand.u32 %v391, 4294901760
        %v805 = vsub.f32 %v391, %v804
        %v806 = vand.u32 %v805, 4294901760
        %v807 = vsub.f32 %v805, %v806
        %v808 = vand.u32 %v807, 4294901760
        %809 = vmatpush1.msra.mxu0 %v808
        %810 = vmatprep.subr.mxu0 0.0
        %v811 = vand.u32 %v393, 4294901760
        %v812 = vsub.f32 %v393, %v811
        %v813 = vand.u32 %v812, 4294901760
        %v814 = vsub.f32 %v812, %v813
        %v815 = vand.u32 %v814, 4294901760
        %816 = vmatpush1.msra.mxu0 %v815
        %817 = vmatprep.subr.mxu0 0.0
        %v818 = vand.u32 %v395, 4294901760
        %v819 = vsub.f32 %v395, %v818
        %v820 = vand.u32 %v819, 4294901760
        %v821 = vsub.f32 %v819, %v820
        %v822 = vand.u32 %v821, 4294901760
        %823 = vmatpush1.msra.mxu0 %v822
        %824 = vmatprep.subr.mxu0 0.0
        %v825 = vand.u32 %v397, 4294901760
        %v826 = vsub.f32 %v397, %v825
        %v827 = vand.u32 %v826, 4294901760
        %v828 = vsub.f32 %v826, %v827
        %v829 = vand.u32 %v828, 4294901760
        %830 = vmatpush1.msra.mxu0 %v829
        %831 = vmatprep.subr.mxu0 0.0
        %v832 = vand.u32 %v399, 4294901760
        %v833 = vsub.f32 %v399, %v832
        %v834 = vand.u32 %v833, 4294901760
        %v835 = vsub.f32 %v833, %v834
        %v836 = vand.u32 %v835, 4294901760
        %837 = vmatpush1.msra.mxu0 %v836
        %v838 = vand.u32 %v409, 4294901760
        %839 = vmatprep.mubr.f32.mxu0 %v838
        %v840 = vand.u32 %v408, 4294901760
        %841 = vmatmul.mubr.f32.gmra.mrb[0].mxu0 %v840
        %v842 = vpop.f32.mrb[0].mxu0
        %v843 = vadd.f32 %v566, %v842
        %v844 = vpop.f32.mrb[0].mxu0
        %v845 = vand.u32 %v412, 4294901760
        %846 = vmatprep.mubr.f32.mxu0 %v845
        %v847 = vand.u32 %v411, 4294901760
        %848 = vmatmul.mubr.f32.gmra.mrb[0].mxu0 %v847
        %v849 = vpop.f32.mrb[0].mxu0
        %v850 = vadd.f32 %v581, %v849
        %v851 = vpop.f32.mrb[0].mxu0
        %v852 = vand.u32 %v415, 4294901760
        %853 = vmatprep.mubr.f32.mxu0 %v852
        %v854 = vand.u32 %v414, 4294901760
        %855 = vmatmul.mubr.f32.gmra.mrb[0].mxu0 %v854
        %v856 = vpop.f32.mrb[0].mxu0
        %v857 = vadd.f32 %v596, %v856
        %v858 = vpop.f32.mrb[0].mxu0
        %v859 = vand.u32 %v418, 4294901760
        %860 = vmatprep.mubr.f32.mxu0 %v859
        %v861 = vand.u32 %v417, 4294901760
        %862 = vmatmul.mubr.f32.gmra.mrb[0].mxu0 %v861
        %v863 = vpop.f32.mrb[0].mxu0
        %v864 = vadd.f32 %v611, %v863
        %v865 = vpop.f32.mrb[0].mxu0
        %866 = vdwg.mxu0
        %867 = vmatprep.subr.mxu0 0.0
        %v868 = vand.u32 %v345, 4294901760
        %v869 = vsub.f32 %v345, %v868
        %870 = vmatpush1.msra.mxu0 %v869
        %871 = vmatprep.subr.mxu0 0.0
        %v872 = vand.u32 %v347, 4294901760
        %v873 = vsub.f32 %v347, %v872
        %874 = vmatpush1.msra.mxu0 %v873
        %875 = vmatprep.subr.mxu0 0.0
        %v876 = vand.u32 %v349, 4294901760
        %v877 = vsub.f32 %v349, %v876
        %878 = vmatpush1.msra.mxu0 %v877
        %879 = vmatprep.subr.mxu0 0.0
        %v880 = vand.u32 %v351, 4294901760
        %v881 = vsub.f32 %v351, %v880
        %882 = vmatpush1.msra.mxu0 %v881
        %883 = vmatprep.subr.mxu0 0.0
        %v884 = vand.u32 %v353, 4294901760
        %v885 = vsub.f32 %v353, %v884
        %886 = vmatpush1.msra.mxu0 %v885
        %887 = vmatprep.subr.mxu0 0.0
        %v888 = vand.u32 %v355, 4294901760
        %v889 = vsub.f32 %v355, %v888
        %890 = vmatpush1.msra.mxu0 %v889
        %891 = vmatprep.subr.mxu0 0.0
        %v892 = vand.u32 %v357, 4294901760
        %v893 = vsub.f32 %v357, %v892
        %894 = vmatpush1.msra.mxu0 %v893
        %895 = vmatprep.subr.mxu0 0.0
        %v896 = vand.u32 %v359, 4294901760
        %v897 = vsub.f32 %v359, %v896
        %898 = vmatpush1.msra.mxu0 %v897
        %899 = vmatprep.subr.mxu0 0.0
        %v900 = vand.u32 %v361, 4294901760
        %v901 = vsub.f32 %v361, %v900
        %902 = vmatpush1.msra.mxu0 %v901
        %903 = vmatprep.subr.mxu0 0.0
        %v904 = vand.u32 %v363, 4294901760
        %v905 = vsub.f32 %v363, %v904
        %906 = vmatpush1.msra.mxu0 %v905
        %907 = vmatprep.subr.mxu0 0.0
        %v908 = vand.u32 %v365, 4294901760
        %v909 = vsub.f32 %v365, %v908
        %910 = vmatpush1.msra.mxu0 %v909
        %911 = vmatprep.subr.mxu0 0.0
        %v912 = vand.u32 %v367, 4294901760
        %v913 = vsub.f32 %v367, %v912
        %914 = vmatpush1.msra.mxu0 %v913
        %915 = vmatprep.subr.mxu0 0.0
        %v916 = vand.u32 %v369, 4294901760
        %v917 = vsub.f32 %v369, %v916
        %918 = vmatpush1.msra.mxu0 %v917
        %919 = vmatprep.subr.mxu0 0.0
        %v920 = vand.u32 %v371, 4294901760
        %v921 = vsub.f32 %v371, %v920
        %922 = vmatpush1.msra.mxu0 %v921
        %923 = vmatprep.subr.mxu0 0.0
        %v924 = vand.u32 %v373, 4294901760
        %v925 = vsub.f32 %v373, %v924
        %926 = vmatpush1.msra.mxu0 %v925
        %927 = vmatprep.subr.mxu0 0.0
        %v928 = vand.u32 %v375, 4294901760
        %v929 = vsub.f32 %v375, %v928
        %930 = vmatpush1.msra.mxu0 %v929
        %931 = vmatprep.subr.mxu0 0.0
        %v932 = vand.u32 %v340, 4294901760
        %v933 = vsub.f32 %v340, %v932
        %934 = vmatpush1.msra.mxu0 %v933
        %935 = vmatprep.subr.mxu0 0.0
        %v936 = vand.u32 %v341, 4294901760
        %v937 = vsub.f32 %v341, %v936
        %938 = vmatpush1.msra.mxu0 %v937
        %939 = vmatprep.subr.mxu0 0.0
        %v940 = vand.u32 %v342, 4294901760
        %v941 = vsub.f32 %v342, %v940
        %942 = vmatpush1.msra.mxu0 %v941
        %943 = vmatprep.subr.mxu0 0.0
        %v944 = vand.u32 %v343, 4294901760
        %v945 = vsub.f32 %v343, %v944
        %946 = vmatpush1.msra.mxu0 %v945
        %947 = vmatprep.subr.mxu0 0.0
        %v948 = vand.u32 %v377, 4294901760
        %v949 = vsub.f32 %v377, %v948
        %950 = vmatpush1.msra.mxu0 %v949
        %951 = vmatprep.subr.mxu0 0.0
        %v952 = vand.u32 %v379, 4294901760
        %v953 = vsub.f32 %v379, %v952
        %954 = vmatpush1.msra.mxu0 %v953
        %955 = vmatprep.subr.mxu0 0.0
        %v956 = vand.u32 %v381, 4294901760
        %v957 = vsub.f32 %v381, %v956
        %958 = vmatpush1.msra.mxu0 %v957
        %959 = vmatprep.subr.mxu0 0.0
        %v960 = vand.u32 %v383, 4294901760
        %v961 = vsub.f32 %v383, %v960
        %962 = vmatpush1.msra.mxu0 %v961
        %963 = vmatprep.subr.mxu0 0.0
        %v964 = vand.u32 %v385, 4294901760
        %v965 = vsub.f32 %v385, %v964
        %966 = vmatpush1.msra.mxu0 %v965
        %967 = vmatprep.subr.mxu0 0.0
        %v968 = vand.u32 %v387, 4294901760
        %v969 = vsub.f32 %v387, %v968
        %970 = vmatpush1.msra.mxu0 %v969
        %971 = vmatprep.subr.mxu0 0.0
        %v972 = vand.u32 %v389, 4294901760
        %v973 = vsub.f32 %v389, %v972
        %974 = vmatpush1.msra.mxu0 %v973
        %975 = vmatprep.subr.mxu0 0.0
        %v976 = vand.u32 %v391, 4294901760
        %v977 = vsub.f32 %v391, %v976
        %978 = vmatpush1.msra.mxu0 %v977
        %979 = vmatprep.subr.mxu0 0.0
        %v980 = vand.u32 %v393, 4294901760
        %v981 = vsub.f32 %v393, %v980
        %982 = vmatpush1.msra.mxu0 %v981
        %983 = vmatprep.subr.mxu0 0.0
        %v984 = vand.u32 %v395, 4294901760
        %v985 = vsub.f32 %v395, %v984
        %986 = vmatpush1.msra.mxu0 %v985
        %987 = vmatprep.subr.mxu0 0.0
        %v988 = vand.u32 %v397, 4294901760
        %v989 = vsub.f32 %v397, %v988
        %990 = vmatpush1.msra.mxu0 %v989
        %991 = vmatprep.subr.mxu0 0.0
        %v992 = vand.u32 %v399, 4294901760
        %v993 = vsub.f32 %v399, %v992
        %994 = vmatpush1.msra.mxu0 %v993
        %v995 = vand.u32 %v409, 4294901760
        %v996 = vsub.f32 %v409, %v995
        %997 = vmatprep.mubr.f32.mxu0 %v996
        %v998 = vand.u32 %v408, 4294901760
        %v999 = vsub.f32 %v408, %v998
        %1000 = vmatmul.mubr.f32.gmra.mrb[0].mxu0 %v999
        %v1001 = vpop.f32.mrb[0].mxu0
        %v1002 = vadd.f32 %v843, %v1001
        %v1003 = vpop.f32.mrb[0].mxu0
        %v1004 = vand.u32 %v412, 4294901760
        %v1005 = vsub.f32 %v412, %v1004
        %1006 = vmatprep.mubr.f32.mxu0 %v1005
        %v1007 = vand.u32 %v411, 4294901760
        %v1008 = vsub.f32 %v411, %v1007
        %1009 = vmatmul.mubr.f32.gmra.mrb[0].mxu0 %v1008
        %v1010 = vpop.f32.mrb[0].mxu0
        %v1011 = vadd.f32 %v850, %v1010
        %v1012 = vpop.f32.mrb[0].mxu0
        %v1013 = vand.u32 %v415, 4294901760
        %v1014 = vsub.f32 %v415, %v1013
        %1015 = vmatprep.mubr.f32.mxu0 %v1014
        %v1016 = vand.u32 %v414, 4294901760
        %v1017 = vsub.f32 %v414, %v1016
        %1018 = vmatmul.mubr.f32.gmra.mrb[0].mxu0 %v1017
        %v1019 = vpop.f32.mrb[0].mxu0
        %v1020 = vadd.f32 %v857, %v1019
        %v1021 = vpop.f32.mrb[0].mxu0
        %v1022 = vand.u32 %v418, 4294901760
        %v1023 = vsub.f32 %v418, %v1022
        %1024 = vmatprep.mubr.f32.mxu0 %v1023
        %v1025 = vand.u32 %v417, 4294901760
        %v1026 = vsub.f32 %v417, %v1025
        %1027 = vmatmul.mubr.f32.gmra.mrb[0].mxu0 %v1026
        %v1028 = vpop.f32.mrb[0].mxu0
        %v1029 = vadd.f32 %v864, %v1028
        %v1030 = vpop.f32.mrb[0].mxu0
        %1031 = vdwg.mxu0
        %1032 = vmatprep.subr.mxu0 0.0
        %v1033 = vand.u32 %v345, 4294901760
        %1034 = vmatpush1.msra.mxu0 %v1033
        %1035 = vmatprep.subr.mxu0 0.0
        %v1036 = vand.u32 %v347, 4294901760
        %1037 = vmatpush1.msra.mxu0 %v1036
        %1038 = vmatprep.subr.mxu0 0.0
        %v1039 = vand.u32 %v349, 4294901760
        %1040 = vmatpush1.msra.mxu0 %v1039
        %1041 = vmatprep.subr.mxu0 0.0
        %v1042 = vand.u32 %v351, 4294901760
        %1043 = vmatpush1.msra.mxu0 %v1042
        %1044 = vmatprep.subr.mxu0 0.0
        %v1045 = vand.u32 %v353, 4294901760
        %1046 = vmatpush1.msra.mxu0 %v1045
        %1047 = vmatprep.subr.mxu0 0.0
        %v1048 = vand.u32 %v355, 4294901760
        %1049 = vmatpush1.msra.mxu0 %v1048
        %1050 = vmatprep.subr.mxu0 0.0
        %v1051 = vand.u32 %v357, 4294901760
        %1052 = vmatpush1.msra.mxu0 %v1051
        %1053 = vmatprep.subr.mxu0 0.0
        %v1054 = vand.u32 %v359, 4294901760
        %1055 = vmatpush1.msra.mxu0 %v1054
        %1056 = vmatprep.subr.mxu0 0.0
        %v1057 = vand.u32 %v361, 4294901760
        %1058 = vmatpush1.msra.mxu0 %v1057
        %1059 = vmatprep.subr.mxu0 0.0
        %v1060 = vand.u32 %v363, 4294901760
        %1061 = vmatpush1.msra.mxu0 %v1060
        %1062 = vmatprep.subr.mxu0 0.0
        %v1063 = vand.u32 %v365, 4294901760
        %1064 = vmatpush1.msra.mxu0 %v1063
        %1065 = vmatprep.subr.mxu0 0.0
        %v1066 = vand.u32 %v367, 4294901760
        %1067 = vmatpush1.msra.mxu0 %v1066
        %1068 = vmatprep.subr.mxu0 0.0
        %v1069 = vand.u32 %v369, 4294901760
        %1070 = vmatpush1.msra.mxu0 %v1069
        %1071 = vmatprep.subr.mxu0 0.0
        %v1072 = vand.u32 %v371, 4294901760
        %1073 = vmatpush1.msra.mxu0 %v1072
        %1074 = vmatprep.subr.mxu0 0.0
        %v1075 = vand.u32 %v373, 4294901760
        %1076 = vmatpush1.msra.mxu0 %v1075
        %1077 = vmatprep.subr.mxu0 0.0
        %v1078 = vand.u32 %v375, 4294901760
        %1079 = vmatpush1.msra.mxu0 %v1078
        %1080 = vmatprep.subr.mxu0 0.0
        %v1081 = vand.u32 %v340, 4294901760
        %1082 = vmatpush1.msra.mxu0 %v1081
        %1083 = vmatprep.subr.mxu0 0.0
        %v1084 = vand.u32 %v341, 4294901760
        %1085 = vmatpush1.msra.mxu0 %v1084
        %1086 = vmatprep.subr.mxu0 0.0
        %v1087 = vand.u32 %v342, 4294901760
        %1088 = vmatpush1.msra.mxu0 %v1087
        %1089 = vmatprep.subr.mxu0 0.0
        %v1090 = vand.u32 %v343, 4294901760
        %1091 = vmatpush1.msra.mxu0 %v1090
        %1092 = vmatprep.subr.mxu0 0.0
        %v1093 = vand.u32 %v377, 4294901760
        %1094 = vmatpush1.msra.mxu0 %v1093
        %1095 = vmatprep.subr.mxu0 0.0
        %v1096 = vand.u32 %v379, 4294901760
        %1097 = vmatpush1.msra.mxu0 %v1096
        %1098 = vmatprep.subr.mxu0 0.0
        %v1099 = vand.u32 %v381, 4294901760
        %1100 = vmatpush1.msra.mxu0 %v1099
        %1101 = vmatprep.subr.mxu0 0.0
        %v1102 = vand.u32 %v383, 4294901760
        %1103 = vmatpush1.msra.mxu0 %v1102
        %1104 = vmatprep.subr.mxu0 0.0
        %v1105 = vand.u32 %v385, 4294901760
        %1106 = vmatpush1.msra.mxu0 %v1105
        %1107 = vmatprep.subr.mxu0 0.0
        %v1108 = vand.u32 %v387, 4294901760
        %1109 = vmatpush1.msra.mxu0 %v1108
        %1110 = vmatprep.subr.mxu0 0.0
        %v1111 = vand.u32 %v389, 4294901760
        %1112 = vmatpush1.msra.mxu0 %v1111
        %1113 = vmatprep.subr.mxu0 0.0
        %v1114 = vand.u32 %v391, 4294901760
        %1115 = vmatpush1.msra.mxu0 %v1114
        %1116 = vmatprep.subr.mxu0 0.0
        %v1117 = vand.u32 %v393, 4294901760
        %1118 = vmatpush1.msra.mxu0 %v1117
        %1119 = vmatprep.subr.mxu0 0.0
        %v1120 = vand.u32 %v395, 4294901760
        %1121 = vmatpush1.msra.mxu0 %v1120
        %1122 = vmatprep.subr.mxu0 0.0
        %v1123 = vand.u32 %v397, 4294901760
        %1124 = vmatpush1.msra.mxu0 %v1123
        %1125 = vmatprep.subr.mxu0 0.0
        %v1126 = vand.u32 %v399, 4294901760
        %1127 = vmatpush1.msra.mxu0 %v1126
        %v1128 = vand.u32 %v409, 4294901760
        %v1129 = vsub.f32 %v409, %v1128
        %v1130 = vand.u32 %v1129, 4294901760
        %1131 = vmatprep.mubr.f32.mxu0 %v1130
        %v1132 = vand.u32 %v408, 4294901760
        %v1133 = vsub.f32 %v408, %v1132
        %v1134 = vand.u32 %v1133, 4294901760
        %1135 = vmatmul.mubr.f32.gmra.mrb[0].mxu0 %v1134
        %v1136 = vpop.f32.mrb[0].mxu0
        %v1137 = vadd.f32 %v1002, %v1136
        %v1138 = vpop.f32.mrb[0].mxu0
        %v1139 = vand.u32 %v412, 4294901760
        %v1140 = vsub.f32 %v412, %v1139
        %v1141 = vand.u32 %v1140, 4294901760
        %1142 = vmatprep.mubr.f32.mxu0 %v1141
        %v1143 = vand.u32 %v411, 4294901760
        %v1144 = vsub.f32 %v411, %v1143
        %v1145 = vand.u32 %v1144, 4294901760
        %1146 = vmatmul.mubr.f32.gmra.mrb[0].mxu0 %v1145
        %v1147 = vpop.f32.mrb[0].mxu0
        %v1148 = vadd.f32 %v1011, %v1147
        %v1149 = vpop.f32.mrb[0].mxu0
        %v1150 = vand.u32 %v415, 4294901760
        %v1151 = vsub.f32 %v415, %v1150
        %v1152 = vand.u32 %v1151, 4294901760
        %1153 = vmatprep.mubr.f32.mxu0 %v1152
        %v1154 = vand.u32 %v414, 4294901760
        %v1155 = vsub.f32 %v414, %v1154
        %v1156 = vand.u32 %v1155, 4294901760
        %1157 = vmatmul.mubr.f32.gmra.mrb[0].mxu0 %v1156
        %v1158 = vpop.f32.mrb[0].mxu0
        %v1159 = vadd.f32 %v1020, %v1158
        %v1160 = vpop.f32.mrb[0].mxu0
        %v1161 = vand.u32 %v418, 4294901760
        %v1162 = vsub.f32 %v418, %v1161
        %v1163 = vand.u32 %v1162, 4294901760
        %1164 = vmatprep.mubr.f32.mxu0 %v1163
        %v1165 = vand.u32 %v417, 4294901760
        %v1166 = vsub.f32 %v417, %v1165
        %v1167 = vand.u32 %v1166, 4294901760
        %1168 = vmatmul.mubr.f32.gmra.mrb[0].mxu0 %v1167
        %v1169 = vpop.f32.mrb[0].mxu0
        %v1170 = vadd.f32 %v1029, %v1169
        %v1171 = vpop.f32.mrb[0].mxu0
        %1172 = vdwg.mxu0
        %1173 = vmatprep.subr.mxu0 0.0
        %v1174 = vand.u32 %v345, 4294901760
        %v1175 = vsub.f32 %v345, %v1174
        %v1176 = vand.u32 %v1175, 4294901760
        %1177 = vmatpush1.msra.mxu0 %v1176
        %1178 = vmatprep.subr.mxu0 0.0
        %v1179 = vand.u32 %v347, 4294901760
        %v1180 = vsub.f32 %v347, %v1179
        %v1181 = vand.u32 %v1180, 4294901760
        %1182 = vmatpush1.msra.mxu0 %v1181
        %1183 = vmatprep.subr.mxu0 0.0
        %v1184 = vand.u32 %v349, 4294901760
        %v1185 = vsub.f32 %v349, %v1184
        %v1186 = vand.u32 %v1185, 4294901760
        %1187 = vmatpush1.msra.mxu0 %v1186
        %1188 = vmatprep.subr.mxu0 0.0
        %v1189 = vand.u32 %v351, 4294901760
        %v1190 = vsub.f32 %v351, %v1189
        %v1191 = vand.u32 %v1190, 4294901760
        %1192 = vmatpush1.msra.mxu0 %v1191
        %1193 = vmatprep.subr.mxu0 0.0
        %v1194 = vand.u32 %v353, 4294901760
        %v1195 = vsub.f32 %v353, %v1194
        %v1196 = vand.u32 %v1195, 4294901760
        %1197 = vmatpush1.msra.mxu0 %v1196
        %1198 = vmatprep.subr.mxu0 0.0
        %v1199 = vand.u32 %v355, 4294901760
        %v1200 = vsub.f32 %v355, %v1199
        %v1201 = vand.u32 %v1200, 4294901760
        %1202 = vmatpush1.msra.mxu0 %v1201
        %1203 = vmatprep.subr.mxu0 0.0
        %v1204 = vand.u32 %v357, 4294901760
        %v1205 = vsub.f32 %v357, %v1204
        %v1206 = vand.u32 %v1205, 4294901760
        %1207 = vmatpush1.msra.mxu0 %v1206
        %1208 = vmatprep.subr.mxu0 0.0
        %v1209 = vand.u32 %v359, 4294901760
        %v1210 = vsub.f32 %v359, %v1209
        %v1211 = vand.u32 %v1210, 4294901760
        %1212 = vmatpush1.msra.mxu0 %v1211
        %1213 = vmatprep.subr.mxu0 0.0
        %v1214 = vand.u32 %v361, 4294901760
        %v1215 = vsub.f32 %v361, %v1214
        %v1216 = vand.u32 %v1215, 4294901760
        %1217 = vmatpush1.msra.mxu0 %v1216
        %1218 = vmatprep.subr.mxu0 0.0
        %v1219 = vand.u32 %v363, 4294901760
        %v1220 = vsub.f32 %v363, %v1219
        %v1221 = vand.u32 %v1220, 4294901760
        %1222 = vmatpush1.msra.mxu0 %v1221
        %1223 = vmatprep.subr.mxu0 0.0
        %v1224 = vand.u32 %v365, 4294901760
        %v1225 = vsub.f32 %v365, %v1224
        %v1226 = vand.u32 %v1225, 4294901760
        %1227 = vmatpush1.msra.mxu0 %v1226
        %1228 = vmatprep.subr.mxu0 0.0
        %v1229 = vand.u32 %v367, 4294901760
        %v1230 = vsub.f32 %v367, %v1229
        %v1231 = vand.u32 %v1230, 4294901760
        %1232 = vmatpush1.msra.mxu0 %v1231
        %1233 = vmatprep.subr.mxu0 0.0
        %v1234 = vand.u32 %v369, 4294901760
        %v1235 = vsub.f32 %v369, %v1234
        %v1236 = vand.u32 %v1235, 4294901760
        %1237 = vmatpush1.msra.mxu0 %v1236
        %1238 = vmatprep.subr.mxu0 0.0
        %v1239 = vand.u32 %v371, 4294901760
        %v1240 = vsub.f32 %v371, %v1239
        %v1241 = vand.u32 %v1240, 4294901760
        %1242 = vmatpush1.msra.mxu0 %v1241
        %1243 = vmatprep.subr.mxu0 0.0
        %v1244 = vand.u32 %v373, 4294901760
        %v1245 = vsub.f32 %v373, %v1244
        %v1246 = vand.u32 %v1245, 4294901760
        %1247 = vmatpush1.msra.mxu0 %v1246
        %1248 = vmatprep.subr.mxu0 0.0
        %v1249 = vand.u32 %v375, 4294901760
        %v1250 = vsub.f32 %v375, %v1249
        %v1251 = vand.u32 %v1250, 4294901760
        %1252 = vmatpush1.msra.mxu0 %v1251
        %1253 = vmatprep.subr.mxu0 0.0
        %v1254 = vand.u32 %v340, 4294901760
        %v1255 = vsub.f32 %v340, %v1254
        %v1256 = vand.u32 %v1255, 4294901760
        %1257 = vmatpush1.msra.mxu0 %v1256
        %1258 = vmatprep.subr.mxu0 0.0
        %v1259 = vand.u32 %v341, 4294901760
        %v1260 = vsub.f32 %v341, %v1259
        %v1261 = vand.u32 %v1260, 4294901760
        %1262 = vmatpush1.msra.mxu0 %v1261
        %1263 = vmatprep.subr.mxu0 0.0
        %v1264 = vand.u32 %v342, 4294901760
        %v1265 = vsub.f32 %v342, %v1264
        %v1266 = vand.u32 %v1265, 4294901760
        %1267 = vmatpush1.msra.mxu0 %v1266
        %1268 = vmatprep.subr.mxu0 0.0
        %v1269 = vand.u32 %v343, 4294901760
        %v1270 = vsub.f32 %v343, %v1269
        %v1271 = vand.u32 %v1270, 4294901760
        %1272 = vmatpush1.msra.mxu0 %v1271
        %1273 = vmatprep.subr.mxu0 0.0
        %v1274 = vand.u32 %v377, 4294901760
        %v1275 = vsub.f32 %v377, %v1274
        %v1276 = vand.u32 %v1275, 4294901760
        %1277 = vmatpush1.msra.mxu0 %v1276
        %1278 = vmatprep.subr.mxu0 0.0
        %v1279 = vand.u32 %v379, 4294901760
        %v1280 = vsub.f32 %v379, %v1279
        %v1281 = vand.u32 %v1280, 4294901760
        %1282 = vmatpush1.msra.mxu0 %v1281
        %1283 = vmatprep.subr.mxu0 0.0
        %v1284 = vand.u32 %v381, 4294901760
        %v1285 = vsub.f32 %v381, %v1284
        %v1286 = vand.u32 %v1285, 4294901760
        %1287 = vmatpush1.msra.mxu0 %v1286
        %1288 = vmatprep.subr.mxu0 0.0
        %v1289 = vand.u32 %v383, 4294901760
        %v1290 = vsub.f32 %v383, %v1289
        %v1291 = vand.u32 %v1290, 4294901760
        %1292 = vmatpush1.msra.mxu0 %v1291
        %1293 = vmatprep.subr.mxu0 0.0
        %v1294 = vand.u32 %v385, 4294901760
        %v1295 = vsub.f32 %v385, %v1294
        %v1296 = vand.u32 %v1295, 4294901760
        %1297 = vmatpush1.msra.mxu0 %v1296
        %1298 = vmatprep.subr.mxu0 0.0
        %v1299 = vand.u32 %v387, 4294901760
        %v1300 = vsub.f32 %v387, %v1299
        %v1301 = vand.u32 %v1300, 4294901760
        %1302 = vmatpush1.msra.mxu0 %v1301
        %1303 = vmatprep.subr.mxu0 0.0
        %v1304 = vand.u32 %v389, 4294901760
        %v1305 = vsub.f32 %v389, %v1304
        %v1306 = vand.u32 %v1305, 4294901760
        %1307 = vmatpush1.msra.mxu0 %v1306
        %1308 = vmatprep.subr.mxu0 0.0
        %v1309 = vand.u32 %v391, 4294901760
        %v1310 = vsub.f32 %v391, %v1309
        %v1311 = vand.u32 %v1310, 4294901760
        %1312 = vmatpush1.msra.mxu0 %v1311
        %1313 = vmatprep.subr.mxu0 0.0
        %v1314 = vand.u32 %v393, 4294901760
        %v1315 = vsub.f32 %v393, %v1314
        %v1316 = vand.u32 %v1315, 4294901760
        %1317 = vmatpush1.msra.mxu0 %v1316
        %1318 = vmatprep.subr.mxu0 0.0
        %v1319 = vand.u32 %v395, 4294901760
        %v1320 = vsub.f32 %v395, %v1319
        %v1321 = vand.u32 %v1320, 4294901760
        %1322 = vmatpush1.msra.mxu0 %v1321
        %1323 = vmatprep.subr.mxu0 0.0
        %v1324 = vand.u32 %v397, 4294901760
        %v1325 = vsub.f32 %v397, %v1324
        %v1326 = vand.u32 %v1325, 4294901760
        %1327 = vmatpush1.msra.mxu0 %v1326
        %1328 = vmatprep.subr.mxu0 0.0
        %v1329 = vand.u32 %v399, 4294901760
        %v1330 = vsub.f32 %v399, %v1329
        %v1331 = vand.u32 %v1330, 4294901760
        %1332 = vmatpush1.msra.mxu0 %v1331
        %v1333 = vand.u32 %v409, 4294901760
        %1334 = vmatprep.mubr.f32.mxu0 %v1333
        %v1335 = vand.u32 %v408, 4294901760
        %1336 = vmatmul.mubr.f32.gmra.mrb[0].mxu0 %v1335
        %v1337 = vpop.f32.mrb[0].mxu0
        %v1338 = vadd.f32 %v1137, %v1337
        %v1339 = vpop.f32.mrb[0].mxu0
        %v1340 = vand.u32 %v412, 4294901760
        %1341 = vmatprep.mubr.f32.mxu0 %v1340
        %v1342 = vand.u32 %v411, 4294901760
        %1343 = vmatmul.mubr.f32.gmra.mrb[0].mxu0 %v1342
        %v1344 = vpop.f32.mrb[0].mxu0
        %v1345 = vadd.f32 %v1148, %v1344
        %v1346 = vpop.f32.mrb[0].mxu0
        %v1347 = vand.u32 %v415, 4294901760
        %1348 = vmatprep.mubr.f32.mxu0 %v1347
        %v1349 = vand.u32 %v414, 4294901760
        %1350 = vmatmul.mubr.f32.gmra.mrb[0].mxu0 %v1349
        %v1351 = vpop.f32.mrb[0].mxu0
        %v1352 = vadd.f32 %v1159, %v1351
        %v1353 = vpop.f32.mrb[0].mxu0
        %v1354 = vand.u32 %v418, 4294901760
        %1355 = vmatprep.mubr.f32.mxu0 %v1354
        %v1356 = vand.u32 %v417, 4294901760
        %1357 = vmatmul.mubr.f32.gmra.mrb[0].mxu0 %v1356
        %v1358 = vpop.f32.mrb[0].mxu0
        %v1359 = vadd.f32 %v1170, %v1358
        %v1360 = vpop.f32.mrb[0].mxu0
        %1361 = vdwg.mxu0
        %1362 = vmatprep.subr.mxu0 0.0
        %v1363 = vand.u32 %v345, 4294901760
        %1364 = vmatpush1.msra.mxu0 %v1363
        %1365 = vmatprep.subr.mxu0 0.0
        %v1366 = vand.u32 %v347, 4294901760
        %1367 = vmatpush1.msra.mxu0 %v1366
        %1368 = vmatprep.subr.mxu0 0.0
        %v1369 = vand.u32 %v349, 4294901760
        %1370 = vmatpush1.msra.mxu0 %v1369
        %1371 = vmatprep.subr.mxu0 0.0
        %v1372 = vand.u32 %v351, 4294901760
        %1373 = vmatpush1.msra.mxu0 %v1372
        %1374 = vmatprep.subr.mxu0 0.0
        %v1375 = vand.u32 %v353, 4294901760
        %1376 = vmatpush1.msra.mxu0 %v1375
        %1377 = vmatprep.subr.mxu0 0.0
        %v1378 = vand.u32 %v355, 4294901760
        %1379 = vmatpush1.msra.mxu0 %v1378
        %1380 = vmatprep.subr.mxu0 0.0
        %v1381 = vand.u32 %v357, 4294901760
        %1382 = vmatpush1.msra.mxu0 %v1381
        %1383 = vmatprep.subr.mxu0 0.0
        %v1384 = vand.u32 %v359, 4294901760
        %1385 = vmatpush1.msra.mxu0 %v1384
        %1386 = vmatprep.subr.mxu0 0.0
        %v1387 = vand.u32 %v361, 4294901760
        %1388 = vmatpush1.msra.mxu0 %v1387
        %1389 = vmatprep.subr.mxu0 0.0
        %v1390 = vand.u32 %v363, 4294901760
        %1391 = vmatpush1.msra.mxu0 %v1390
        %1392 = vmatprep.subr.mxu0 0.0
        %v1393 = vand.u32 %v365, 4294901760
        %1394 = vmatpush1.msra.mxu0 %v1393
        %1395 = vmatprep.subr.mxu0 0.0
        %v1396 = vand.u32 %v367, 4294901760
        %1397 = vmatpush1.msra.mxu0 %v1396
        %1398 = vmatprep.subr.mxu0 0.0
        %v1399 = vand.u32 %v369, 4294901760
        %1400 = vmatpush1.msra.mxu0 %v1399
        %1401 = vmatprep.subr.mxu0 0.0
        %v1402 = vand.u32 %v371, 4294901760
        %1403 = vmatpush1.msra.mxu0 %v1402
        %1404 = vmatprep.subr.mxu0 0.0
        %v1405 = vand.u32 %v373, 4294901760
        %1406 = vmatpush1.msra.mxu0 %v1405
        %1407 = vmatprep.subr.mxu0 0.0
        %v1408 = vand.u32 %v375, 4294901760
        %1409 = vmatpush1.msra.mxu0 %v1408
        %1410 = vmatprep.subr.mxu0 0.0
        %v1411 = vand.u32 %v340, 4294901760
        %1412 = vmatpush1.msra.mxu0 %v1411
        %1413 = vmatprep.subr.mxu0 0.0
        %v1414 = vand.u32 %v341, 4294901760
        %1415 = vmatpush1.msra.mxu0 %v1414
        %1416 = vmatprep.subr.mxu0 0.0
        %v1417 = vand.u32 %v342, 4294901760
        %1418 = vmatpush1.msra.mxu0 %v1417
        %1419 = vmatprep.subr.mxu0 0.0
        %v1420 = vand.u32 %v343, 4294901760
        %1421 = vmatpush1.msra.mxu0 %v1420
        %1422 = vmatprep.subr.mxu0 0.0
        %v1423 = vand.u32 %v377, 4294901760
        %1424 = vmatpush1.msra.mxu0 %v1423
        %1425 = vmatprep.subr.mxu0 0.0
        %v1426 = vand.u32 %v379, 4294901760
        %1427 = vmatpush1.msra.mxu0 %v1426
        %1428 = vmatprep.subr.mxu0 0.0
        %v1429 = vand.u32 %v381, 4294901760
        %1430 = vmatpush1.msra.mxu0 %v1429
        %1431 = vmatprep.subr.mxu0 0.0
        %v1432 = vand.u32 %v383, 4294901760
        %1433 = vmatpush1.msra.mxu0 %v1432
        %1434 = vmatprep.subr.mxu0 0.0
        %v1435 = vand.u32 %v385, 4294901760
        %1436 = vmatpush1.msra.mxu0 %v1435
        %1437 = vmatprep.subr.mxu0 0.0
        %v1438 = vand.u32 %v387, 4294901760
        %1439 = vmatpush1.msra.mxu0 %v1438
        %1440 = vmatprep.subr.mxu0 0.0
        %v1441 = vand.u32 %v389, 4294901760
        %1442 = vmatpush1.msra.mxu0 %v1441
        %1443 = vmatprep.subr.mxu0 0.0
        %v1444 = vand.u32 %v391, 4294901760
        %1445 = vmatpush1.msra.mxu0 %v1444
        %1446 = vmatprep.subr.mxu0 0.0
        %v1447 = vand.u32 %v393, 4294901760
        %1448 = vmatpush1.msra.mxu0 %v1447
        %1449 = vmatprep.subr.mxu0 0.0
        %v1450 = vand.u32 %v395, 4294901760
        %1451 = vmatpush1.msra.mxu0 %v1450
        %1452 = vmatprep.subr.mxu0 0.0
        %v1453 = vand.u32 %v397, 4294901760
        %1454 = vmatpush1.msra.mxu0 %v1453
        %1455 = vmatprep.subr.mxu0 0.0
        %v1456 = vand.u32 %v399, 4294901760
        %1457 = vmatpush1.msra.mxu0 %v1456
        %v1458 = vand.u32 %v409, 4294901760
        %1459 = vmatprep.mubr.f32.mxu0 %v1458
        %v1460 = vand.u32 %v408, 4294901760
        %1461 = vmatmul.mubr.f32.gmra.mrb[0].mxu0 %v1460
        %v1462 = vpop.f32.mrb[0].mxu0
        %v1463 = vadd.f32 %v1338, %v1462
        %v1464 = vpop.f32.mrb[0].mxu0
        %v1465 = vand.u32 %v412, 4294901760
        %1466 = vmatprep.mubr.f32.mxu0 %v1465
        %v1467 = vand.u32 %v411, 4294901760
        %1468 = vmatmul.mubr.f32.gmra.mrb[0].mxu0 %v1467
        %v1469 = vpop.f32.mrb[0].mxu0
        %v1470 = vadd.f32 %v1345, %v1469
        %v1471 = vpop.f32.mrb[0].mxu0
        %v1472 = vand.u32 %v415, 4294901760
        %1473 = vmatprep.mubr.f32.mxu0 %v1472
        %v1474 = vand.u32 %v414, 4294901760
        %1475 = vmatmul.mubr.f32.gmra.mrb[0].mxu0 %v1474
        %v1476 = vpop.f32.mrb[0].mxu0
        %v1477 = vadd.f32 %v1352, %v1476
        %v1478 = vpop.f32.mrb[0].mxu0
        %v1479 = vand.u32 %v418, 4294901760
        %1480 = vmatprep.mubr.f32.mxu0 %v1479
        %v1481 = vand.u32 %v417, 4294901760
        %1482 = vmatmul.mubr.f32.gmra.mrb[0].mxu0 %v1481
        %v1483 = vpop.f32.mrb[0].mxu0
        %v1484 = vadd.f32 %v1359, %v1483
        %v1485 = vpop.f32.mrb[0].mxu0
        %1486 = vdwg.mxu0
        %1487 = vmatprep.subr.mxu0 0.0
        %v1488 = vand.u32 %v401, 4294901760
        %1489 = vmatpush1.msra.mxu0 %v1488
        %1490 = vmatprep.subr.mxu0 0.0
        %v1491 = vand.u32 %v403, 4294901760
        %1492 = vmatpush1.msra.mxu0 %v1491
        %1493 = vmatprep.subr.mxu0 0.0
        %v1494 = vand.u32 %v405, 4294901760
        %1495 = vmatpush1.msra.mxu0 %v1494
        %1496 = vmatprep.subr.mxu0 0.0
        %v1497 = vand.u32 %v407, 4294901760
        %1498 = vmatpush1.msra.mxu0 %v1497
        %1499 = vmatprep.subr.mxu0 0.0
        %1500 = vmatpush1.msra.mxu0 0.0
        %1501 = vmatprep.subr.mxu0 0.0
        %1502 = vmatpush1.msra.mxu0 0.0
        %1503 = vmatprep.subr.mxu0 0.0
        %1504 = vmatpush1.msra.mxu0 0.0
        %1505 = vmatprep.subr.mxu0 0.0
        %1506 = vmatpush1.msra.mxu0 0.0
        %1507 = vmatprep.subr.mxu0 0.0
        %1508 = vmatpush1.msra.mxu0 0.0
        %1509 = vmatprep.subr.mxu0 0.0
        %1510 = vmatpush1.msra.mxu0 0.0
        %1511 = vmatprep.subr.mxu0 0.0
        %1512 = vmatpush1.msra.mxu0 0.0
        %1513 = vmatprep.subr.mxu0 0.0
        %1514 = vmatpush1.msra.mxu0 0.0
        %1515 = vmatprep.subr.mxu0 0.0
        %1516 = vmatpush1.msra.mxu0 0.0
        %1517 = vmatprep.subr.mxu0 0.0
        %1518 = vmatpush1.msra.mxu0 0.0
        %1519 = vmatprep.subr.mxu0 0.0
        %1520 = vmatpush1.msra.mxu0 0.0
        %1521 = vmatprep.subr.mxu0 0.0
        %1522 = vmatpush1.msra.mxu0 0.0
        %1523 = vmatprep.subr.mxu0 0.0
        %1524 = vmatpush1.msra.mxu0 0.0
        %1525 = vmatprep.subr.mxu0 0.0
        %1526 = vmatpush1.msra.mxu0 0.0
        %1527 = vmatprep.subr.mxu0 0.0
        %1528 = vmatpush1.msra.mxu0 0.0
        %1529 = vmatprep.subr.mxu0 0.0
        %1530 = vmatpush1.msra.mxu0 0.0
        %1531 = vmatprep.subr.mxu0 0.0
        %1532 = vmatpush1.msra.mxu0 0.0
        %1533 = vmatprep.subr.mxu0 0.0
        %1534 = vmatpush1.msra.mxu0 0.0
        %1535 = vmatprep.subr.mxu0 0.0
        %1536 = vmatpush1.msra.mxu0 0.0
        %1537 = vmatprep.subr.mxu0 0.0
        %1538 = vmatpush1.msra.mxu0 0.0
        %1539 = vmatprep.subr.mxu0 0.0
        %1540 = vmatpush1.msra.mxu0 0.0
        %1541 = vmatprep.subr.mxu0 0.0
        %1542 = vmatpush1.msra.mxu0 0.0
        %1543 = vmatprep.subr.mxu0 0.0
        %1544 = vmatpush1.msra.mxu0 0.0
        %1545 = vmatprep.subr.mxu0 0.0
        %1546 = vmatpush1.msra.mxu0 0.0
        %1547 = vmatprep.subr.mxu0 0.0
        %1548 = vmatpush1.msra.mxu0 0.0
        %1549 = vmatprep.subr.mxu0 0.0
        %1550 = vmatpush1.msra.mxu0 0.0
        %1551 = vmatprep.subr.mxu0 0.0
        %1552 = vmatpush1.msra.mxu0 0.0
        %1553 = vmatprep.subr.mxu0 0.0
        %1554 = vmatpush1.msra.mxu0 0.0
        %1555 = vmatprep.mubr.f32.mxu0 0.0
        %v1556 = vand.u32 %v446, 4294901760
        %v1557 = vsub.f32 %v446, %v1556
        %v1558 = vand.u32 %v1557, 4294901760
        %v1559 = vsub.f32 %v1557, %v1558
        %v1560 = vand.u32 %v1559, 4294901760
        %1561 = vmatmul.mubr.f32.gmra.mrb[0].mxu0 %v1560
        %v1562 = vpop.f32.mrb[0].mxu0
        %v1563 = vadd.f32 %v1463, %v1562
        %v1564 = vpop.f32.mrb[0].mxu0
        %1565 = vmatprep.mubr.f32.mxu0 0.0
        %v1566 = vand.u32 %v449, 4294901760
        %v1567 = vsub.f32 %v449, %v1566
        %v1568 = vand.u32 %v1567, 4294901760
        %v1569 = vsub.f32 %v1567, %v1568
        %v1570 = vand.u32 %v1569, 4294901760
        %1571 = vmatmul.mubr.f32.gmra.mrb[0].mxu0 %v1570
        %v1572 = vpop.f32.mrb[0].mxu0
        %v1573 = vadd.f32 %v1470, %v1572
        %v1574 = vpop.f32.mrb[0].mxu0
        %1575 = vmatprep.mubr.f32.mxu0 0.0
        %v1576 = vand.u32 %v452, 4294901760
        %v1577 = vsub.f32 %v452, %v1576
        %v1578 = vand.u32 %v1577, 4294901760
        %v1579 = vsub.f32 %v1577, %v1578
        %v1580 = vand.u32 %v1579, 4294901760
        %1581 = vmatmul.mubr.f32.gmra.mrb[0].mxu0 %v1580
        %v1582 = vpop.f32.mrb[0].mxu0
        %v1583 = vadd.f32 %v1477, %v1582
        %v1584 = vpop.f32.mrb[0].mxu0
        %1585 = vmatprep.mubr.f32.mxu0 0.0
        %v1586 = vand.u32 %v455, 4294901760
        %v1587 = vsub.f32 %v455, %v1586
        %v1588 = vand.u32 %v1587, 4294901760
        %v1589 = vsub.f32 %v1587, %v1588
        %v1590 = vand.u32 %v1589, 4294901760
        %1591 = vmatmul.mubr.f32.gmra.mrb[0].mxu0 %v1590
        %v1592 = vpop.f32.mrb[0].mxu0
        %v1593 = vadd.f32 %v1484, %v1592
        %v1594 = vpop.f32.mrb[0].mxu0
        %1595 = vdwg.mxu0
        %1596 = vmatprep.subr.mxu0 0.0
        %v1597 = vand.u32 %v401, 4294901760
        %v1598 = vsub.f32 %v401, %v1597
        %v1599 = vand.u32 %v1598, 4294901760
        %v1600 = vsub.f32 %v1598, %v1599
        %v1601 = vand.u32 %v1600, 4294901760
        %1602 = vmatpush1.msra.mxu0 %v1601
        %1603 = vmatprep.subr.mxu0 0.0
        %v1604 = vand.u32 %v403, 4294901760
        %v1605 = vsub.f32 %v403, %v1604
        %v1606 = vand.u32 %v1605, 4294901760
        %v1607 = vsub.f32 %v1605, %v1606
        %v1608 = vand.u32 %v1607, 4294901760
        %1609 = vmatpush1.msra.mxu0 %v1608
        %1610 = vmatprep.subr.mxu0 0.0
        %v1611 = vand.u32 %v405, 4294901760
        %v1612 = vsub.f32 %v405, %v1611
        %v1613 = vand.u32 %v1612, 4294901760
        %v1614 = vsub.f32 %v1612, %v1613
        %v1615 = vand.u32 %v1614, 4294901760
        %1616 = vmatpush1.msra.mxu0 %v1615
        %1617 = vmatprep.subr.mxu0 0.0
        %v1618 = vand.u32 %v407, 4294901760
        %v1619 = vsub.f32 %v407, %v1618
        %v1620 = vand.u32 %v1619, 4294901760
        %v1621 = vsub.f32 %v1619, %v1620
        %v1622 = vand.u32 %v1621, 4294901760
        %1623 = vmatpush1.msra.mxu0 %v1622
        %1624 = vmatprep.subr.mxu0 0.0
        %1625 = vmatpush1.msra.mxu0 0.0
        %1626 = vmatprep.subr.mxu0 0.0
        %1627 = vmatpush1.msra.mxu0 0.0
        %1628 = vmatprep.subr.mxu0 0.0
        %1629 = vmatpush1.msra.mxu0 0.0
        %1630 = vmatprep.subr.mxu0 0.0
        %1631 = vmatpush1.msra.mxu0 0.0
        %1632 = vmatprep.subr.mxu0 0.0
        %1633 = vmatpush1.msra.mxu0 0.0
        %1634 = vmatprep.subr.mxu0 0.0
        %1635 = vmatpush1.msra.mxu0 0.0
        %1636 = vmatprep.subr.mxu0 0.0
        %1637 = vmatpush1.msra.mxu0 0.0
        %1638 = vmatprep.subr.mxu0 0.0
        %1639 = vmatpush1.msra.mxu0 0.0
        %1640 = vmatprep.subr.mxu0 0.0
        %1641 = vmatpush1.msra.mxu0 0.0
        %1642 = vmatprep.subr.mxu0 0.0
        %1643 = vmatpush1.msra.mxu0 0.0
        %1644 = vmatprep.subr.mxu0 0.0
        %1645 = vmatpush1.msra.mxu0 0.0
        %1646 = vmatprep.subr.mxu0 0.0
        %1647 = vmatpush1.msra.mxu0 0.0
        %1648 = vmatprep.subr.mxu0 0.0
        %1649 = vmatpush1.msra.mxu0 0.0
        %1650 = vmatprep.subr.mxu0 0.0
        %1651 = vmatpush1.msra.mxu0 0.0
        %1652 = vmatprep.subr.mxu0 0.0
        %1653 = vmatpush1.msra.mxu0 0.0
        %1654 = vmatprep.subr.mxu0 0.0
        %1655 = vmatpush1.msra.mxu0 0.0
        %1656 = vmatprep.subr.mxu0 0.0
        %1657 = vmatpush1.msra.mxu0 0.0
        %1658 = vmatprep.subr.mxu0 0.0
        %1659 = vmatpush1.msra.mxu0 0.0
        %1660 = vmatprep.subr.mxu0 0.0
        %1661 = vmatpush1.msra.mxu0 0.0
        %1662 = vmatprep.subr.mxu0 0.0
        %1663 = vmatpush1.msra.mxu0 0.0
        %1664 = vmatprep.subr.mxu0 0.0
        %1665 = vmatpush1.msra.mxu0 0.0
        %1666 = vmatprep.subr.mxu0 0.0
        %1667 = vmatpush1.msra.mxu0 0.0
        %1668 = vmatprep.subr.mxu0 0.0
        %1669 = vmatpush1.msra.mxu0 0.0
        %1670 = vmatprep.subr.mxu0 0.0
        %1671 = vmatpush1.msra.mxu0 0.0
        %1672 = vmatprep.subr.mxu0 0.0
        %1673 = vmatpush1.msra.mxu0 0.0
        %1674 = vmatprep.subr.mxu0 0.0
        %1675 = vmatpush1.msra.mxu0 0.0
        %1676 = vmatprep.subr.mxu0 0.0
        %1677 = vmatpush1.msra.mxu0 0.0
        %1678 = vmatprep.subr.mxu0 0.0
        %1679 = vmatpush1.msra.mxu0 0.0
        %1680 = vmatprep.mubr.f32.mxu0 0.0
        %v1681 = vand.u32 %v446, 4294901760
        %1682 = vmatmul.mubr.f32.gmra.mrb[0].mxu0 %v1681
        %v1683 = vpop.f32.mrb[0].mxu0
        %v1684 = vadd.f32 %v1563, %v1683
        %v1685 = vpop.f32.mrb[0].mxu0
        %1686 = vmatprep.mubr.f32.mxu0 0.0
        %v1687 = vand.u32 %v449, 4294901760
        %1688 = vmatmul.mubr.f32.gmra.mrb[0].mxu0 %v1687
        %v1689 = vpop.f32.mrb[0].mxu0
        %v1690 = vadd.f32 %v1573, %v1689
        %v1691 = vpop.f32.mrb[0].mxu0
        %1692 = vmatprep.mubr.f32.mxu0 0.0
        %v1693 = vand.u32 %v452, 4294901760
        %1694 = vmatmul.mubr.f32.gmra.mrb[0].mxu0 %v1693
        %v1695 = vpop.f32.mrb[0].mxu0
        %v1696 = vadd.f32 %v1583, %v1695
        %v1697 = vpop.f32.mrb[0].mxu0
        %1698 = vmatprep.mubr.f32.mxu0 0.0
        %v1699 = vand.u32 %v455, 4294901760
        %1700 = vmatmul.mubr.f32.gmra.mrb[0].mxu0 %v1699
        %v1701 = vpop.f32.mrb[0].mxu0
        %v1702 = vadd.f32 %v1593, %v1701
        %v1703 = vpop.f32.mrb[0].mxu0
        %1704 = vdwg.mxu0
        %1705 = vmatprep.subr.mxu0 0.0
        %v1706 = vand.u32 %v401, 4294901760
        %v1707 = vsub.f32 %v401, %v1706
        %1708 = vmatpush1.msra.mxu0 %v1707
        %1709 = vmatprep.subr.mxu0 0.0
        %v1710 = vand.u32 %v403, 4294901760
        %v1711 = vsub.f32 %v403, %v1710
        %1712 = vmatpush1.msra.mxu0 %v1711
        %1713 = vmatprep.subr.mxu0 0.0
        %v1714 = vand.u32 %v405, 4294901760
        %v1715 = vsub.f32 %v405, %v1714
        %1716 = vmatpush1.msra.mxu0 %v1715
        %1717 = vmatprep.subr.mxu0 0.0
        %v1718 = vand.u32 %v407, 4294901760
        %v1719 = vsub.f32 %v407, %v1718
        %1720 = vmatpush1.msra.mxu0 %v1719
        %1721 = vmatprep.subr.mxu0 0.0
        %1722 = vmatpush1.msra.mxu0 0.0
        %1723 = vmatprep.subr.mxu0 0.0
        %1724 = vmatpush1.msra.mxu0 0.0
        %1725 = vmatprep.subr.mxu0 0.0
        %1726 = vmatpush1.msra.mxu0 0.0
        %1727 = vmatprep.subr.mxu0 0.0
        %1728 = vmatpush1.msra.mxu0 0.0
        %1729 = vmatprep.subr.mxu0 0.0
        %1730 = vmatpush1.msra.mxu0 0.0
        %1731 = vmatprep.subr.mxu0 0.0
        %1732 = vmatpush1.msra.mxu0 0.0
        %1733 = vmatprep.subr.mxu0 0.0
        %1734 = vmatpush1.msra.mxu0 0.0
        %1735 = vmatprep.subr.mxu0 0.0
        %1736 = vmatpush1.msra.mxu0 0.0
        %1737 = vmatprep.subr.mxu0 0.0
        %1738 = vmatpush1.msra.mxu0 0.0
        %1739 = vmatprep.subr.mxu0 0.0
        %1740 = vmatpush1.msra.mxu0 0.0
        %1741 = vmatprep.subr.mxu0 0.0
        %1742 = vmatpush1.msra.mxu0 0.0
        %1743 = vmatprep.subr.mxu0 0.0
        %1744 = vmatpush1.msra.mxu0 0.0
        %1745 = vmatprep.subr.mxu0 0.0
        %1746 = vmatpush1.msra.mxu0 0.0
        %1747 = vmatprep.subr.mxu0 0.0
        %1748 = vmatpush1.msra.mxu0 0.0
        %1749 = vmatprep.subr.mxu0 0.0
        %1750 = vmatpush1.msra.mxu0 0.0
        %1751 = vmatprep.subr.mxu0 0.0
        %1752 = vmatpush1.msra.mxu0 0.0
        %1753 = vmatprep.subr.mxu0 0.0
        %1754 = vmatpush1.msra.mxu0 0.0
        %1755 = vmatprep.subr.mxu0 0.0
        %1756 = vmatpush1.msra.mxu0 0.0
        %1757 = vmatprep.subr.mxu0 0.0
        %1758 = vmatpush1.msra.mxu0 0.0
        %1759 = vmatprep.subr.mxu0 0.0
        %1760 = vmatpush1.msra.mxu0 0.0
        %1761 = vmatprep.subr.mxu0 0.0
        %1762 = vmatpush1.msra.mxu0 0.0
        %1763 = vmatprep.subr.mxu0 0.0
        %1764 = vmatpush1.msra.mxu0 0.0
        %1765 = vmatprep.subr.mxu0 0.0
        %1766 = vmatpush1.msra.mxu0 0.0
        %1767 = vmatprep.subr.mxu0 0.0
        %1768 = vmatpush1.msra.mxu0 0.0
        %1769 = vmatprep.subr.mxu0 0.0
        %1770 = vmatpush1.msra.mxu0 0.0
        %1771 = vmatprep.subr.mxu0 0.0
        %1772 = vmatpush1.msra.mxu0 0.0
        %1773 = vmatprep.subr.mxu0 0.0
        %1774 = vmatpush1.msra.mxu0 0.0
        %1775 = vmatprep.subr.mxu0 0.0
        %1776 = vmatpush1.msra.mxu0 0.0
        %1777 = vmatprep.mubr.f32.mxu0 0.0
        %v1778 = vand.u32 %v446, 4294901760
        %v1779 = vsub.f32 %v446, %v1778
        %1780 = vmatmul.mubr.f32.gmra.mrb[0].mxu0 %v1779
        %v1781 = vpop.f32.mrb[0].mxu0
        %v1782 = vadd.f32 %v1684, %v1781
        %v1783 = vpop.f32.mrb[0].mxu0
        %1784 = vmatprep.mubr.f32.mxu0 0.0
        %v1785 = vand.u32 %v449, 4294901760
        %v1786 = vsub.f32 %v449, %v1785
        %1787 = vmatmul.mubr.f32.gmra.mrb[0].mxu0 %v1786
        %v1788 = vpop.f32.mrb[0].mxu0
        %v1789 = vadd.f32 %v1690, %v1788
        %v1790 = vpop.f32.mrb[0].mxu0
        %1791 = vmatprep.mubr.f32.mxu0 0.0
        %v1792 = vand.u32 %v452, 4294901760
        %v1793 = vsub.f32 %v452, %v1792
        %1794 = vmatmul.mubr.f32.gmra.mrb[0].mxu0 %v1793
        %v1795 = vpop.f32.mrb[0].mxu0
        %v1796 = vadd.f32 %v1696, %v1795
        %v1797 = vpop.f32.mrb[0].mxu0
        %1798 = vmatprep.mubr.f32.mxu0 0.0
        %v1799 = vand.u32 %v455, 4294901760
        %v1800 = vsub.f32 %v455, %v1799
        %1801 = vmatmul.mubr.f32.gmra.mrb[0].mxu0 %v1800
        %v1802 = vpop.f32.mrb[0].mxu0
        %v1803 = vadd.f32 %v1702, %v1802
        %v1804 = vpop.f32.mrb[0].mxu0
        %1805 = vdwg.mxu0
        %1806 = vmatprep.subr.mxu0 0.0
        %v1807 = vand.u32 %v401, 4294901760
        %1808 = vmatpush1.msra.mxu0 %v1807
        %1809 = vmatprep.subr.mxu0 0.0
        %v1810 = vand.u32 %v403, 4294901760
        %1811 = vmatpush1.msra.mxu0 %v1810
        %1812 = vmatprep.subr.mxu0 0.0
        %v1813 = vand.u32 %v405, 4294901760
        %1814 = vmatpush1.msra.mxu0 %v1813
        %1815 = vmatprep.subr.mxu0 0.0
        %v1816 = vand.u32 %v407, 4294901760
        %1817 = vmatpush1.msra.mxu0 %v1816
        %1818 = vmatprep.subr.mxu0 0.0
        %1819 = vmatpush1.msra.mxu0 0.0
        %1820 = vmatprep.subr.mxu0 0.0
        %1821 = vmatpush1.msra.mxu0 0.0
        %1822 = vmatprep.subr.mxu0 0.0
        %1823 = vmatpush1.msra.mxu0 0.0
        %1824 = vmatprep.subr.mxu0 0.0
        %1825 = vmatpush1.msra.mxu0 0.0
        %1826 = vmatprep.subr.mxu0 0.0
        %1827 = vmatpush1.msra.mxu0 0.0
        %1828 = vmatprep.subr.mxu0 0.0
        %1829 = vmatpush1.msra.mxu0 0.0
        %1830 = vmatprep.subr.mxu0 0.0
        %1831 = vmatpush1.msra.mxu0 0.0
        %1832 = vmatprep.subr.mxu0 0.0
        %1833 = vmatpush1.msra.mxu0 0.0
        %1834 = vmatprep.subr.mxu0 0.0
        %1835 = vmatpush1.msra.mxu0 0.0
        %1836 = vmatprep.subr.mxu0 0.0
        %1837 = vmatpush1.msra.mxu0 0.0
        %1838 = vmatprep.subr.mxu0 0.0
        %1839 = vmatpush1.msra.mxu0 0.0
        %1840 = vmatprep.subr.mxu0 0.0
        %1841 = vmatpush1.msra.mxu0 0.0
        %1842 = vmatprep.subr.mxu0 0.0
        %1843 = vmatpush1.msra.mxu0 0.0
        %1844 = vmatprep.subr.mxu0 0.0
        %1845 = vmatpush1.msra.mxu0 0.0
        %1846 = vmatprep.subr.mxu0 0.0
        %1847 = vmatpush1.msra.mxu0 0.0
        %1848 = vmatprep.subr.mxu0 0.0
        %1849 = vmatpush1.msra.mxu0 0.0
        %1850 = vmatprep.subr.mxu0 0.0
        %1851 = vmatpush1.msra.mxu0 0.0
        %1852 = vmatprep.subr.mxu0 0.0
        %1853 = vmatpush1.msra.mxu0 0.0
        %1854 = vmatprep.subr.mxu0 0.0
        %1855 = vmatpush1.msra.mxu0 0.0
        %1856 = vmatprep.subr.mxu0 0.0
        %1857 = vmatpush1.msra.mxu0 0.0
        %1858 = vmatprep.subr.mxu0 0.0
        %1859 = vmatpush1.msra.mxu0 0.0
        %1860 = vmatprep.subr.mxu0 0.0
        %1861 = vmatpush1.msra.mxu0 0.0
        %1862 = vmatprep.subr.mxu0 0.0
        %1863 = vmatpush1.msra.mxu0 0.0
        %1864 = vmatprep.subr.mxu0 0.0
        %1865 = vmatpush1.msra.mxu0 0.0
        %1866 = vmatprep.subr.mxu0 0.0
        %1867 = vmatpush1.msra.mxu0 0.0
        %1868 = vmatprep.subr.mxu0 0.0
        %1869 = vmatpush1.msra.mxu0 0.0
        %1870 = vmatprep.subr.mxu0 0.0
        %1871 = vmatpush1.msra.mxu0 0.0
        %1872 = vmatprep.subr.mxu0 0.0
        %1873 = vmatpush1.msra.mxu0 0.0
        %1874 = vmatprep.mubr.f32.mxu0 0.0
        %v1875 = vand.u32 %v446, 4294901760
        %v1876 = vsub.f32 %v446, %v1875
        %v1877 = vand.u32 %v1876, 4294901760
        %1878 = vmatmul.mubr.f32.gmra.mrb[0].mxu0 %v1877
        %v1879 = vpop.f32.mrb[0].mxu0
        %v1880 = vadd.f32 %v1782, %v1879
        %v1881 = vpop.f32.mrb[0].mxu0
        %1882 = vmatprep.mubr.f32.mxu0 0.0
        %v1883 = vand.u32 %v449, 4294901760
        %v1884 = vsub.f32 %v449, %v1883
        %v1885 = vand.u32 %v1884, 4294901760
        %1886 = vmatmul.mubr.f32.gmra.mrb[0].mxu0 %v1885
        %v1887 = vpop.f32.mrb[0].mxu0
        %v1888 = vadd.f32 %v1789, %v1887
        %v1889 = vpop.f32.mrb[0].mxu0
        %1890 = vmatprep.mubr.f32.mxu0 0.0
        %v1891 = vand.u32 %v452, 4294901760
        %v1892 = vsub.f32 %v452, %v1891
        %v1893 = vand.u32 %v1892, 4294901760
        %1894 = vmatmul.mubr.f32.gmra.mrb[0].mxu0 %v1893
        %v1895 = vpop.f32.mrb[0].mxu0
        %v1896 = vadd.f32 %v1796, %v1895
        %v1897 = vpop.f32.mrb[0].mxu0
        %1898 = vmatprep.mubr.f32.mxu0 0.0
        %v1899 = vand.u32 %v455, 4294901760
        %v1900 = vsub.f32 %v455, %v1899
        %v1901 = vand.u32 %v1900, 4294901760
        %1902 = vmatmul.mubr.f32.gmra.mrb[0].mxu0 %v1901
        %v1903 = vpop.f32.mrb[0].mxu0
        %v1904 = vadd.f32 %v1803, %v1903
        %v1905 = vpop.f32.mrb[0].mxu0
        %1906 = vdwg.mxu0
        %1907 = vmatprep.subr.mxu0 0.0
        %v1908 = vand.u32 %v401, 4294901760
        %v1909 = vsub.f32 %v401, %v1908
        %v1910 = vand.u32 %v1909, 4294901760
        %1911 = vmatpush1.msra.mxu0 %v1910
        %1912 = vmatprep.subr.mxu0 0.0
        %v1913 = vand.u32 %v403, 4294901760
        %v1914 = vsub.f32 %v403, %v1913
        %v1915 = vand.u32 %v1914, 4294901760
        %1916 = vmatpush1.msra.mxu0 %v1915
        %1917 = vmatprep.subr.mxu0 0.0
        %v1918 = vand.u32 %v405, 4294901760
        %v1919 = vsub.f32 %v405, %v1918
        %v1920 = vand.u32 %v1919, 4294901760
        %1921 = vmatpush1.msra.mxu0 %v1920
        %1922 = vmatprep.subr.mxu0 0.0
        %v1923 = vand.u32 %v407, 4294901760
        %v1924 = vsub.f32 %v407, %v1923
        %v1925 = vand.u32 %v1924, 4294901760
        %1926 = vmatpush1.msra.mxu0 %v1925
        %1927 = vmatprep.subr.mxu0 0.0
        %1928 = vmatpush1.msra.mxu0 0.0
        %1929 = vmatprep.subr.mxu0 0.0
        %1930 = vmatpush1.msra.mxu0 0.0
        %1931 = vmatprep.subr.mxu0 0.0
        %1932 = vmatpush1.msra.mxu0 0.0
        %1933 = vmatprep.subr.mxu0 0.0
        %1934 = vmatpush1.msra.mxu0 0.0
        %1935 = vmatprep.subr.mxu0 0.0
        %1936 = vmatpush1.msra.mxu0 0.0
        %1937 = vmatprep.subr.mxu0 0.0
        %1938 = vmatpush1.msra.mxu0 0.0
        %1939 = vmatprep.subr.mxu0 0.0
        %1940 = vmatpush1.msra.mxu0 0.0
        %1941 = vmatprep.subr.mxu0 0.0
        %1942 = vmatpush1.msra.mxu0 0.0
        %1943 = vmatprep.subr.mxu0 0.0
        %1944 = vmatpush1.msra.mxu0 0.0
        %1945 = vmatprep.subr.mxu0 0.0
        %1946 = vmatpush1.msra.mxu0 0.0
        %1947 = vmatprep.subr.mxu0 0.0
        %1948 = vmatpush1.msra.mxu0 0.0
        %1949 = vmatprep.subr.mxu0 0.0
        %1950 = vmatpush1.msra.mxu0 0.0
        %1951 = vmatprep.subr.mxu0 0.0
        %1952 = vmatpush1.msra.mxu0 0.0
        %1953 = vmatprep.subr.mxu0 0.0
        %1954 = vmatpush1.msra.mxu0 0.0
        %1955 = vmatprep.subr.mxu0 0.0
        %1956 = vmatpush1.msra.mxu0 0.0
        %1957 = vmatprep.subr.mxu0 0.0
        %1958 = vmatpush1.msra.mxu0 0.0
        %1959 = vmatprep.subr.mxu0 0.0
        %1960 = vmatpush1.msra.mxu0 0.0
        %1961 = vmatprep.subr.mxu0 0.0
        %1962 = vmatpush1.msra.mxu0 0.0
        %1963 = vmatprep.subr.mxu0 0.0
        %1964 = vmatpush1.msra.mxu0 0.0
        %1965 = vmatprep.subr.mxu0 0.0
        %1966 = vmatpush1.msra.mxu0 0.0
        %1967 = vmatprep.subr.mxu0 0.0
        %1968 = vmatpush1.msra.mxu0 0.0
        %1969 = vmatprep.subr.mxu0 0.0
        %1970 = vmatpush1.msra.mxu0 0.0
        %1971 = vmatprep.subr.mxu0 0.0
        %1972 = vmatpush1.msra.mxu0 0.0
        %1973 = vmatprep.subr.mxu0 0.0
        %1974 = vmatpush1.msra.mxu0 0.0
        %1975 = vmatprep.subr.mxu0 0.0
        %1976 = vmatpush1.msra.mxu0 0.0
        %1977 = vmatprep.subr.mxu0 0.0
        %1978 = vmatpush1.msra.mxu0 0.0
        %1979 = vmatprep.subr.mxu0 0.0
        %1980 = vmatpush1.msra.mxu0 0.0
        %1981 = vmatprep.subr.mxu0 0.0
        %1982 = vmatpush1.msra.mxu0 0.0
        %1983 = vmatprep.mubr.f32.mxu0 0.0
        %v1984 = vand.u32 %v446, 4294901760
        %1985 = vmatmul.mubr.f32.gmra.mrb[0].mxu0 %v1984
        %v1986 = vpop.f32.mrb[0].mxu0
        %v1987 = vadd.f32 %v1880, %v1986
        %v1988 = vpop.f32.mrb[0].mxu0
        %1989 = vmatprep.mubr.f32.mxu0 0.0
        %v1990 = vand.u32 %v449, 4294901760
        %1991 = vmatmul.mubr.f32.gmra.mrb[0].mxu0 %v1990
        %v1992 = vpop.f32.mrb[0].mxu0
        %v1993 = vadd.f32 %v1888, %v1992
        %v1994 = vpop.f32.mrb[0].mxu0
        %1995 = vmatprep.mubr.f32.mxu0 0.0
        %v1996 = vand.u32 %v452, 4294901760
        %1997 = vmatmul.mubr.f32.gmra.mrb[0].mxu0 %v1996
        %v1998 = vpop.f32.mrb[0].mxu0
        %v1999 = vadd.f32 %v1896, %v1998
        %v2000 = vpop.f32.mrb[0].mxu0
        %2001 = vmatprep.mubr.f32.mxu0 0.0
        %v2002 = vand.u32 %v455, 4294901760
        %2003 = vmatmul.mubr.f32.gmra.mrb[0].mxu0 %v2002
        %v2004 = vpop.f32.mrb[0].mxu0
        %v2005 = vadd.f32 %v1904, %v2004
        %v2006 = vpop.f32.mrb[0].mxu0
        %2007 = vdwg.mxu0
        %2008 = vmatprep.subr.mxu0 0.0
        %v2009 = vand.u32 %v401, 4294901760
        %2010 = vmatpush1.msra.mxu0 %v2009
        %2011 = vmatprep.subr.mxu0 0.0
        %v2012 = vand.u32 %v403, 4294901760
        %2013 = vmatpush1.msra.mxu0 %v2012
        %2014 = vmatprep.subr.mxu0 0.0
        %v2015 = vand.u32 %v405, 4294901760
        %2016 = vmatpush1.msra.mxu0 %v2015
        %2017 = vmatprep.subr.mxu0 0.0
        %v2018 = vand.u32 %v407, 4294901760
        %2019 = vmatpush1.msra.mxu0 %v2018
        %2020 = vmatprep.subr.mxu0 0.0
        %2021 = vmatpush1.msra.mxu0 0.0
        %2022 = vmatprep.subr.mxu0 0.0
        %2023 = vmatpush1.msra.mxu0 0.0
        %2024 = vmatprep.subr.mxu0 0.0
        %2025 = vmatpush1.msra.mxu0 0.0
        %2026 = vmatprep.subr.mxu0 0.0
        %2027 = vmatpush1.msra.mxu0 0.0
        %2028 = vmatprep.subr.mxu0 0.0
        %2029 = vmatpush1.msra.mxu0 0.0
        %2030 = vmatprep.subr.mxu0 0.0
        %2031 = vmatpush1.msra.mxu0 0.0
        %2032 = vmatprep.subr.mxu0 0.0
        %2033 = vmatpush1.msra.mxu0 0.0
        %2034 = vmatprep.subr.mxu0 0.0
        %2035 = vmatpush1.msra.mxu0 0.0
        %2036 = vmatprep.subr.mxu0 0.0
        %2037 = vmatpush1.msra.mxu0 0.0
        %2038 = vmatprep.subr.mxu0 0.0
        %2039 = vmatpush1.msra.mxu0 0.0
        %2040 = vmatprep.subr.mxu0 0.0
        %2041 = vmatpush1.msra.mxu0 0.0
        %2042 = vmatprep.subr.mxu0 0.0
        %2043 = vmatpush1.msra.mxu0 0.0
        %2044 = vmatprep.subr.mxu0 0.0
        %2045 = vmatpush1.msra.mxu0 0.0
        %2046 = vmatprep.subr.mxu0 0.0
        %2047 = vmatpush1.msra.mxu0 0.0
        %2048 = vmatprep.subr.mxu0 0.0
        %2049 = vmatpush1.msra.mxu0 0.0
        %2050 = vmatprep.subr.mxu0 0.0
        %2051 = vmatpush1.msra.mxu0 0.0
        %2052 = vmatprep.subr.mxu0 0.0
        %2053 = vmatpush1.msra.mxu0 0.0
        %2054 = vmatprep.subr.mxu0 0.0
        %2055 = vmatpush1.msra.mxu0 0.0
        %2056 = vmatprep.subr.mxu0 0.0
        %2057 = vmatpush1.msra.mxu0 0.0
        %2058 = vmatprep.subr.mxu0 0.0
        %2059 = vmatpush1.msra.mxu0 0.0
        %2060 = vmatprep.subr.mxu0 0.0
        %2061 = vmatpush1.msra.mxu0 0.0
        %2062 = vmatprep.subr.mxu0 0.0
        %2063 = vmatpush1.msra.mxu0 0.0
        %2064 = vmatprep.subr.mxu0 0.0
        %2065 = vmatpush1.msra.mxu0 0.0
        %2066 = vmatprep.subr.mxu0 0.0
        %2067 = vmatpush1.msra.mxu0 0.0
        %2068 = vmatprep.subr.mxu0 0.0
        %2069 = vmatpush1.msra.mxu0 0.0
        %2070 = vmatprep.subr.mxu0 0.0
        %2071 = vmatpush1.msra.mxu0 0.0
        %2072 = vmatprep.subr.mxu0 0.0
        %2073 = vmatpush1.msra.mxu0 0.0
        %2074 = vmatprep.subr.mxu0 0.0
        %2075 = vmatpush1.msra.mxu0 0.0
        %2076 = vmatprep.mubr.f32.mxu0 0.0
        %v2077 = vand.u32 %v446, 4294901760
        %2078 = vmatmul.mubr.f32.gmra.mrb[0].mxu0 %v2077
        %v2079 = vpop.f32.mrb[0].mxu0
        %v2080 = vadd.f32 %v1987, %v2079
        %v2081 = vpop.f32.mrb[0].mxu0
        %2082 = vmatprep.mubr.f32.mxu0 0.0
        %v2083 = vand.u32 %v449, 4294901760
        %2084 = vmatmul.mubr.f32.gmra.mrb[0].mxu0 %v2083
        %v2085 = vpop.f32.mrb[0].mxu0
        %v2086 = vadd.f32 %v1993, %v2085
        %v2087 = vpop.f32.mrb[0].mxu0
        %2088 = vmatprep.mubr.f32.mxu0 0.0
        %v2089 = vand.u32 %v452, 4294901760
        %2090 = vmatmul.mubr.f32.gmra.mrb[0].mxu0 %v2089
        %v2091 = vpop.f32.mrb[0].mxu0
        %v2092 = vadd.f32 %v1999, %v2091
        %v2093 = vpop.f32.mrb[0].mxu0
        %2094 = vmatprep.mubr.f32.mxu0 0.0
        %v2095 = vand.u32 %v455, 4294901760
        %2096 = vmatmul.mubr.f32.gmra.mrb[0].mxu0 %v2095
        %v2097 = vpop.f32.mrb[0].mxu0
        %v2098 = vadd.f32 %v2005, %v2097
        %v2099 = vpop.f32.mrb[0].mxu0
        %2100 = vdwg.mxu0
        %v2101 = vmax.f32 %v2080, 0.0
        %v2102 = vmax.f32 %v2086, 0.0
        %v2103 = vmax.f32 %v2092, 0.0
        %v2104 = vmax.f32 %v2098, 0.0
        %v2106 = vlaneseq
        %v2107 = vshrl.u32 %v2106, 7
        %v2108 = vsub.s32 0, %v2107
        %v2109 = vrot.slane %v339, %v2108
        %v2111 = vmul.f32 %v2101, %v2109
        %v2112 = vmul.f32 %v2102, %v2109
        %v2113 = vmul.f32 %v2103, %v2109
        %v2114 = vmul.f32 %v2104, %v2109
        %2115 = vrot.lane.b32.xlu0 %v2111, 11
        %v2116 = vpop.permute.xlu0 %2115
        %2117 = vrot.lane.b32.xlu0 %v2112, 11
        %v2118 = vpop.permute.xlu0 %2117
        %2119 = vrot.lane.b32.xlu0 %v2113, 11
        %v2120 = vpop.permute.xlu0 %2119
        %2121 = vrot.lane.b32.xlu0 %v2114, 11
        %v2122 = vpop.permute.xlu0 %2121
        %2123 = vrot.lane.b32.xlu0 %v2111, 10
        %v2124 = vpop.permute.xlu0 %2123
        %2125 = vrot.lane.b32.xlu0 %v2112, 10
        %v2126 = vpop.permute.xlu0 %2125
        %2127 = vrot.lane.b32.xlu0 %v2113, 10
        %v2128 = vpop.permute.xlu0 %2127
        %2129 = vrot.lane.b32.xlu0 %v2114, 10
        %v2130 = vpop.permute.xlu0 %2129
        %2131 = vrot.lane.b32.xlu0 %v2111, 9
        %v2132 = vpop.permute.xlu0 %2131
        %2133 = vrot.lane.b32.xlu0 %v2112, 9
        %v2134 = vpop.permute.xlu0 %2133
        %2135 = vrot.lane.b32.xlu0 %v2113, 9
        %v2136 = vpop.permute.xlu0 %2135
        %2137 = vrot.lane.b32.xlu0 %v2114, 9
        %v2138 = vpop.permute.xlu0 %2137
        %2139 = vrot.lane.b32.xlu0 %v2111, 1
        %v2140 = vpop.permute.xlu0 %2139
        %2141 = vrot.lane.b32.xlu0 %v2112, 1
        %v2142 = vpop.permute.xlu0 %2141
        %2143 = vrot.lane.b32.xlu0 %v2113, 1
        %v2144 = vpop.permute.xlu0 %2143
        %2145 = vrot.lane.b32.xlu0 %v2114, 1
        %v2146 = vpop.permute.xlu0 %2145
        %2147 = vrot.lane.b32.xlu0 %v2111, 127
        %v2148 = vpop.permute.xlu0 %2147
        %2149 = vrot.lane.b32.xlu0 %v2112, 127
        %v2150 = vpop.permute.xlu0 %2149
        %2151 = vrot.lane.b32.xlu0 %v2113, 127
        %v2152 = vpop.permute.xlu0 %2151
        %2153 = vrot.lane.b32.xlu0 %v2114, 127
        %v2154 = vpop.permute.xlu0 %2153
        %2155 = vrot.lane.b32.xlu0 %v2111, 119
        %v2156 = vpop.permute.xlu0 %2155
        %2157 = vrot.lane.b32.xlu0 %v2112, 119
        %v2158 = vpop.permute.xlu0 %2157
        %2159 = vrot.lane.b32.xlu0 %v2113, 119
        %v2160 = vpop.permute.xlu0 %2159
        %2161 = vrot.lane.b32.xlu0 %v2114, 119
        %v2162 = vpop.permute.xlu0 %2161
        %2163 = vrot.lane.b32.xlu0 %v2111, 118
        %v2164 = vpop.permute.xlu0 %2163
        %2165 = vrot.lane.b32.xlu0 %v2112, 118
        %v2166 = vpop.permute.xlu0 %2165
        %2167 = vrot.lane.b32.xlu0 %v2113, 118
        %v2168 = vpop.permute.xlu0 %2167
        %2169 = vrot.lane.b32.xlu0 %v2114, 118
        %v2170 = vpop.permute.xlu0 %2169
        %2171 = vrot.lane.b32.xlu0 %v2111, 117
        %v2172 = vpop.permute.xlu0 %2171
        %2173 = vrot.lane.b32.xlu0 %v2112, 117
        %v2174 = vpop.permute.xlu0 %2173
        %2175 = vrot.lane.b32.xlu0 %v2113, 117
        %v2176 = vpop.permute.xlu0 %2175
        %2177 = vrot.lane.b32.xlu0 %v2114, 117
        %v2178 = vpop.permute.xlu0 %2177
        %v2179 = vld [vmem:[#allocation5] sm:$0xff]
        %v2180 = vld [vmem:[#allocation5 + $0x8] sm:$0xff]
        %v2181 = vld [vmem:[#allocation5 + $0x10] sm:$0xff]
        %v2182 = vld [vmem:[#allocation5 + $0x18] sm:$0xff]
        %v2183 = vld [vmem:[#allocation5 + $0x20] sm:$0xff]
        %v2184 = vld [vmem:[#allocation5 + $0x28] sm:$0xff]
        %v2185 = vld [vmem:[#allocation5 + $0x30] sm:$0xff]
        %v2186 = vld [vmem:[#allocation5 + $0x38] sm:$0xff]
        %v2187 = vld [vmem:[#allocation5 + $0x40] sm:$0xff]
        %v2188 = vld [vmem:[#allocation5 + $0x48] sm:$0xff]
        %v2189 = vld [vmem:[#allocation5 + $0x50] sm:$0xff]
        %v2190 = vld [vmem:[#allocation5 + $0x58] sm:$0xff]
        %v2191 = vld [vmem:[%s4] sm:$0xff]
        %v2192 = vld [vmem:[%s4 + $0x8] sm:$0xff]
        %v2193 = vld [vmem:[%s4 + $0x10] sm:$0xff]
        %v2194 = vld [vmem:[%s4 + $0x18] sm:$0xff]
        %2196 = vset.pattern.permute.xlu0 0
        %2197 = vperm.xlu0 %2196, %v2191
        %v2198 = vpop.permute.xlu0 %2197
        %2201 = vset.pattern.permute.xlu0 0
        %2202 = vperm.xlu0 %2201, %v2192
        %v2203 = vpop.permute.xlu0 %2202
        %2206 = vset.pattern.permute.xlu0 0
        %2207 = vperm.xlu0 %2206, %v2193
        %v2208 = vpop.permute.xlu0 %2207
        %2211 = vset.pattern.permute.xlu0 0
        %2212 = vperm.xlu0 %2211, %v2194
        %v2213 = vpop.permute.xlu0 %2212
        %v2216 = vsel %vm444, %v2181, 0
        %v2219 = vsel %vm444, %v2184, 0
        %v2222 = vsel %vm444, %v2187, 0
        %v2225 = vsel %vm444, %v2190, 0
        %2227 = vmatprep.subr.mxu0 0.0
        %v2228 = vand.u32 %v2116, 4294901760
        %2229 = vmatpush1.msra.mxu0 %v2228
        %2230 = vmatprep.subr.mxu0 0.0
        %v2231 = vand.u32 %v2118, 4294901760
        %2232 = vmatpush1.msra.mxu0 %v2231
        %2233 = vmatprep.subr.mxu0 0.0
        %v2234 = vand.u32 %v2120, 4294901760
        %2235 = vmatpush1.msra.mxu0 %v2234
        %2236 = vmatprep.subr.mxu0 0.0
        %v2237 = vand.u32 %v2122, 4294901760
        %2238 = vmatpush1.msra.mxu0 %v2237
        %2239 = vmatprep.subr.mxu0 0.0
        %v2240 = vand.u32 %v2124, 4294901760
        %2241 = vmatpush1.msra.mxu0 %v2240
        %2242 = vmatprep.subr.mxu0 0.0
        %v2243 = vand.u32 %v2126, 4294901760
        %2244 = vmatpush1.msra.mxu0 %v2243
        %2245 = vmatprep.subr.mxu0 0.0
        %v2246 = vand.u32 %v2128, 4294901760
        %2247 = vmatpush1.msra.mxu0 %v2246
        %2248 = vmatprep.subr.mxu0 0.0
        %v2249 = vand.u32 %v2130, 4294901760
        %2250 = vmatpush1.msra.mxu0 %v2249
        %2251 = vmatprep.subr.mxu0 0.0
        %v2252 = vand.u32 %v2132, 4294901760
        %2253 = vmatpush1.msra.mxu0 %v2252
        %2254 = vmatprep.subr.mxu0 0.0
        %v2255 = vand.u32 %v2134, 4294901760
        %2256 = vmatpush1.msra.mxu0 %v2255
        %2257 = vmatprep.subr.mxu0 0.0
        %v2258 = vand.u32 %v2136, 4294901760
        %2259 = vmatpush1.msra.mxu0 %v2258
        %2260 = vmatprep.subr.mxu0 0.0
        %v2261 = vand.u32 %v2138, 4294901760
        %2262 = vmatpush1.msra.mxu0 %v2261
        %2263 = vmatprep.subr.mxu0 0.0
        %v2264 = vand.u32 %v2140, 4294901760
        %2265 = vmatpush1.msra.mxu0 %v2264
        %2266 = vmatprep.subr.mxu0 0.0
        %v2267 = vand.u32 %v2142, 4294901760
        %2268 = vmatpush1.msra.mxu0 %v2267
        %2269 = vmatprep.subr.mxu0 0.0
        %v2270 = vand.u32 %v2144, 4294901760
        %2271 = vmatpush1.msra.mxu0 %v2270
        %2272 = vmatprep.subr.mxu0 0.0
        %v2273 = vand.u32 %v2146, 4294901760
        %2274 = vmatpush1.msra.mxu0 %v2273
        %2275 = vmatprep.subr.mxu0 0.0
        %v2276 = vand.u32 %v2111, 4294901760
        %2277 = vmatpush1.msra.mxu0 %v2276
        %2278 = vmatprep.subr.mxu0 0.0
        %v2279 = vand.u32 %v2112, 4294901760
        %2280 = vmatpush1.msra.mxu0 %v2279
        %2281 = vmatprep.subr.mxu0 0.0
        %v2282 = vand.u32 %v2113, 4294901760
        %2283 = vmatpush1.msra.mxu0 %v2282
        %2284 = vmatprep.subr.mxu0 0.0
        %v2285 = vand.u32 %v2114, 4294901760
        %2286 = vmatpush1.msra.mxu0 %v2285
        %2287 = vmatprep.subr.mxu0 0.0
        %v2288 = vand.u32 %v2148, 4294901760
        %2289 = vmatpush1.msra.mxu0 %v2288
        %2290 = vmatprep.subr.mxu0 0.0
        %v2291 = vand.u32 %v2150, 4294901760
        %2292 = vmatpush1.msra.mxu0 %v2291
        %2293 = vmatprep.subr.mxu0 0.0
        %v2294 = vand.u32 %v2152, 4294901760
        %2295 = vmatpush1.msra.mxu0 %v2294
        %2296 = vmatprep.subr.mxu0 0.0
        %v2297 = vand.u32 %v2154, 4294901760
        %2298 = vmatpush1.msra.mxu0 %v2297
        %2299 = vmatprep.subr.mxu0 0.0
        %v2300 = vand.u32 %v2156, 4294901760
        %2301 = vmatpush1.msra.mxu0 %v2300
        %2302 = vmatprep.subr.mxu0 0.0
        %v2303 = vand.u32 %v2158, 4294901760
        %2304 = vmatpush1.msra.mxu0 %v2303
        %2305 = vmatprep.subr.mxu0 0.0
        %v2306 = vand.u32 %v2160, 4294901760
        %2307 = vmatpush1.msra.mxu0 %v2306
        %2308 = vmatprep.subr.mxu0 0.0
        %v2309 = vand.u32 %v2162, 4294901760
        %2310 = vmatpush1.msra.mxu0 %v2309
        %2311 = vmatprep.subr.mxu0 0.0
        %v2312 = vand.u32 %v2164, 4294901760
        %2313 = vmatpush1.msra.mxu0 %v2312
        %2314 = vmatprep.subr.mxu0 0.0
        %v2315 = vand.u32 %v2166, 4294901760
        %2316 = vmatpush1.msra.mxu0 %v2315
        %2317 = vmatprep.subr.mxu0 0.0
        %v2318 = vand.u32 %v2168, 4294901760
        %2319 = vmatpush1.msra.mxu0 %v2318
        %2320 = vmatprep.subr.mxu0 0.0
        %v2321 = vand.u32 %v2170, 4294901760
        %2322 = vmatpush1.msra.mxu0 %v2321
        %v2323 = vand.u32 %v2180, 4294901760
        %v2324 = vsub.f32 %v2180, %v2323
        %v2325 = vand.u32 %v2324, 4294901760
        %v2326 = vsub.f32 %v2324, %v2325
        %v2327 = vand.u32 %v2326, 4294901760
        %2328 = vmatprep.mubr.f32.mxu0 %v2327
        %v2329 = vand.u32 %v2179, 4294901760
        %v2330 = vsub.f32 %v2179, %v2329
        %v2331 = vand.u32 %v2330, 4294901760
        %v2332 = vsub.f32 %v2330, %v2331
        %v2333 = vand.u32 %v2332, 4294901760
        %2334 = vmatmul.mubr.f32.gmra.mrb[0].mxu0 %v2333
        %v2335 = vpop.f32.mrb[0].mxu0
        %v2336 = vadd.f32 %v2198, %v2335
        %v2337 = vpop.f32.mrb[0].mxu0
        %v2338 = vand.u32 %v2183, 4294901760
        %v2339 = vsub.f32 %v2183, %v2338
        %v2340 = vand.u32 %v2339, 4294901760
        %v2341 = vsub.f32 %v2339, %v2340
        %v2342 = vand.u32 %v2341, 4294901760
        %2343 = vmatprep.mubr.f32.mxu0 %v2342
        %v2344 = vand.u32 %v2182, 4294901760
        %v2345 = vsub.f32 %v2182, %v2344
        %v2346 = vand.u32 %v2345, 4294901760
        %v2347 = vsub.f32 %v2345, %v2346
        %v2348 = vand.u32 %v2347, 4294901760
        %2349 = vmatmul.mubr.f32.gmra.mrb[0].mxu0 %v2348
        %v2350 = vpop.f32.mrb[0].mxu0
        %v2351 = vadd.f32 %v2203, %v2350
        %v2352 = vpop.f32.mrb[0].mxu0
        %v2353 = vand.u32 %v2186, 4294901760
        %v2354 = vsub.f32 %v2186, %v2353
        %v2355 = vand.u32 %v2354, 4294901760
        %v2356 = vsub.f32 %v2354, %v2355
        %v2357 = vand.u32 %v2356, 4294901760
        %2358 = vmatprep.mubr.f32.mxu0 %v2357
        %v2359 = vand.u32 %v2185, 4294901760
        %v2360 = vsub.f32 %v2185, %v2359
        %v2361 = vand.u32 %v2360, 4294901760
        %v2362 = vsub.f32 %v2360, %v2361
        %v2363 = vand.u32 %v2362, 4294901760
        %2364 = vmatmul.mubr.f32.gmra.mrb[0].mxu0 %v2363
        %v2365 = vpop.f32.mrb[0].mxu0
        %v2366 = vadd.f32 %v2208, %v2365
        %v2367 = vpop.f32.mrb[0].mxu0
        %v2368 = vand.u32 %v2189, 4294901760
        %v2369 = vsub.f32 %v2189, %v2368
        %v2370 = vand.u32 %v2369, 4294901760
        %v2371 = vsub.f32 %v2369, %v2370
        %v2372 = vand.u32 %v2371, 4294901760
        %2373 = vmatprep.mubr.f32.mxu0 %v2372
        %v2374 = vand.u32 %v2188, 4294901760
        %v2375 = vsub.f32 %v2188, %v2374
        %v2376 = vand.u32 %v2375, 4294901760
        %v2377 = vsub.f32 %v2375, %v2376
        %v2378 = vand.u32 %v2377, 4294901760
        %2379 = vmatmul.mubr.f32.gmra.mrb[0].mxu0 %v2378
        %v2380 = vpop.f32.mrb[0].mxu0
        %v2381 = vadd.f32 %v2213, %v2380
        %v2382 = vpop.f32.mrb[0].mxu0
        %2383 = vdwg.mxu0
        %2384 = vmatprep.subr.mxu0 0.0
        %v2385 = vand.u32 %v2116, 4294901760
        %v2386 = vsub.f32 %v2116, %v2385
        %v2387 = vand.u32 %v2386, 4294901760
        %v2388 = vsub.f32 %v2386, %v2387
        %v2389 = vand.u32 %v2388, 4294901760
        %2390 = vmatpush1.msra.mxu0 %v2389
        %2391 = vmatprep.subr.mxu0 0.0
        %v2392 = vand.u32 %v2118, 4294901760
        %v2393 = vsub.f32 %v2118, %v2392
        %v2394 = vand.u32 %v2393, 4294901760
        %v2395 = vsub.f32 %v2393, %v2394
        %v2396 = vand.u32 %v2395, 4294901760
        %2397 = vmatpush1.msra.mxu0 %v2396
        %2398 = vmatprep.subr.mxu0 0.0
        %v2399 = vand.u32 %v2120, 4294901760
        %v2400 = vsub.f32 %v2120, %v2399
        %v2401 = vand.u32 %v2400, 4294901760
        %v2402 = vsub.f32 %v2400, %v2401
        %v2403 = vand.u32 %v2402, 4294901760
        %2404 = vmatpush1.msra.mxu0 %v2403
        %2405 = vmatprep.subr.mxu0 0.0
        %v2406 = vand.u32 %v2122, 4294901760
        %v2407 = vsub.f32 %v2122, %v2406
        %v2408 = vand.u32 %v2407, 4294901760
        %v2409 = vsub.f32 %v2407, %v2408
        %v2410 = vand.u32 %v2409, 4294901760
        %2411 = vmatpush1.msra.mxu0 %v2410
        %2412 = vmatprep.subr.mxu0 0.0
        %v2413 = vand.u32 %v2124, 4294901760
        %v2414 = vsub.f32 %v2124, %v2413
        %v2415 = vand.u32 %v2414, 4294901760
        %v2416 = vsub.f32 %v2414, %v2415
        %v2417 = vand.u32 %v2416, 4294901760
        %2418 = vmatpush1.msra.mxu0 %v2417
        %2419 = vmatprep.subr.mxu0 0.0
        %v2420 = vand.u32 %v2126, 4294901760
        %v2421 = vsub.f32 %v2126, %v2420
        %v2422 = vand.u32 %v2421, 4294901760
        %v2423 = vsub.f32 %v2421, %v2422
        %v2424 = vand.u32 %v2423, 4294901760
        %2425 = vmatpush1.msra.mxu0 %v2424
        %2426 = vmatprep.subr.mxu0 0.0
        %v2427 = vand.u32 %v2128, 4294901760
        %v2428 = vsub.f32 %v2128, %v2427
        %v2429 = vand.u32 %v2428, 4294901760
        %v2430 = vsub.f32 %v2428, %v2429
        %v2431 = vand.u32 %v2430, 4294901760
        %2432 = vmatpush1.msra.mxu0 %v2431
        %2433 = vmatprep.subr.mxu0 0.0
        %v2434 = vand.u32 %v2130, 4294901760
        %v2435 = vsub.f32 %v2130, %v2434
        %v2436 = vand.u32 %v2435, 4294901760
        %v2437 = vsub.f32 %v2435, %v2436
        %v2438 = vand.u32 %v2437, 4294901760
        %2439 = vmatpush1.msra.mxu0 %v2438
        %2440 = vmatprep.subr.mxu0 0.0
        %v2441 = vand.u32 %v2132, 4294901760
        %v2442 = vsub.f32 %v2132, %v2441
        %v2443 = vand.u32 %v2442, 4294901760
        %v2444 = vsub.f32 %v2442, %v2443
        %v2445 = vand.u32 %v2444, 4294901760
        %2446 = vmatpush1.msra.mxu0 %v2445
        %2447 = vmatprep.subr.mxu0 0.0
        %v2448 = vand.u32 %v2134, 4294901760
        %v2449 = vsub.f32 %v2134, %v2448
        %v2450 = vand.u32 %v2449, 4294901760
        %v2451 = vsub.f32 %v2449, %v2450
        %v2452 = vand.u32 %v2451, 4294901760
        %2453 = vmatpush1.msra.mxu0 %v2452
        %2454 = vmatprep.subr.mxu0 0.0
        %v2455 = vand.u32 %v2136, 4294901760
        %v2456 = vsub.f32 %v2136, %v2455
        %v2457 = vand.u32 %v2456, 4294901760
        %v2458 = vsub.f32 %v2456, %v2457
        %v2459 = vand.u32 %v2458, 4294901760
        %2460 = vmatpush1.msra.mxu0 %v2459
        %2461 = vmatprep.subr.mxu0 0.0
        %v2462 = vand.u32 %v2138, 4294901760
        %v2463 = vsub.f32 %v2138, %v2462
        %v2464 = vand.u32 %v2463, 4294901760
        %v2465 = vsub.f32 %v2463, %v2464
        %v2466 = vand.u32 %v2465, 4294901760
        %2467 = vmatpush1.msra.mxu0 %v2466
        %2468 = vmatprep.subr.mxu0 0.0
        %v2469 = vand.u32 %v2140, 4294901760
        %v2470 = vsub.f32 %v2140, %v2469
        %v2471 = vand.u32 %v2470, 4294901760
        %v2472 = vsub.f32 %v2470, %v2471
        %v2473 = vand.u32 %v2472, 4294901760
        %2474 = vmatpush1.msra.mxu0 %v2473
        %2475 = vmatprep.subr.mxu0 0.0
        %v2476 = vand.u32 %v2142, 4294901760
        %v2477 = vsub.f32 %v2142, %v2476
        %v2478 = vand.u32 %v2477, 4294901760
        %v2479 = vsub.f32 %v2477, %v2478
        %v2480 = vand.u32 %v2479, 4294901760
        %2481 = vmatpush1.msra.mxu0 %v2480
        %2482 = vmatprep.subr.mxu0 0.0
        %v2483 = vand.u32 %v2144, 4294901760
        %v2484 = vsub.f32 %v2144, %v2483
        %v2485 = vand.u32 %v2484, 4294901760
        %v2486 = vsub.f32 %v2484, %v2485
        %v2487 = vand.u32 %v2486, 4294901760
        %2488 = vmatpush1.msra.mxu0 %v2487
        %2489 = vmatprep.subr.mxu0 0.0
        %v2490 = vand.u32 %v2146, 4294901760
        %v2491 = vsub.f32 %v2146, %v2490
        %v2492 = vand.u32 %v2491, 4294901760
        %v2493 = vsub.f32 %v2491, %v2492
        %v2494 = vand.u32 %v2493, 4294901760
        %2495 = vmatpush1.msra.mxu0 %v2494
        %2496 = vmatprep.subr.mxu0 0.0
        %v2497 = vand.u32 %v2111, 4294901760
        %v2498 = vsub.f32 %v2111, %v2497
        %v2499 = vand.u32 %v2498, 4294901760
        %v2500 = vsub.f32 %v2498, %v2499
        %v2501 = vand.u32 %v2500, 4294901760
        %2502 = vmatpush1.msra.mxu0 %v2501
        %2503 = vmatprep.subr.mxu0 0.0
        %v2504 = vand.u32 %v2112, 4294901760
        %v2505 = vsub.f32 %v2112, %v2504
        %v2506 = vand.u32 %v2505, 4294901760
        %v2507 = vsub.f32 %v2505, %v2506
        %v2508 = vand.u32 %v2507, 4294901760
        %2509 = vmatpush1.msra.mxu0 %v2508
        %2510 = vmatprep.subr.mxu0 0.0
        %v2511 = vand.u32 %v2113, 4294901760
        %v2512 = vsub.f32 %v2113, %v2511
        %v2513 = vand.u32 %v2512, 4294901760
        %v2514 = vsub.f32 %v2512, %v2513
        %v2515 = vand.u32 %v2514, 4294901760
        %2516 = vmatpush1.msra.mxu0 %v2515
        %2517 = vmatprep.subr.mxu0 0.0
        %v2518 = vand.u32 %v2114, 4294901760
        %v2519 = vsub.f32 %v2114, %v2518
        %v2520 = vand.u32 %v2519, 4294901760
        %v2521 = vsub.f32 %v2519, %v2520
        %v2522 = vand.u32 %v2521, 4294901760
        %2523 = vmatpush1.msra.mxu0 %v2522
        %2524 = vmatprep.subr.mxu0 0.0
        %v2525 = vand.u32 %v2148, 4294901760
        %v2526 = vsub.f32 %v2148, %v2525
        %v2527 = vand.u32 %v2526, 4294901760
        %v2528 = vsub.f32 %v2526, %v2527
        %v2529 = vand.u32 %v2528, 4294901760
        %2530 = vmatpush1.msra.mxu0 %v2529
        %2531 = vmatprep.subr.mxu0 0.0
        %v2532 = vand.u32 %v2150, 4294901760
        %v2533 = vsub.f32 %v2150, %v2532
        %v2534 = vand.u32 %v2533, 4294901760
        %v2535 = vsub.f32 %v2533, %v2534
        %v2536 = vand.u32 %v2535, 4294901760
        %2537 = vmatpush1.msra.mxu0 %v2536
        %2538 = vmatprep.subr.mxu0 0.0
        %v2539 = vand.u32 %v2152, 4294901760
        %v2540 = vsub.f32 %v2152, %v2539
        %v2541 = vand.u32 %v2540, 4294901760
        %v2542 = vsub.f32 %v2540, %v2541
        %v2543 = vand.u32 %v2542, 4294901760
        %2544 = vmatpush1.msra.mxu0 %v2543
        %2545 = vmatprep.subr.mxu0 0.0
        %v2546 = vand.u32 %v2154, 4294901760
        %v2547 = vsub.f32 %v2154, %v2546
        %v2548 = vand.u32 %v2547, 4294901760
        %v2549 = vsub.f32 %v2547, %v2548
        %v2550 = vand.u32 %v2549, 4294901760
        %2551 = vmatpush1.msra.mxu0 %v2550
        %2552 = vmatprep.subr.mxu0 0.0
        %v2553 = vand.u32 %v2156, 4294901760
        %v2554 = vsub.f32 %v2156, %v2553
        %v2555 = vand.u32 %v2554, 4294901760
        %v2556 = vsub.f32 %v2554, %v2555
        %v2557 = vand.u32 %v2556, 4294901760
        %2558 = vmatpush1.msra.mxu0 %v2557
        %2559 = vmatprep.subr.mxu0 0.0
        %v2560 = vand.u32 %v2158, 4294901760
        %v2561 = vsub.f32 %v2158, %v2560
        %v2562 = vand.u32 %v2561, 4294901760
        %v2563 = vsub.f32 %v2561, %v2562
        %v2564 = vand.u32 %v2563, 4294901760
        %2565 = vmatpush1.msra.mxu0 %v2564
        %2566 = vmatprep.subr.mxu0 0.0
        %v2567 = vand.u32 %v2160, 4294901760
        %v2568 = vsub.f32 %v2160, %v2567
        %v2569 = vand.u32 %v2568, 4294901760
        %v2570 = vsub.f32 %v2568, %v2569
        %v2571 = vand.u32 %v2570, 4294901760
        %2572 = vmatpush1.msra.mxu0 %v2571
        %2573 = vmatprep.subr.mxu0 0.0
        %v2574 = vand.u32 %v2162, 4294901760
        %v2575 = vsub.f32 %v2162, %v2574
        %v2576 = vand.u32 %v2575, 4294901760
        %v2577 = vsub.f32 %v2575, %v2576
        %v2578 = vand.u32 %v2577, 4294901760
        %2579 = vmatpush1.msra.mxu0 %v2578
        %2580 = vmatprep.subr.mxu0 0.0
        %v2581 = vand.u32 %v2164, 4294901760
        %v2582 = vsub.f32 %v2164, %v2581
        %v2583 = vand.u32 %v2582, 4294901760
        %v2584 = vsub.f32 %v2582, %v2583
        %v2585 = vand.u32 %v2584, 4294901760
        %2586 = vmatpush1.msra.mxu0 %v2585
        %2587 = vmatprep.subr.mxu0 0.0
        %v2588 = vand.u32 %v2166, 4294901760
        %v2589 = vsub.f32 %v2166, %v2588
        %v2590 = vand.u32 %v2589, 4294901760
        %v2591 = vsub.f32 %v2589, %v2590
        %v2592 = vand.u32 %v2591, 4294901760
        %2593 = vmatpush1.msra.mxu0 %v2592
        %2594 = vmatprep.subr.mxu0 0.0
        %v2595 = vand.u32 %v2168, 4294901760
        %v2596 = vsub.f32 %v2168, %v2595
        %v2597 = vand.u32 %v2596, 4294901760
        %v2598 = vsub.f32 %v2596, %v2597
        %v2599 = vand.u32 %v2598, 4294901760
        %2600 = vmatpush1.msra.mxu0 %v2599
        %2601 = vmatprep.subr.mxu0 0.0
        %v2602 = vand.u32 %v2170, 4294901760
        %v2603 = vsub.f32 %v2170, %v2602
        %v2604 = vand.u32 %v2603, 4294901760
        %v2605 = vsub.f32 %v2603, %v2604
        %v2606 = vand.u32 %v2605, 4294901760
        %2607 = vmatpush1.msra.mxu0 %v2606
        %v2608 = vand.u32 %v2180, 4294901760
        %2609 = vmatprep.mubr.f32.mxu0 %v2608
        %v2610 = vand.u32 %v2179, 4294901760
        %2611 = vmatmul.mubr.f32.gmra.mrb[0].mxu0 %v2610
        %v2612 = vpop.f32.mrb[0].mxu0
        %v2613 = vadd.f32 %v2336, %v2612
        %v2614 = vpop.f32.mrb[0].mxu0
        %v2615 = vand.u32 %v2183, 4294901760
        %2616 = vmatprep.mubr.f32.mxu0 %v2615
        %v2617 = vand.u32 %v2182, 4294901760
        %2618 = vmatmul.mubr.f32.gmra.mrb[0].mxu0 %v2617
        %v2619 = vpop.f32.mrb[0].mxu0
        %v2620 = vadd.f32 %v2351, %v2619
        %v2621 = vpop.f32.mrb[0].mxu0
        %v2622 = vand.u32 %v2186, 4294901760
        %2623 = vmatprep.mubr.f32.mxu0 %v2622
        %v2624 = vand.u32 %v2185, 4294901760
        %2625 = vmatmul.mubr.f32.gmra.mrb[0].mxu0 %v2624
        %v2626 = vpop.f32.mrb[0].mxu0
        %v2627 = vadd.f32 %v2366, %v2626
        %v2628 = vpop.f32.mrb[0].mxu0
        %v2629 = vand.u32 %v2189, 4294901760
        %2630 = vmatprep.mubr.f32.mxu0 %v2629
        %v2631 = vand.u32 %v2188, 4294901760
        %2632 = vmatmul.mubr.f32.gmra.mrb[0].mxu0 %v2631
        %v2633 = vpop.f32.mrb[0].mxu0
        %v2634 = vadd.f32 %v2381, %v2633
        %v2635 = vpop.f32.mrb[0].mxu0
        %2636 = vdwg.mxu0
        %2637 = vmatprep.subr.mxu0 0.0
        %v2638 = vand.u32 %v2116, 4294901760
        %v2639 = vsub.f32 %v2116, %v2638
        %2640 = vmatpush1.msra.mxu0 %v2639
        %2641 = vmatprep.subr.mxu0 0.0
        %v2642 = vand.u32 %v2118, 4294901760
        %v2643 = vsub.f32 %v2118, %v2642
        %2644 = vmatpush1.msra.mxu0 %v2643
        %2645 = vmatprep.subr.mxu0 0.0
        %v2646 = vand.u32 %v2120, 4294901760
        %v2647 = vsub.f32 %v2120, %v2646
        %2648 = vmatpush1.msra.mxu0 %v2647
        %2649 = vmatprep.subr.mxu0 0.0
        %v2650 = vand.u32 %v2122, 4294901760
        %v2651 = vsub.f32 %v2122, %v2650
        %2652 = vmatpush1.msra.mxu0 %v2651
        %2653 = vmatprep.subr.mxu0 0.0
        %v2654 = vand.u32 %v2124, 4294901760
        %v2655 = vsub.f32 %v2124, %v2654
        %2656 = vmatpush1.msra.mxu0 %v2655
        %2657 = vmatprep.subr.mxu0 0.0
        %v2658 = vand.u32 %v2126, 4294901760
        %v2659 = vsub.f32 %v2126, %v2658
        %2660 = vmatpush1.msra.mxu0 %v2659
        %2661 = vmatprep.subr.mxu0 0.0
        %v2662 = vand.u32 %v2128, 4294901760
        %v2663 = vsub.f32 %v2128, %v2662
        %2664 = vmatpush1.msra.mxu0 %v2663
        %2665 = vmatprep.subr.mxu0 0.0
        %v2666 = vand.u32 %v2130, 4294901760
        %v2667 = vsub.f32 %v2130, %v2666
        %2668 = vmatpush1.msra.mxu0 %v2667
        %2669 = vmatprep.subr.mxu0 0.0
        %v2670 = vand.u32 %v2132, 4294901760
        %v2671 = vsub.f32 %v2132, %v2670
        %2672 = vmatpush1.msra.mxu0 %v2671
        %2673 = vmatprep.subr.mxu0 0.0
        %v2674 = vand.u32 %v2134, 4294901760
        %v2675 = vsub.f32 %v2134, %v2674
        %2676 = vmatpush1.msra.mxu0 %v2675
        %2677 = vmatprep.subr.mxu0 0.0
        %v2678 = vand.u32 %v2136, 4294901760
        %v2679 = vsub.f32 %v2136, %v2678
        %2680 = vmatpush1.msra.mxu0 %v2679
        %2681 = vmatprep.subr.mxu0 0.0
        %v2682 = vand.u32 %v2138, 4294901760
        %v2683 = vsub.f32 %v2138, %v2682
        %2684 = vmatpush1.msra.mxu0 %v2683
        %2685 = vmatprep.subr.mxu0 0.0
        %v2686 = vand.u32 %v2140, 4294901760
        %v2687 = vsub.f32 %v2140, %v2686
        %2688 = vmatpush1.msra.mxu0 %v2687
        %2689 = vmatprep.subr.mxu0 0.0
        %v2690 = vand.u32 %v2142, 4294901760
        %v2691 = vsub.f32 %v2142, %v2690
        %2692 = vmatpush1.msra.mxu0 %v2691
        %2693 = vmatprep.subr.mxu0 0.0
        %v2694 = vand.u32 %v2144, 4294901760
        %v2695 = vsub.f32 %v2144, %v2694
        %2696 = vmatpush1.msra.mxu0 %v2695
        %2697 = vmatprep.subr.mxu0 0.0
        %v2698 = vand.u32 %v2146, 4294901760
        %v2699 = vsub.f32 %v2146, %v2698
        %2700 = vmatpush1.msra.mxu0 %v2699
        %2701 = vmatprep.subr.mxu0 0.0
        %v2702 = vand.u32 %v2111, 4294901760
        %v2703 = vsub.f32 %v2111, %v2702
        %2704 = vmatpush1.msra.mxu0 %v2703
        %2705 = vmatprep.subr.mxu0 0.0
        %v2706 = vand.u32 %v2112, 4294901760
        %v2707 = vsub.f32 %v2112, %v2706
        %2708 = vmatpush1.msra.mxu0 %v2707
        %2709 = vmatprep.subr.mxu0 0.0
        %v2710 = vand.u32 %v2113, 4294901760
        %v2711 = vsub.f32 %v2113, %v2710
        %2712 = vmatpush1.msra.mxu0 %v2711
        %2713 = vmatprep.subr.mxu0 0.0
        %v2714 = vand.u32 %v2114, 4294901760
        %v2715 = vsub.f32 %v2114, %v2714
        %2716 = vmatpush1.msra.mxu0 %v2715
        %2717 = vmatprep.subr.mxu0 0.0
        %v2718 = vand.u32 %v2148, 4294901760
        %v2719 = vsub.f32 %v2148, %v2718
        %2720 = vmatpush1.msra.mxu0 %v2719
        %2721 = vmatprep.subr.mxu0 0.0
        %v2722 = vand.u32 %v2150, 4294901760
        %v2723 = vsub.f32 %v2150, %v2722
        %2724 = vmatpush1.msra.mxu0 %v2723
        %2725 = vmatprep.subr.mxu0 0.0
        %v2726 = vand.u32 %v2152, 4294901760
        %v2727 = vsub.f32 %v2152, %v2726
        %2728 = vmatpush1.msra.mxu0 %v2727
        %2729 = vmatprep.subr.mxu0 0.0
        %v2730 = vand.u32 %v2154, 4294901760
        %v2731 = vsub.f32 %v2154, %v2730
        %2732 = vmatpush1.msra.mxu0 %v2731
        %2733 = vmatprep.subr.mxu0 0.0
        %v2734 = vand.u32 %v2156, 4294901760
        %v2735 = vsub.f32 %v2156, %v2734
        %2736 = vmatpush1.msra.mxu0 %v2735
        %2737 = vmatprep.subr.mxu0 0.0
        %v2738 = vand.u32 %v2158, 4294901760
        %v2739 = vsub.f32 %v2158, %v2738
        %2740 = vmatpush1.msra.mxu0 %v2739
        %2741 = vmatprep.subr.mxu0 0.0
        %v2742 = vand.u32 %v2160, 4294901760
        %v2743 = vsub.f32 %v2160, %v2742
        %2744 = vmatpush1.msra.mxu0 %v2743
        %2745 = vmatprep.subr.mxu0 0.0
        %v2746 = vand.u32 %v2162, 4294901760
        %v2747 = vsub.f32 %v2162, %v2746
        %2748 = vmatpush1.msra.mxu0 %v2747
        %2749 = vmatprep.subr.mxu0 0.0
        %v2750 = vand.u32 %v2164, 4294901760
        %v2751 = vsub.f32 %v2164, %v2750
        %2752 = vmatpush1.msra.mxu0 %v2751
        %2753 = vmatprep.subr.mxu0 0.0
        %v2754 = vand.u32 %v2166, 4294901760
        %v2755 = vsub.f32 %v2166, %v2754
        %2756 = vmatpush1.msra.mxu0 %v2755
        %2757 = vmatprep.subr.mxu0 0.0
        %v2758 = vand.u32 %v2168, 4294901760
        %v2759 = vsub.f32 %v2168, %v2758
        %2760 = vmatpush1.msra.mxu0 %v2759
        %2761 = vmatprep.subr.mxu0 0.0
        %v2762 = vand.u32 %v2170, 4294901760
        %v2763 = vsub.f32 %v2170, %v2762
        %2764 = vmatpush1.msra.mxu0 %v2763
        %v2765 = vand.u32 %v2180, 4294901760
        %v2766 = vsub.f32 %v2180, %v2765
        %2767 = vmatprep.mubr.f32.mxu0 %v2766
        %v2768 = vand.u32 %v2179, 4294901760
        %v2769 = vsub.f32 %v2179, %v2768
        %2770 = vmatmul.mubr.f32.gmra.mrb[0].mxu0 %v2769
        %v2771 = vpop.f32.mrb[0].mxu0
        %v2772 = vadd.f32 %v2613, %v2771
        %v2773 = vpop.f32.mrb[0].mxu0
        %v2774 = vand.u32 %v2183, 4294901760
        %v2775 = vsub.f32 %v2183, %v2774
        %2776 = vmatprep.mubr.f32.mxu0 %v2775
        %v2777 = vand.u32 %v2182, 4294901760
        %v2778 = vsub.f32 %v2182, %v2777
        %2779 = vmatmul.mubr.f32.gmra.mrb[0].mxu0 %v2778
        %v2780 = vpop.f32.mrb[0].mxu0
        %v2781 = vadd.f32 %v2620, %v2780
        %v2782 = vpop.f32.mrb[0].mxu0
        %v2783 = vand.u32 %v2186, 4294901760
        %v2784 = vsub.f32 %v2186, %v2783
        %2785 = vmatprep.mubr.f32.mxu0 %v2784
        %v2786 = vand.u32 %v2185, 4294901760
        %v2787 = vsub.f32 %v2185, %v2786
        %2788 = vmatmul.mubr.f32.gmra.mrb[0].mxu0 %v2787
        %v2789 = vpop.f32.mrb[0].mxu0
        %v2790 = vadd.f32 %v2627, %v2789
        %v2791 = vpop.f32.mrb[0].mxu0
        %v2792 = vand.u32 %v2189, 4294901760
        %v2793 = vsub.f32 %v2189, %v2792
        %2794 = vmatprep.mubr.f32.mxu0 %v2793
        %v2795 = vand.u32 %v2188, 4294901760
        %v2796 = vsub.f32 %v2188, %v2795
        %2797 = vmatmul.mubr.f32.gmra.mrb[0].mxu0 %v2796
        %v2798 = vpop.f32.mrb[0].mxu0
        %v2799 = vadd.f32 %v2634, %v2798
        %v2800 = vpop.f32.mrb[0].mxu0
        %2801 = vdwg.mxu0
        %2802 = vmatprep.subr.mxu0 0.0
        %v2803 = vand.u32 %v2116, 4294901760
        %2804 = vmatpush1.msra.mxu0 %v2803
        %2805 = vmatprep.subr.mxu0 0.0
        %v2806 = vand.u32 %v2118, 4294901760
        %2807 = vmatpush1.msra.mxu0 %v2806
        %2808 = vmatprep.subr.mxu0 0.0
        %v2809 = vand.u32 %v2120, 4294901760
        %2810 = vmatpush1.msra.mxu0 %v2809
        %2811 = vmatprep.subr.mxu0 0.0
        %v2812 = vand.u32 %v2122, 4294901760
        %2813 = vmatpush1.msra.mxu0 %v2812
        %2814 = vmatprep.subr.mxu0 0.0
        %v2815 = vand.u32 %v2124, 4294901760
        %2816 = vmatpush1.msra.mxu0 %v2815
        %2817 = vmatprep.subr.mxu0 0.0
        %v2818 = vand.u32 %v2126, 4294901760
        %2819 = vmatpush1.msra.mxu0 %v2818
        %2820 = vmatprep.subr.mxu0 0.0
        %v2821 = vand.u32 %v2128, 4294901760
        %2822 = vmatpush1.msra.mxu0 %v2821
        %2823 = vmatprep.subr.mxu0 0.0
        %v2824 = vand.u32 %v2130, 4294901760
        %2825 = vmatpush1.msra.mxu0 %v2824
        %2826 = vmatprep.subr.mxu0 0.0
        %v2827 = vand.u32 %v2132, 4294901760
        %2828 = vmatpush1.msra.mxu0 %v2827
        %2829 = vmatprep.subr.mxu0 0.0
        %v2830 = vand.u32 %v2134, 4294901760
        %2831 = vmatpush1.msra.mxu0 %v2830
        %2832 = vmatprep.subr.mxu0 0.0
        %v2833 = vand.u32 %v2136, 4294901760
        %2834 = vmatpush1.msra.mxu0 %v2833
        %2835 = vmatprep.subr.mxu0 0.0
        %v2836 = vand.u32 %v2138, 4294901760
        %2837 = vmatpush1.msra.mxu0 %v2836
        %2838 = vmatprep.subr.mxu0 0.0
        %v2839 = vand.u32 %v2140, 4294901760
        %2840 = vmatpush1.msra.mxu0 %v2839
        %2841 = vmatprep.subr.mxu0 0.0
        %v2842 = vand.u32 %v2142, 4294901760
        %2843 = vmatpush1.msra.mxu0 %v2842
        %2844 = vmatprep.subr.mxu0 0.0
        %v2845 = vand.u32 %v2144, 4294901760
        %2846 = vmatpush1.msra.mxu0 %v2845
        %2847 = vmatprep.subr.mxu0 0.0
        %v2848 = vand.u32 %v2146, 4294901760
        %2849 = vmatpush1.msra.mxu0 %v2848
        %2850 = vmatprep.subr.mxu0 0.0
        %v2851 = vand.u32 %v2111, 4294901760
        %2852 = vmatpush1.msra.mxu0 %v2851
        %2853 = vmatprep.subr.mxu0 0.0
        %v2854 = vand.u32 %v2112, 4294901760
        %2855 = vmatpush1.msra.mxu0 %v2854
        %2856 = vmatprep.subr.mxu0 0.0
        %v2857 = vand.u32 %v2113, 4294901760
        %2858 = vmatpush1.msra.mxu0 %v2857
        %2859 = vmatprep.subr.mxu0 0.0
        %v2860 = vand.u32 %v2114, 4294901760
        %2861 = vmatpush1.msra.mxu0 %v2860
        %2862 = vmatprep.subr.mxu0 0.0
        %v2863 = vand.u32 %v2148, 4294901760
        %2864 = vmatpush1.msra.mxu0 %v2863
        %2865 = vmatprep.subr.mxu0 0.0
        %v2866 = vand.u32 %v2150, 4294901760
        %2867 = vmatpush1.msra.mxu0 %v2866
        %2868 = vmatprep.subr.mxu0 0.0
        %v2869 = vand.u32 %v2152, 4294901760
        %2870 = vmatpush1.msra.mxu0 %v2869
        %2871 = vmatprep.subr.mxu0 0.0
        %v2872 = vand.u32 %v2154, 4294901760
        %2873 = vmatpush1.msra.mxu0 %v2872
        %2874 = vmatprep.subr.mxu0 0.0
        %v2875 = vand.u32 %v2156, 4294901760
        %2876 = vmatpush1.msra.mxu0 %v2875
        %2877 = vmatprep.subr.mxu0 0.0
        %v2878 = vand.u32 %v2158, 4294901760
        %2879 = vmatpush1.msra.mxu0 %v2878
        %2880 = vmatprep.subr.mxu0 0.0
        %v2881 = vand.u32 %v2160, 4294901760
        %2882 = vmatpush1.msra.mxu0 %v2881
        %2883 = vmatprep.subr.mxu0 0.0
        %v2884 = vand.u32 %v2162, 4294901760
        %2885 = vmatpush1.msra.mxu0 %v2884
        %2886 = vmatprep.subr.mxu0 0.0
        %v2887 = vand.u32 %v2164, 4294901760
        %2888 = vmatpush1.msra.mxu0 %v2887
        %2889 = vmatprep.subr.mxu0 0.0
        %v2890 = vand.u32 %v2166, 4294901760
        %2891 = vmatpush1.msra.mxu0 %v2890
        %2892 = vmatprep.subr.mxu0 0.0
        %v2893 = vand.u32 %v2168, 4294901760
        %2894 = vmatpush1.msra.mxu0 %v2893
        %2895 = vmatprep.subr.mxu0 0.0
        %v2896 = vand.u32 %v2170, 4294901760
        %2897 = vmatpush1.msra.mxu0 %v2896
        %v2898 = vand.u32 %v2180, 4294901760
        %v2899 = vsub.f32 %v2180, %v2898
        %v2900 = vand.u32 %v2899, 4294901760
        %2901 = vmatprep.mubr.f32.mxu0 %v2900
        %v2902 = vand.u32 %v2179, 4294901760
        %v2903 = vsub.f32 %v2179, %v2902
        %v2904 = vand.u32 %v2903, 4294901760
        %2905 = vmatmul.mubr.f32.gmra.mrb[0].mxu0 %v2904
        %v2906 = vpop.f32.mrb[0].mxu0
        %v2907 = vadd.f32 %v2772, %v2906
        %v2908 = vpop.f32.mrb[0].mxu0
        %v2909 = vand.u32 %v2183, 4294901760
        %v2910 = vsub.f32 %v2183, %v2909
        %v2911 = vand.u32 %v2910, 4294901760
        %2912 = vmatprep.mubr.f32.mxu0 %v2911
        %v2913 = vand.u32 %v2182, 4294901760
        %v2914 = vsub.f32 %v2182, %v2913
        %v2915 = vand.u32 %v2914, 4294901760
        %2916 = vmatmul.mubr.f32.gmra.mrb[0].mxu0 %v2915
        %v2917 = vpop.f32.mrb[0].mxu0
        %v2918 = vadd.f32 %v2781, %v2917
        %v2919 = vpop.f32.mrb[0].mxu0
        %v2920 = vand.u32 %v2186, 4294901760
        %v2921 = vsub.f32 %v2186, %v2920
        %v2922 = vand.u32 %v2921, 4294901760
        %2923 = vmatprep.mubr.f32.mxu0 %v2922
        %v2924 = vand.u32 %v2185, 4294901760
        %v2925 = vsub.f32 %v2185, %v2924
        %v2926 = vand.u32 %v2925, 4294901760
        %2927 = vmatmul.mubr.f32.gmra.mrb[0].mxu0 %v2926
        %v2928 = vpop.f32.mrb[0].mxu0
        %v2929 = vadd.f32 %v2790, %v2928
        %v2930 = vpop.f32.mrb[0].mxu0
        %v2931 = vand.u32 %v2189, 4294901760
        %v2932 = vsub.f32 %v2189, %v2931
        %v2933 = vand.u32 %v2932, 4294901760
        %2934 = vmatprep.mubr.f32.mxu0 %v2933
        %v2935 = vand.u32 %v2188, 4294901760
        %v2936 = vsub.f32 %v2188, %v2935
        %v2937 = vand.u32 %v2936, 4294901760
        %2938 = vmatmul.mubr.f32.gmra.mrb[0].mxu0 %v2937
        %v2939 = vpop.f32.mrb[0].mxu0
        %v2940 = vadd.f32 %v2799, %v2939
        %v2941 = vpop.f32.mrb[0].mxu0
        %2942 = vdwg.mxu0
        %2943 = vmatprep.subr.mxu0 0.0
        %v2944 = vand.u32 %v2116, 4294901760
        %v2945 = vsub.f32 %v2116, %v2944
        %v2946 = vand.u32 %v2945, 4294901760
        %2947 = vmatpush1.msra.mxu0 %v2946
        %2948 = vmatprep.subr.mxu0 0.0
        %v2949 = vand.u32 %v2118, 4294901760
        %v2950 = vsub.f32 %v2118, %v2949
        %v2951 = vand.u32 %v2950, 4294901760
        %2952 = vmatpush1.msra.mxu0 %v2951
        %2953 = vmatprep.subr.mxu0 0.0
        %v2954 = vand.u32 %v2120, 4294901760
        %v2955 = vsub.f32 %v2120, %v2954
        %v2956 = vand.u32 %v2955, 4294901760
        %2957 = vmatpush1.msra.mxu0 %v2956
        %2958 = vmatprep.subr.mxu0 0.0
        %v2959 = vand.u32 %v2122, 4294901760
        %v2960 = vsub.f32 %v2122, %v2959
        %v2961 = vand.u32 %v2960, 4294901760
        %2962 = vmatpush1.msra.mxu0 %v2961
        %2963 = vmatprep.subr.mxu0 0.0
        %v2964 = vand.u32 %v2124, 4294901760
        %v2965 = vsub.f32 %v2124, %v2964
        %v2966 = vand.u32 %v2965, 4294901760
        %2967 = vmatpush1.msra.mxu0 %v2966
        %2968 = vmatprep.subr.mxu0 0.0
        %v2969 = vand.u32 %v2126, 4294901760
        %v2970 = vsub.f32 %v2126, %v2969
        %v2971 = vand.u32 %v2970, 4294901760
        %2972 = vmatpush1.msra.mxu0 %v2971
        %2973 = vmatprep.subr.mxu0 0.0
        %v2974 = vand.u32 %v2128, 4294901760
        %v2975 = vsub.f32 %v2128, %v2974
        %v2976 = vand.u32 %v2975, 4294901760
        %2977 = vmatpush1.msra.mxu0 %v2976
        %2978 = vmatprep.subr.mxu0 0.0
        %v2979 = vand.u32 %v2130, 4294901760
        %v2980 = vsub.f32 %v2130, %v2979
        %v2981 = vand.u32 %v2980, 4294901760
        %2982 = vmatpush1.msra.mxu0 %v2981
        %2983 = vmatprep.subr.mxu0 0.0
        %v2984 = vand.u32 %v2132, 4294901760
        %v2985 = vsub.f32 %v2132, %v2984
        %v2986 = vand.u32 %v2985, 4294901760
        %2987 = vmatpush1.msra.mxu0 %v2986
        %2988 = vmatprep.subr.mxu0 0.0
        %v2989 = vand.u32 %v2134, 4294901760
        %v2990 = vsub.f32 %v2134, %v2989
        %v2991 = vand.u32 %v2990, 4294901760
        %2992 = vmatpush1.msra.mxu0 %v2991
        %2993 = vmatprep.subr.mxu0 0.0
        %v2994 = vand.u32 %v2136, 4294901760
        %v2995 = vsub.f32 %v2136, %v2994
        %v2996 = vand.u32 %v2995, 4294901760
        %2997 = vmatpush1.msra.mxu0 %v2996
        %2998 = vmatprep.subr.mxu0 0.0
        %v2999 = vand.u32 %v2138, 4294901760
        %v3000 = vsub.f32 %v2138, %v2999
        %v3001 = vand.u32 %v3000, 4294901760
        %3002 = vmatpush1.msra.mxu0 %v3001
        %3003 = vmatprep.subr.mxu0 0.0
        %v3004 = vand.u32 %v2140, 4294901760
        %v3005 = vsub.f32 %v2140, %v3004
        %v3006 = vand.u32 %v3005, 4294901760
        %3007 = vmatpush1.msra.mxu0 %v3006
        %3008 = vmatprep.subr.mxu0 0.0
        %v3009 = vand.u32 %v2142, 4294901760
        %v3010 = vsub.f32 %v2142, %v3009
        %v3011 = vand.u32 %v3010, 4294901760
        %3012 = vmatpush1.msra.mxu0 %v3011
        %3013 = vmatprep.subr.mxu0 0.0
        %v3014 = vand.u32 %v2144, 4294901760
        %v3015 = vsub.f32 %v2144, %v3014
        %v3016 = vand.u32 %v3015, 4294901760
        %3017 = vmatpush1.msra.mxu0 %v3016
        %3018 = vmatprep.subr.mxu0 0.0
        %v3019 = vand.u32 %v2146, 4294901760
        %v3020 = vsub.f32 %v2146, %v3019
        %v3021 = vand.u32 %v3020, 4294901760
        %3022 = vmatpush1.msra.mxu0 %v3021
        %3023 = vmatprep.subr.mxu0 0.0
        %v3024 = vand.u32 %v2111, 4294901760
        %v3025 = vsub.f32 %v2111, %v3024
        %v3026 = vand.u32 %v3025, 4294901760
        %3027 = vmatpush1.msra.mxu0 %v3026
        %3028 = vmatprep.subr.mxu0 0.0
        %v3029 = vand.u32 %v2112, 4294901760
        %v3030 = vsub.f32 %v2112, %v3029
        %v3031 = vand.u32 %v3030, 4294901760
        %3032 = vmatpush1.msra.mxu0 %v3031
        %3033 = vmatprep.subr.mxu0 0.0
        %v3034 = vand.u32 %v2113, 4294901760
        %v3035 = vsub.f32 %v2113, %v3034
        %v3036 = vand.u32 %v3035, 4294901760
        %3037 = vmatpush1.msra.mxu0 %v3036
        %3038 = vmatprep.subr.mxu0 0.0
        %v3039 = vand.u32 %v2114, 4294901760
        %v3040 = vsub.f32 %v2114, %v3039
        %v3041 = vand.u32 %v3040, 4294901760
        %3042 = vmatpush1.msra.mxu0 %v3041
        %3043 = vmatprep.subr.mxu0 0.0
        %v3044 = vand.u32 %v2148, 4294901760
        %v3045 = vsub.f32 %v2148, %v3044
        %v3046 = vand.u32 %v3045, 4294901760
        %3047 = vmatpush1.msra.mxu0 %v3046
        %3048 = vmatprep.subr.mxu0 0.0
        %v3049 = vand.u32 %v2150, 4294901760
        %v3050 = vsub.f32 %v2150, %v3049
        %v3051 = vand.u32 %v3050, 4294901760
        %3052 = vmatpush1.msra.mxu0 %v3051
        %3053 = vmatprep.subr.mxu0 0.0
        %v3054 = vand.u32 %v2152, 4294901760
        %v3055 = vsub.f32 %v2152, %v3054
        %v3056 = vand.u32 %v3055, 4294901760
        %3057 = vmatpush1.msra.mxu0 %v3056
        %3058 = vmatprep.subr.mxu0 0.0
        %v3059 = vand.u32 %v2154, 4294901760
        %v3060 = vsub.f32 %v2154, %v3059
        %v3061 = vand.u32 %v3060, 4294901760
        %3062 = vmatpush1.msra.mxu0 %v3061
        %3063 = vmatprep.subr.mxu0 0.0
        %v3064 = vand.u32 %v2156, 4294901760
        %v3065 = vsub.f32 %v2156, %v3064
        %v3066 = vand.u32 %v3065, 4294901760
        %3067 = vmatpush1.msra.mxu0 %v3066
        %3068 = vmatprep.subr.mxu0 0.0
        %v3069 = vand.u32 %v2158, 4294901760
        %v3070 = vsub.f32 %v2158, %v3069
        %v3071 = vand.u32 %v3070, 4294901760
        %3072 = vmatpush1.msra.mxu0 %v3071
        %3073 = vmatprep.subr.mxu0 0.0
        %v3074 = vand.u32 %v2160, 4294901760
        %v3075 = vsub.f32 %v2160, %v3074
        %v3076 = vand.u32 %v3075, 4294901760
        %3077 = vmatpush1.msra.mxu0 %v3076
        %3078 = vmatprep.subr.mxu0 0.0
        %v3079 = vand.u32 %v2162, 4294901760
        %v3080 = vsub.f32 %v2162, %v3079
        %v3081 = vand.u32 %v3080, 4294901760
        %3082 = vmatpush1.msra.mxu0 %v3081
        %3083 = vmatprep.subr.mxu0 0.0
        %v3084 = vand.u32 %v2164, 4294901760
        %v3085 = vsub.f32 %v2164, %v3084
        %v3086 = vand.u32 %v3085, 4294901760
        %3087 = vmatpush1.msra.mxu0 %v3086
        %3088 = vmatprep.subr.mxu0 0.0
        %v3089 = vand.u32 %v2166, 4294901760
        %v3090 = vsub.f32 %v2166, %v3089
        %v3091 = vand.u32 %v3090, 4294901760
        %3092 = vmatpush1.msra.mxu0 %v3091
        %3093 = vmatprep.subr.mxu0 0.0
        %v3094 = vand.u32 %v2168, 4294901760
        %v3095 = vsub.f32 %v2168, %v3094
        %v3096 = vand.u32 %v3095, 4294901760
        %3097 = vmatpush1.msra.mxu0 %v3096
        %3098 = vmatprep.subr.mxu0 0.0
        %v3099 = vand.u32 %v2170, 4294901760
        %v3100 = vsub.f32 %v2170, %v3099
        %v3101 = vand.u32 %v3100, 4294901760
        %3102 = vmatpush1.msra.mxu0 %v3101
        %v3103 = vand.u32 %v2180, 4294901760
        %3104 = vmatprep.mubr.f32.mxu0 %v3103
        %v3105 = vand.u32 %v2179, 4294901760
        %3106 = vmatmul.mubr.f32.gmra.mrb[0].mxu0 %v3105
        %v3107 = vpop.f32.mrb[0].mxu0
        %v3108 = vadd.f32 %v2907, %v3107
        %v3109 = vpop.f32.mrb[0].mxu0
        %v3110 = vand.u32 %v2183, 4294901760
        %3111 = vmatprep.mubr.f32.mxu0 %v3110
        %v3112 = vand.u32 %v2182, 4294901760
        %3113 = vmatmul.mubr.f32.gmra.mrb[0].mxu0 %v3112
        %v3114 = vpop.f32.mrb[0].mxu0
        %v3115 = vadd.f32 %v2918, %v3114
        %v3116 = vpop.f32.mrb[0].mxu0
        %v3117 = vand.u32 %v2186, 4294901760
        %3118 = vmatprep.mubr.f32.mxu0 %v3117
        %v3119 = vand.u32 %v2185, 4294901760
        %3120 = vmatmul.mubr.f32.gmra.mrb[0].mxu0 %v3119
        %v3121 = vpop.f32.mrb[0].mxu0
        %v3122 = vadd.f32 %v2929, %v3121
        %v3123 = vpop.f32.mrb[0].mxu0
        %v3124 = vand.u32 %v2189, 4294901760
        %3125 = vmatprep.mubr.f32.mxu0 %v3124
        %v3126 = vand.u32 %v2188, 4294901760
        %3127 = vmatmul.mubr.f32.gmra.mrb[0].mxu0 %v3126
        %v3128 = vpop.f32.mrb[0].mxu0
        %v3129 = vadd.f32 %v2940, %v3128
        %v3130 = vpop.f32.mrb[0].mxu0
        %3131 = vdwg.mxu0
        %3132 = vmatprep.subr.mxu0 0.0
        %v3133 = vand.u32 %v2116, 4294901760
        %3134 = vmatpush1.msra.mxu0 %v3133
        %3135 = vmatprep.subr.mxu0 0.0
        %v3136 = vand.u32 %v2118, 4294901760
        %3137 = vmatpush1.msra.mxu0 %v3136
        %3138 = vmatprep.subr.mxu0 0.0
        %v3139 = vand.u32 %v2120, 4294901760
        %3140 = vmatpush1.msra.mxu0 %v3139
        %3141 = vmatprep.subr.mxu0 0.0
        %v3142 = vand.u32 %v2122, 4294901760
        %3143 = vmatpush1.msra.mxu0 %v3142
        %3144 = vmatprep.subr.mxu0 0.0
        %v3145 = vand.u32 %v2124, 4294901760
        %3146 = vmatpush1.msra.mxu0 %v3145
        %3147 = vmatprep.subr.mxu0 0.0
        %v3148 = vand.u32 %v2126, 4294901760
        %3149 = vmatpush1.msra.mxu0 %v3148
        %3150 = vmatprep.subr.mxu0 0.0
        %v3151 = vand.u32 %v2128, 4294901760
        %3152 = vmatpush1.msra.mxu0 %v3151
        %3153 = vmatprep.subr.mxu0 0.0
        %v3154 = vand.u32 %v2130, 4294901760
        %3155 = vmatpush1.msra.mxu0 %v3154
        %3156 = vmatprep.subr.mxu0 0.0
        %v3157 = vand.u32 %v2132, 4294901760
        %3158 = vmatpush1.msra.mxu0 %v3157
        %3159 = vmatprep.subr.mxu0 0.0
        %v3160 = vand.u32 %v2134, 4294901760
        %3161 = vmatpush1.msra.mxu0 %v3160
        %3162 = vmatprep.subr.mxu0 0.0
        %v3163 = vand.u32 %v2136, 4294901760
        %3164 = vmatpush1.msra.mxu0 %v3163
        %3165 = vmatprep.subr.mxu0 0.0
        %v3166 = vand.u32 %v2138, 4294901760
        %3167 = vmatpush1.msra.mxu0 %v3166
        %3168 = vmatprep.subr.mxu0 0.0
        %v3169 = vand.u32 %v2140, 4294901760
        %3170 = vmatpush1.msra.mxu0 %v3169
        %3171 = vmatprep.subr.mxu0 0.0
        %v3172 = vand.u32 %v2142, 4294901760
        %3173 = vmatpush1.msra.mxu0 %v3172
        %3174 = vmatprep.subr.mxu0 0.0
        %v3175 = vand.u32 %v2144, 4294901760
        %3176 = vmatpush1.msra.mxu0 %v3175
        %3177 = vmatprep.subr.mxu0 0.0
        %v3178 = vand.u32 %v2146, 4294901760
        %3179 = vmatpush1.msra.mxu0 %v3178
        %3180 = vmatprep.subr.mxu0 0.0
        %v3181 = vand.u32 %v2111, 4294901760
        %3182 = vmatpush1.msra.mxu0 %v3181
        %3183 = vmatprep.subr.mxu0 0.0
        %v3184 = vand.u32 %v2112, 4294901760
        %3185 = vmatpush1.msra.mxu0 %v3184
        %3186 = vmatprep.subr.mxu0 0.0
        %v3187 = vand.u32 %v2113, 4294901760
        %3188 = vmatpush1.msra.mxu0 %v3187
        %3189 = vmatprep.subr.mxu0 0.0
        %v3190 = vand.u32 %v2114, 4294901760
        %3191 = vmatpush1.msra.mxu0 %v3190
        %3192 = vmatprep.subr.mxu0 0.0
        %v3193 = vand.u32 %v2148, 4294901760
        %3194 = vmatpush1.msra.mxu0 %v3193
        %3195 = vmatprep.subr.mxu0 0.0
        %v3196 = vand.u32 %v2150, 4294901760
        %3197 = vmatpush1.msra.mxu0 %v3196
        %3198 = vmatprep.subr.mxu0 0.0
        %v3199 = vand.u32 %v2152, 4294901760
        %3200 = vmatpush1.msra.mxu0 %v3199
        %3201 = vmatprep.subr.mxu0 0.0
        %v3202 = vand.u32 %v2154, 4294901760
        %3203 = vmatpush1.msra.mxu0 %v3202
        %3204 = vmatprep.subr.mxu0 0.0
        %v3205 = vand.u32 %v2156, 4294901760
        %3206 = vmatpush1.msra.mxu0 %v3205
        %3207 = vmatprep.subr.mxu0 0.0
        %v3208 = vand.u32 %v2158, 4294901760
        %3209 = vmatpush1.msra.mxu0 %v3208
        %3210 = vmatprep.subr.mxu0 0.0
        %v3211 = vand.u32 %v2160, 4294901760
        %3212 = vmatpush1.msra.mxu0 %v3211
        %3213 = vmatprep.subr.mxu0 0.0
        %v3214 = vand.u32 %v2162, 4294901760
        %3215 = vmatpush1.msra.mxu0 %v3214
        %3216 = vmatprep.subr.mxu0 0.0
        %v3217 = vand.u32 %v2164, 4294901760
        %3218 = vmatpush1.msra.mxu0 %v3217
        %3219 = vmatprep.subr.mxu0 0.0
        %v3220 = vand.u32 %v2166, 4294901760
        %3221 = vmatpush1.msra.mxu0 %v3220
        %3222 = vmatprep.subr.mxu0 0.0
        %v3223 = vand.u32 %v2168, 4294901760
        %3224 = vmatpush1.msra.mxu0 %v3223
        %3225 = vmatprep.subr.mxu0 0.0
        %v3226 = vand.u32 %v2170, 4294901760
        %3227 = vmatpush1.msra.mxu0 %v3226
        %v3228 = vand.u32 %v2180, 4294901760
        %3229 = vmatprep.mubr.f32.mxu0 %v3228
        %v3230 = vand.u32 %v2179, 4294901760
        %3231 = vmatmul.mubr.f32.gmra.mrb[0].mxu0 %v3230
        %v3232 = vpop.f32.mrb[0].mxu0
        %v3233 = vadd.f32 %v3108, %v3232
        %v3234 = vpop.f32.mrb[0].mxu0
        %v3235 = vand.u32 %v2183, 4294901760
        %3236 = vmatprep.mubr.f32.mxu0 %v3235
        %v3237 = vand.u32 %v2182, 4294901760
        %3238 = vmatmul.mubr.f32.gmra.mrb[0].mxu0 %v3237
        %v3239 = vpop.f32.mrb[0].mxu0
        %v3240 = vadd.f32 %v3115, %v3239
        %v3241 = vpop.f32.mrb[0].mxu0
        %v3242 = vand.u32 %v2186, 4294901760
        %3243 = vmatprep.mubr.f32.mxu0 %v3242
        %v3244 = vand.u32 %v2185, 4294901760
        %3245 = vmatmul.mubr.f32.gmra.mrb[0].mxu0 %v3244
        %v3246 = vpop.f32.mrb[0].mxu0
        %v3247 = vadd.f32 %v3122, %v3246
        %v3248 = vpop.f32.mrb[0].mxu0
        %v3249 = vand.u32 %v2189, 4294901760
        %3250 = vmatprep.mubr.f32.mxu0 %v3249
        %v3251 = vand.u32 %v2188, 4294901760
        %3252 = vmatmul.mubr.f32.gmra.mrb[0].mxu0 %v3251
        %v3253 = vpop.f32.mrb[0].mxu0
        %v3254 = vadd.f32 %v3129, %v3253
        %v3255 = vpop.f32.mrb[0].mxu0
        %3256 = vdwg.mxu0
        %3257 = vmatprep.subr.mxu0 0.0
        %v3258 = vand.u32 %v2172, 4294901760
        %3259 = vmatpush1.msra.mxu0 %v3258
        %3260 = vmatprep.subr.mxu0 0.0
        %v3261 = vand.u32 %v2174, 4294901760
        %3262 = vmatpush1.msra.mxu0 %v3261
        %3263 = vmatprep.subr.mxu0 0.0
        %v3264 = vand.u32 %v2176, 4294901760
        %3265 = vmatpush1.msra.mxu0 %v3264
        %3266 = vmatprep.subr.mxu0 0.0
        %v3267 = vand.u32 %v2178, 4294901760
        %3268 = vmatpush1.msra.mxu0 %v3267
        %3269 = vmatprep.subr.mxu0 0.0
        %3270 = vmatpush1.msra.mxu0 0.0
        %3271 = vmatprep.subr.mxu0 0.0
        %3272 = vmatpush1.msra.mxu0 0.0
        %3273 = vmatprep.subr.mxu0 0.0
        %3274 = vmatpush1.msra.mxu0 0.0
        %3275 = vmatprep.subr.mxu0 0.0
        %3276 = vmatpush1.msra.mxu0 0.0
        %3277 = vmatprep.subr.mxu0 0.0
        %3278 = vmatpush1.msra.mxu0 0.0
        %3279 = vmatprep.subr.mxu0 0.0
        %3280 = vmatpush1.msra.mxu0 0.0
        %3281 = vmatprep.subr.mxu0 0.0
        %3282 = vmatpush1.msra.mxu0 0.0
        %3283 = vmatprep.subr.mxu0 0.0
        %3284 = vmatpush1.msra.mxu0 0.0
        %3285 = vmatprep.subr.mxu0 0.0
        %3286 = vmatpush1.msra.mxu0 0.0
        %3287 = vmatprep.subr.mxu0 0.0
        %3288 = vmatpush1.msra.mxu0 0.0
        %3289 = vmatprep.subr.mxu0 0.0
        %3290 = vmatpush1.msra.mxu0 0.0
        %3291 = vmatprep.subr.mxu0 0.0
        %3292 = vmatpush1.msra.mxu0 0.0
        %3293 = vmatprep.subr.mxu0 0.0
        %3294 = vmatpush1.msra.mxu0 0.0
        %3295 = vmatprep.subr.mxu0 0.0
        %3296 = vmatpush1.msra.mxu0 0.0
        %3297 = vmatprep.subr.mxu0 0.0
        %3298 = vmatpush1.msra.mxu0 0.0
        %3299 = vmatprep.subr.mxu0 0.0
        %3300 = vmatpush1.msra.mxu0 0.0
        %3301 = vmatprep.subr.mxu0 0.0
        %3302 = vmatpush1.msra.mxu0 0.0
        %3303 = vmatprep.subr.mxu0 0.0
        %3304 = vmatpush1.msra.mxu0 0.0
        %3305 = vmatprep.subr.mxu0 0.0
        %3306 = vmatpush1.msra.mxu0 0.0
        %3307 = vmatprep.subr.mxu0 0.0
        %3308 = vmatpush1.msra.mxu0 0.0
        %3309 = vmatprep.subr.mxu0 0.0
        %3310 = vmatpush1.msra.mxu0 0.0
        %3311 = vmatprep.subr.mxu0 0.0
        %3312 = vmatpush1.msra.mxu0 0.0
        %3313 = vmatprep.subr.mxu0 0.0
        %3314 = vmatpush1.msra.mxu0 0.0
        %3315 = vmatprep.subr.mxu0 0.0
        %3316 = vmatpush1.msra.mxu0 0.0
        %3317 = vmatprep.subr.mxu0 0.0
        %3318 = vmatpush1.msra.mxu0 0.0
        %3319 = vmatprep.subr.mxu0 0.0
        %3320 = vmatpush1.msra.mxu0 0.0
        %3321 = vmatprep.subr.mxu0 0.0
        %3322 = vmatpush1.msra.mxu0 0.0
        %3323 = vmatprep.subr.mxu0 0.0
        %3324 = vmatpush1.msra.mxu0 0.0
        %3325 = vmatprep.mubr.f32.mxu0 0.0
        %v3326 = vand.u32 %v2216, 4294901760
        %v3327 = vsub.f32 %v2216, %v3326
        %v3328 = vand.u32 %v3327, 4294901760
        %v3329 = vsub.f32 %v3327, %v3328
        %v3330 = vand.u32 %v3329, 4294901760
        %3331 = vmatmul.mubr.f32.gmra.mrb[0].mxu0 %v3330
        %v3332 = vpop.f32.mrb[0].mxu0
        %v3333 = vadd.f32 %v3233, %v3332
        %v3334 = vpop.f32.mrb[0].mxu0
        %3335 = vmatprep.mubr.f32.mxu0 0.0
        %v3336 = vand.u32 %v2219, 4294901760
        %v3337 = vsub.f32 %v2219, %v3336
        %v3338 = vand.u32 %v3337, 4294901760
        %v3339 = vsub.f32 %v3337, %v3338
        %v3340 = vand.u32 %v3339, 4294901760
        %3341 = vmatmul.mubr.f32.gmra.mrb[0].mxu0 %v3340
        %v3342 = vpop.f32.mrb[0].mxu0
        %v3343 = vadd.f32 %v3240, %v3342
        %v3344 = vpop.f32.mrb[0].mxu0
        %3345 = vmatprep.mubr.f32.mxu0 0.0
        %v3346 = vand.u32 %v2222, 4294901760
        %v3347 = vsub.f32 %v2222, %v3346
        %v3348 = vand.u32 %v3347, 4294901760
        %v3349 = vsub.f32 %v3347, %v3348
        %v3350 = vand.u32 %v3349, 4294901760
        %3351 = vmatmul.mubr.f32.gmra.mrb[0].mxu0 %v3350
        %v3352 = vpop.f32.mrb[0].mxu0
        %v3353 = vadd.f32 %v3247, %v3352
        %v3354 = vpop.f32.mrb[0].mxu0
        %3355 = vmatprep.mubr.f32.mxu0 0.0
        %v3356 = vand.u32 %v2225, 4294901760
        %v3357 = vsub.f32 %v2225, %v3356
        %v3358 = vand.u32 %v3357, 4294901760
        %v3359 = vsub.f32 %v3357, %v3358
        %v3360 = vand.u32 %v3359, 4294901760
        %3361 = vmatmul.mubr.f32.gmra.mrb[0].mxu0 %v3360
        %v3362 = vpop.f32.mrb[0].mxu0
        %v3363 = vadd.f32 %v3254, %v3362
        %v3364 = vpop.f32.mrb[0].mxu0
        %3365 = vdwg.mxu0
        %3366 = vmatprep.subr.mxu0 0.0
        %v3367 = vand.u32 %v2172, 4294901760
        %v3368 = vsub.f32 %v2172, %v3367
        %v3369 = vand.u32 %v3368, 4294901760
        %v3370 = vsub.f32 %v3368, %v3369
        %v3371 = vand.u32 %v3370, 4294901760
        %3372 = vmatpush1.msra.mxu0 %v3371
        %3373 = vmatprep.subr.mxu0 0.0
        %v3374 = vand.u32 %v2174, 4294901760
        %v3375 = vsub.f32 %v2174, %v3374
        %v3376 = vand.u32 %v3375, 4294901760
        %v3377 = vsub.f32 %v3375, %v3376
        %v3378 = vand.u32 %v3377, 4294901760
        %3379 = vmatpush1.msra.mxu0 %v3378
        %3380 = vmatprep.subr.mxu0 0.0
        %v3381 = vand.u32 %v2176, 4294901760
        %v3382 = vsub.f32 %v2176, %v3381
        %v3383 = vand.u32 %v3382, 4294901760
        %v3384 = vsub.f32 %v3382, %v3383
        %v3385 = vand.u32 %v3384, 4294901760
        %3386 = vmatpush1.msra.mxu0 %v3385
        %3387 = vmatprep.subr.mxu0 0.0
        %v3388 = vand.u32 %v2178, 4294901760
        %v3389 = vsub.f32 %v2178, %v3388
        %v3390 = vand.u32 %v3389, 4294901760
        %v3391 = vsub.f32 %v3389, %v3390
        %v3392 = vand.u32 %v3391, 4294901760
        %3393 = vmatpush1.msra.mxu0 %v3392
        %3394 = vmatprep.subr.mxu0 0.0
        %3395 = vmatpush1.msra.mxu0 0.0
        %3396 = vmatprep.subr.mxu0 0.0
        %3397 = vmatpush1.msra.mxu0 0.0
        %3398 = vmatprep.subr.mxu0 0.0
        %3399 = vmatpush1.msra.mxu0 0.0
        %3400 = vmatprep.subr.mxu0 0.0
        %3401 = vmatpush1.msra.mxu0 0.0
        %3402 = vmatprep.subr.mxu0 0.0
        %3403 = vmatpush1.msra.mxu0 0.0
        %3404 = vmatprep.subr.mxu0 0.0
        %3405 = vmatpush1.msra.mxu0 0.0
        %3406 = vmatprep.subr.mxu0 0.0
        %3407 = vmatpush1.msra.mxu0 0.0
        %3408 = vmatprep.subr.mxu0 0.0
        %3409 = vmatpush1.msra.mxu0 0.0
        %3410 = vmatprep.subr.mxu0 0.0
        %3411 = vmatpush1.msra.mxu0 0.0
        %3412 = vmatprep.subr.mxu0 0.0
        %3413 = vmatpush1.msra.mxu0 0.0
        %3414 = vmatprep.subr.mxu0 0.0
        %3415 = vmatpush1.msra.mxu0 0.0
        %3416 = vmatprep.subr.mxu0 0.0
        %3417 = vmatpush1.msra.mxu0 0.0
        %3418 = vmatprep.subr.mxu0 0.0
        %3419 = vmatpush1.msra.mxu0 0.0
        %3420 = vmatprep.subr.mxu0 0.0
        %3421 = vmatpush1.msra.mxu0 0.0
        %3422 = vmatprep.subr.mxu0 0.0
        %3423 = vmatpush1.msra.mxu0 0.0
        %3424 = vmatprep.subr.mxu0 0.0
        %3425 = vmatpush1.msra.mxu0 0.0
        %3426 = vmatprep.subr.mxu0 0.0
        %3427 = vmatpush1.msra.mxu0 0.0
        %3428 = vmatprep.subr.mxu0 0.0
        %3429 = vmatpush1.msra.mxu0 0.0
        %3430 = vmatprep.subr.mxu0 0.0
        %3431 = vmatpush1.msra.mxu0 0.0
        %3432 = vmatprep.subr.mxu0 0.0
        %3433 = vmatpush1.msra.mxu0 0.0
        %3434 = vmatprep.subr.mxu0 0.0
        %3435 = vmatpush1.msra.mxu0 0.0
        %3436 = vmatprep.subr.mxu0 0.0
        %3437 = vmatpush1.msra.mxu0 0.0
        %3438 = vmatprep.subr.mxu0 0.0
        %3439 = vmatpush1.msra.mxu0 0.0
        %3440 = vmatprep.subr.mxu0 0.0
        %3441 = vmatpush1.msra.mxu0 0.0
        %3442 = vmatprep.subr.mxu0 0.0
        %3443 = vmatpush1.msra.mxu0 0.0
        %3444 = vmatprep.subr.mxu0 0.0
        %3445 = vmatpush1.msra.mxu0 0.0
        %3446 = vmatprep.subr.mxu0 0.0
        %3447 = vmatpush1.msra.mxu0 0.0
        %3448 = vmatprep.subr.mxu0 0.0
        %3449 = vmatpush1.msra.mxu0 0.0
        %3450 = vmatprep.mubr.f32.mxu0 0.0
        %v3451 = vand.u32 %v2216, 4294901760
        %3452 = vmatmul.mubr.f32.gmra.mrb[0].mxu0 %v3451
        %v3453 = vpop.f32.mrb[0].mxu0
        %v3454 = vadd.f32 %v3333, %v3453
        %v3455 = vpop.f32.mrb[0].mxu0
        %3456 = vmatprep.mubr.f32.mxu0 0.0
        %v3457 = vand.u32 %v2219, 4294901760
        %3458 = vmatmul.mubr.f32.gmra.mrb[0].mxu0 %v3457
        %v3459 = vpop.f32.mrb[0].mxu0
        %v3460 = vadd.f32 %v3343, %v3459
        %v3461 = vpop.f32.mrb[0].mxu0
        %3462 = vmatprep.mubr.f32.mxu0 0.0
        %v3463 = vand.u32 %v2222, 4294901760
        %3464 = vmatmul.mubr.f32.gmra.mrb[0].mxu0 %v3463
        %v3465 = vpop.f32.mrb[0].mxu0
        %v3466 = vadd.f32 %v3353, %v3465
        %v3467 = vpop.f32.mrb[0].mxu0
        %3468 = vmatprep.mubr.f32.mxu0 0.0
        %v3469 = vand.u32 %v2225, 4294901760
        %3470 = vmatmul.mubr.f32.gmra.mrb[0].mxu0 %v3469
        %v3471 = vpop.f32.mrb[0].mxu0
        %v3472 = vadd.f32 %v3363, %v3471
        %v3473 = vpop.f32.mrb[0].mxu0
        %3474 = vdwg.mxu0
        %3475 = vmatprep.subr.mxu0 0.0
        %v3476 = vand.u32 %v2172, 4294901760
        %v3477 = vsub.f32 %v2172, %v3476
        %3478 = vmatpush1.msra.mxu0 %v3477
        %3479 = vmatprep.subr.mxu0 0.0
        %v3480 = vand.u32 %v2174, 4294901760
        %v3481 = vsub.f32 %v2174, %v3480
        %3482 = vmatpush1.msra.mxu0 %v3481
        %3483 = vmatprep.subr.mxu0 0.0
        %v3484 = vand.u32 %v2176, 4294901760
        %v3485 = vsub.f32 %v2176, %v3484
        %3486 = vmatpush1.msra.mxu0 %v3485
        %3487 = vmatprep.subr.mxu0 0.0
        %v3488 = vand.u32 %v2178, 4294901760
        %v3489 = vsub.f32 %v2178, %v3488
        %3490 = vmatpush1.msra.mxu0 %v3489
        %3491 = vmatprep.subr.mxu0 0.0
        %3492 = vmatpush1.msra.mxu0 0.0
        %3493 = vmatprep.subr.mxu0 0.0
        %3494 = vmatpush1.msra.mxu0 0.0
        %3495 = vmatprep.subr.mxu0 0.0
        %3496 = vmatpush1.msra.mxu0 0.0
        %3497 = vmatprep.subr.mxu0 0.0
        %3498 = vmatpush1.msra.mxu0 0.0
        %3499 = vmatprep.subr.mxu0 0.0
        %3500 = vmatpush1.msra.mxu0 0.0
        %3501 = vmatprep.subr.mxu0 0.0
        %3502 = vmatpush1.msra.mxu0 0.0
        %3503 = vmatprep.subr.mxu0 0.0
        %3504 = vmatpush1.msra.mxu0 0.0
        %3505 = vmatprep.subr.mxu0 0.0
        %3506 = vmatpush1.msra.mxu0 0.0
        %3507 = vmatprep.subr.mxu0 0.0
        %3508 = vmatpush1.msra.mxu0 0.0
        %3509 = vmatprep.subr.mxu0 0.0
        %3510 = vmatpush1.msra.mxu0 0.0
        %3511 = vmatprep.subr.mxu0 0.0
        %3512 = vmatpush1.msra.mxu0 0.0
        %3513 = vmatprep.subr.mxu0 0.0
        %3514 = vmatpush1.msra.mxu0 0.0
        %3515 = vmatprep.subr.mxu0 0.0
        %3516 = vmatpush1.msra.mxu0 0.0
        %3517 = vmatprep.subr.mxu0 0.0
        %3518 = vmatpush1.msra.mxu0 0.0
        %3519 = vmatprep.subr.mxu0 0.0
        %3520 = vmatpush1.msra.mxu0 0.0
        %3521 = vmatprep.subr.mxu0 0.0
        %3522 = vmatpush1.msra.mxu0 0.0
        %3523 = vmatprep.subr.mxu0 0.0
        %3524 = vmatpush1.msra.mxu0 0.0
        %3525 = vmatprep.subr.mxu0 0.0
        %3526 = vmatpush1.msra.mxu0 0.0
        %3527 = vmatprep.subr.mxu0 0.0
        %3528 = vmatpush1.msra.mxu0 0.0
        %3529 = vmatprep.subr.mxu0 0.0
        %3530 = vmatpush1.msra.mxu0 0.0
        %3531 = vmatprep.subr.mxu0 0.0
        %3532 = vmatpush1.msra.mxu0 0.0
        %3533 = vmatprep.subr.mxu0 0.0
        %3534 = vmatpush1.msra.mxu0 0.0
        %3535 = vmatprep.subr.mxu0 0.0
        %3536 = vmatpush1.msra.mxu0 0.0
        %3537 = vmatprep.subr.mxu0 0.0
        %3538 = vmatpush1.msra.mxu0 0.0
        %3539 = vmatprep.subr.mxu0 0.0
        %3540 = vmatpush1.msra.mxu0 0.0
        %3541 = vmatprep.subr.mxu0 0.0
        %3542 = vmatpush1.msra.mxu0 0.0
        %3543 = vmatprep.subr.mxu0 0.0
        %3544 = vmatpush1.msra.mxu0 0.0
        %3545 = vmatprep.subr.mxu0 0.0
        %3546 = vmatpush1.msra.mxu0 0.0
        %3547 = vmatprep.mubr.f32.mxu0 0.0
        %v3548 = vand.u32 %v2216, 4294901760
        %v3549 = vsub.f32 %v2216, %v3548
        %3550 = vmatmul.mubr.f32.gmra.mrb[0].mxu0 %v3549
        %v3551 = vpop.f32.mrb[0].mxu0
        %v3552 = vadd.f32 %v3454, %v3551
        %v3553 = vpop.f32.mrb[0].mxu0
        %3554 = vmatprep.mubr.f32.mxu0 0.0
        %v3555 = vand.u32 %v2219, 4294901760
        %v3556 = vsub.f32 %v2219, %v3555
        %3557 = vmatmul.mubr.f32.gmra.mrb[0].mxu0 %v3556
        %v3558 = vpop.f32.mrb[0].mxu0
        %v3559 = vadd.f32 %v3460, %v3558
        %v3560 = vpop.f32.mrb[0].mxu0
        %3561 = vmatprep.mubr.f32.mxu0 0.0
        %v3562 = vand.u32 %v2222, 4294901760
        %v3563 = vsub.f32 %v2222, %v3562
        %3564 = vmatmul.mubr.f32.gmra.mrb[0].mxu0 %v3563
        %v3565 = vpop.f32.mrb[0].mxu0
        %v3566 = vadd.f32 %v3466, %v3565
        %v3567 = vpop.f32.mrb[0].mxu0
        %3568 = vmatprep.mubr.f32.mxu0 0.0
        %v3569 = vand.u32 %v2225, 4294901760
        %v3570 = vsub.f32 %v2225, %v3569
        %3571 = vmatmul.mubr.f32.gmra.mrb[0].mxu0 %v3570
        %v3572 = vpop.f32.mrb[0].mxu0
        %v3573 = vadd.f32 %v3472, %v3572
        %v3574 = vpop.f32.mrb[0].mxu0
        %3575 = vdwg.mxu0
        %3576 = vmatprep.subr.mxu0 0.0
        %v3577 = vand.u32 %v2172, 4294901760
        %3578 = vmatpush1.msra.mxu0 %v3577
        %3579 = vmatprep.subr.mxu0 0.0
        %v3580 = vand.u32 %v2174, 4294901760
        %3581 = vmatpush1.msra.mxu0 %v3580
        %3582 = vmatprep.subr.mxu0 0.0
        %v3583 = vand.u32 %v2176, 4294901760
        %3584 = vmatpush1.msra.mxu0 %v3583
        %3585 = vmatprep.subr.mxu0 0.0
        %v3586 = vand.u32 %v2178, 4294901760
        %3587 = vmatpush1.msra.mxu0 %v3586
        %3588 = vmatprep.subr.mxu0 0.0
        %3589 = vmatpush1.msra.mxu0 0.0
        %3590 = vmatprep.subr.mxu0 0.0
        %3591 = vmatpush1.msra.mxu0 0.0
        %3592 = vmatprep.subr.mxu0 0.0
        %3593 = vmatpush1.msra.mxu0 0.0
        %3594 = vmatprep.subr.mxu0 0.0
        %3595 = vmatpush1.msra.mxu0 0.0
        %3596 = vmatprep.subr.mxu0 0.0
        %3597 = vmatpush1.msra.mxu0 0.0
        %3598 = vmatprep.subr.mxu0 0.0
        %3599 = vmatpush1.msra.mxu0 0.0
        %3600 = vmatprep.subr.mxu0 0.0
        %3601 = vmatpush1.msra.mxu0 0.0
        %3602 = vmatprep.subr.mxu0 0.0
        %3603 = vmatpush1.msra.mxu0 0.0
        %3604 = vmatprep.subr.mxu0 0.0
        %3605 = vmatpush1.msra.mxu0 0.0
        %3606 = vmatprep.subr.mxu0 0.0
        %3607 = vmatpush1.msra.mxu0 0.0
        %3608 = vmatprep.subr.mxu0 0.0
        %3609 = vmatpush1.msra.mxu0 0.0
        %3610 = vmatprep.subr.mxu0 0.0
        %3611 = vmatpush1.msra.mxu0 0.0
        %3612 = vmatprep.subr.mxu0 0.0
        %3613 = vmatpush1.msra.mxu0 0.0
        %3614 = vmatprep.subr.mxu0 0.0
        %3615 = vmatpush1.msra.mxu0 0.0
        %3616 = vmatprep.subr.mxu0 0.0
        %3617 = vmatpush1.msra.mxu0 0.0
        %3618 = vmatprep.subr.mxu0 0.0
        %3619 = vmatpush1.msra.mxu0 0.0
        %3620 = vmatprep.subr.mxu0 0.0
        %3621 = vmatpush1.msra.mxu0 0.0
        %3622 = vmatprep.subr.mxu0 0.0
        %3623 = vmatpush1.msra.mxu0 0.0
        %3624 = vmatprep.subr.mxu0 0.0
        %3625 = vmatpush1.msra.mxu0 0.0
        %3626 = vmatprep.subr.mxu0 0.0
        %3627 = vmatpush1.msra.mxu0 0.0
        %3628 = vmatprep.subr.mxu0 0.0
        %3629 = vmatpush1.msra.mxu0 0.0
        %3630 = vmatprep.subr.mxu0 0.0
        %3631 = vmatpush1.msra.mxu0 0.0
        %3632 = vmatprep.subr.mxu0 0.0
        %3633 = vmatpush1.msra.mxu0 0.0
        %3634 = vmatprep.subr.mxu0 0.0
        %3635 = vmatpush1.msra.mxu0 0.0
        %3636 = vmatprep.subr.mxu0 0.0
        %3637 = vmatpush1.msra.mxu0 0.0
        %3638 = vmatprep.subr.mxu0 0.0
        %3639 = vmatpush1.msra.mxu0 0.0
        %3640 = vmatprep.subr.mxu0 0.0
        %3641 = vmatpush1.msra.mxu0 0.0
        %3642 = vmatprep.subr.mxu0 0.0
        %3643 = vmatpush1.msra.mxu0 0.0
        %3644 = vmatprep.mubr.f32.mxu0 0.0
        %v3645 = vand.u32 %v2216, 4294901760
        %v3646 = vsub.f32 %v2216, %v3645
        %v3647 = vand.u32 %v3646, 4294901760
        %3648 = vmatmul.mubr.f32.gmra.mrb[0].mxu0 %v3647
        %v3649 = vpop.f32.mrb[0].mxu0
        %v3650 = vadd.f32 %v3552, %v3649
        %v3651 = vpop.f32.mrb[0].mxu0
        %3652 = vmatprep.mubr.f32.mxu0 0.0
        %v3653 = vand.u32 %v2219, 4294901760
        %v3654 = vsub.f32 %v2219, %v3653
        %v3655 = vand.u32 %v3654, 4294901760
        %3656 = vmatmul.mubr.f32.gmra.mrb[0].mxu0 %v3655
        %v3657 = vpop.f32.mrb[0].mxu0
        %v3658 = vadd.f32 %v3559, %v3657
        %v3659 = vpop.f32.mrb[0].mxu0
        %3660 = vmatprep.mubr.f32.mxu0 0.0
        %v3661 = vand.u32 %v2222, 4294901760
        %v3662 = vsub.f32 %v2222, %v3661
        %v3663 = vand.u32 %v3662, 4294901760
        %3664 = vmatmul.mubr.f32.gmra.mrb[0].mxu0 %v3663
        %v3665 = vpop.f32.mrb[0].mxu0
        %v3666 = vadd.f32 %v3566, %v3665
        %v3667 = vpop.f32.mrb[0].mxu0
        %3668 = vmatprep.mubr.f32.mxu0 0.0
        %v3669 = vand.u32 %v2225, 4294901760
        %v3670 = vsub.f32 %v2225, %v3669
        %v3671 = vand.u32 %v3670, 4294901760
        %3672 = vmatmul.mubr.f32.gmra.mrb[0].mxu0 %v3671
        %v3673 = vpop.f32.mrb[0].mxu0
        %v3674 = vadd.f32 %v3573, %v3673
        %v3675 = vpop.f32.mrb[0].mxu0
        %3676 = vdwg.mxu0
        %3677 = vmatprep.subr.mxu0 0.0
        %v3678 = vand.u32 %v2172, 4294901760
        %v3679 = vsub.f32 %v2172, %v3678
        %v3680 = vand.u32 %v3679, 4294901760
        %3681 = vmatpush1.msra.mxu0 %v3680
        %3682 = vmatprep.subr.mxu0 0.0
        %v3683 = vand.u32 %v2174, 4294901760
        %v3684 = vsub.f32 %v2174, %v3683
        %v3685 = vand.u32 %v3684, 4294901760
        %3686 = vmatpush1.msra.mxu0 %v3685
        %3687 = vmatprep.subr.mxu0 0.0
        %v3688 = vand.u32 %v2176, 4294901760
        %v3689 = vsub.f32 %v2176, %v3688
        %v3690 = vand.u32 %v3689, 4294901760
        %3691 = vmatpush1.msra.mxu0 %v3690
        %3692 = vmatprep.subr.mxu0 0.0
        %v3693 = vand.u32 %v2178, 4294901760
        %v3694 = vsub.f32 %v2178, %v3693
        %v3695 = vand.u32 %v3694, 4294901760
        %3696 = vmatpush1.msra.mxu0 %v3695
        %3697 = vmatprep.subr.mxu0 0.0
        %3698 = vmatpush1.msra.mxu0 0.0
        %3699 = vmatprep.subr.mxu0 0.0
        %3700 = vmatpush1.msra.mxu0 0.0
        %3701 = vmatprep.subr.mxu0 0.0
        %3702 = vmatpush1.msra.mxu0 0.0
        %3703 = vmatprep.subr.mxu0 0.0
        %3704 = vmatpush1.msra.mxu0 0.0
        %3705 = vmatprep.subr.mxu0 0.0
        %3706 = vmatpush1.msra.mxu0 0.0
        %3707 = vmatprep.subr.mxu0 0.0
        %3708 = vmatpush1.msra.mxu0 0.0
        %3709 = vmatprep.subr.mxu0 0.0
        %3710 = vmatpush1.msra.mxu0 0.0
        %3711 = vmatprep.subr.mxu0 0.0
        %3712 = vmatpush1.msra.mxu0 0.0
        %3713 = vmatprep.subr.mxu0 0.0
        %3714 = vmatpush1.msra.mxu0 0.0
        %3715 = vmatprep.subr.mxu0 0.0
        %3716 = vmatpush1.msra.mxu0 0.0
        %3717 = vmatprep.subr.mxu0 0.0
        %3718 = vmatpush1.msra.mxu0 0.0
        %3719 = vmatprep.subr.mxu0 0.0
        %3720 = vmatpush1.msra.mxu0 0.0
        %3721 = vmatprep.subr.mxu0 0.0
        %3722 = vmatpush1.msra.mxu0 0.0
        %3723 = vmatprep.subr.mxu0 0.0
        %3724 = vmatpush1.msra.mxu0 0.0
        %3725 = vmatprep.subr.mxu0 0.0
        %3726 = vmatpush1.msra.mxu0 0.0
        %3727 = vmatprep.subr.mxu0 0.0
        %3728 = vmatpush1.msra.mxu0 0.0
        %3729 = vmatprep.subr.mxu0 0.0
        %3730 = vmatpush1.msra.mxu0 0.0
        %3731 = vmatprep.subr.mxu0 0.0
        %3732 = vmatpush1.msra.mxu0 0.0
        %3733 = vmatprep.subr.mxu0 0.0
        %3734 = vmatpush1.msra.mxu0 0.0
        %3735 = vmatprep.subr.mxu0 0.0
        %3736 = vmatpush1.msra.mxu0 0.0
        %3737 = vmatprep.subr.mxu0 0.0
        %3738 = vmatpush1.msra.mxu0 0.0
        %3739 = vmatprep.subr.mxu0 0.0
        %3740 = vmatpush1.msra.mxu0 0.0
        %3741 = vmatprep.subr.mxu0 0.0
        %3742 = vmatpush1.msra.mxu0 0.0
        %3743 = vmatprep.subr.mxu0 0.0
        %3744 = vmatpush1.msra.mxu0 0.0
        %3745 = vmatprep.subr.mxu0 0.0
        %3746 = vmatpush1.msra.mxu0 0.0
        %3747 = vmatprep.subr.mxu0 0.0
        %3748 = vmatpush1.msra.mxu0 0.0
        %3749 = vmatprep.subr.mxu0 0.0
        %3750 = vmatpush1.msra.mxu0 0.0
        %3751 = vmatprep.subr.mxu0 0.0
        %3752 = vmatpush1.msra.mxu0 0.0
        %3753 = vmatprep.mubr.f32.mxu0 0.0
        %v3754 = vand.u32 %v2216, 4294901760
        %3755 = vmatmul.mubr.f32.gmra.mrb[0].mxu0 %v3754
        %v3756 = vpop.f32.mrb[0].mxu0
        %v3757 = vadd.f32 %v3650, %v3756
        %v3758 = vpop.f32.mrb[0].mxu0
        %3759 = vmatprep.mubr.f32.mxu0 0.0
        %v3760 = vand.u32 %v2219, 4294901760
        %3761 = vmatmul.mubr.f32.gmra.mrb[0].mxu0 %v3760
        %v3762 = vpop.f32.mrb[0].mxu0
        %v3763 = vadd.f32 %v3658, %v3762
        %v3764 = vpop.f32.mrb[0].mxu0
        %3765 = vmatprep.mubr.f32.mxu0 0.0
        %v3766 = vand.u32 %v2222, 4294901760
        %3767 = vmatmul.mubr.f32.gmra.mrb[0].mxu0 %v3766
        %v3768 = vpop.f32.mrb[0].mxu0
        %v3769 = vadd.f32 %v3666, %v3768
        %v3770 = vpop.f32.mrb[0].mxu0
        %3771 = vmatprep.mubr.f32.mxu0 0.0
        %v3772 = vand.u32 %v2225, 4294901760
        %3773 = vmatmul.mubr.f32.gmra.mrb[0].mxu0 %v3772
        %v3774 = vpop.f32.mrb[0].mxu0
        %v3775 = vadd.f32 %v3674, %v3774
        %v3776 = vpop.f32.mrb[0].mxu0
        %3777 = vdwg.mxu0
        %3778 = vmatprep.subr.mxu0 0.0
        %v3779 = vand.u32 %v2172, 4294901760
        %3780 = vmatpush1.msra.mxu0 %v3779
        %3781 = vmatprep.subr.mxu0 0.0
        %v3782 = vand.u32 %v2174, 4294901760
        %3783 = vmatpush1.msra.mxu0 %v3782
        %3784 = vmatprep.subr.mxu0 0.0
        %v3785 = vand.u32 %v2176, 4294901760
        %3786 = vmatpush1.msra.mxu0 %v3785
        %3787 = vmatprep.subr.mxu0 0.0
        %v3788 = vand.u32 %v2178, 4294901760
        %3789 = vmatpush1.msra.mxu0 %v3788
        %3790 = vmatprep.subr.mxu0 0.0
        %3791 = vmatpush1.msra.mxu0 0.0
        %3792 = vmatprep.subr.mxu0 0.0
        %3793 = vmatpush1.msra.mxu0 0.0
        %3794 = vmatprep.subr.mxu0 0.0
        %3795 = vmatpush1.msra.mxu0 0.0
        %3796 = vmatprep.subr.mxu0 0.0
        %3797 = vmatpush1.msra.mxu0 0.0
        %3798 = vmatprep.subr.mxu0 0.0
        %3799 = vmatpush1.msra.mxu0 0.0
        %3800 = vmatprep.subr.mxu0 0.0
        %3801 = vmatpush1.msra.mxu0 0.0
        %3802 = vmatprep.subr.mxu0 0.0
        %3803 = vmatpush1.msra.mxu0 0.0
        %3804 = vmatprep.subr.mxu0 0.0
        %3805 = vmatpush1.msra.mxu0 0.0
        %3806 = vmatprep.subr.mxu0 0.0
        %3807 = vmatpush1.msra.mxu0 0.0
        %3808 = vmatprep.subr.mxu0 0.0
        %3809 = vmatpush1.msra.mxu0 0.0
        %3810 = vmatprep.subr.mxu0 0.0
        %3811 = vmatpush1.msra.mxu0 0.0
        %3812 = vmatprep.subr.mxu0 0.0
        %3813 = vmatpush1.msra.mxu0 0.0
        %3814 = vmatprep.subr.mxu0 0.0
        %3815 = vmatpush1.msra.mxu0 0.0
        %3816 = vmatprep.subr.mxu0 0.0
        %3817 = vmatpush1.msra.mxu0 0.0
        %3818 = vmatprep.subr.mxu0 0.0
        %3819 = vmatpush1.msra.mxu0 0.0
        %3820 = vmatprep.subr.mxu0 0.0
        %3821 = vmatpush1.msra.mxu0 0.0
        %3822 = vmatprep.subr.mxu0 0.0
        %3823 = vmatpush1.msra.mxu0 0.0
        %3824 = vmatprep.subr.mxu0 0.0
        %3825 = vmatpush1.msra.mxu0 0.0
        %3826 = vmatprep.subr.mxu0 0.0
        %3827 = vmatpush1.msra.mxu0 0.0
        %3828 = vmatprep.subr.mxu0 0.0
        %3829 = vmatpush1.msra.mxu0 0.0
        %3830 = vmatprep.subr.mxu0 0.0
        %3831 = vmatpush1.msra.mxu0 0.0
        %3832 = vmatprep.subr.mxu0 0.0
        %3833 = vmatpush1.msra.mxu0 0.0
        %3834 = vmatprep.subr.mxu0 0.0
        %3835 = vmatpush1.msra.mxu0 0.0
        %3836 = vmatprep.subr.mxu0 0.0
        %3837 = vmatpush1.msra.mxu0 0.0
        %3838 = vmatprep.subr.mxu0 0.0
        %3839 = vmatpush1.msra.mxu0 0.0
        %3840 = vmatprep.subr.mxu0 0.0
        %3841 = vmatpush1.msra.mxu0 0.0
        %3842 = vmatprep.subr.mxu0 0.0
        %3843 = vmatpush1.msra.mxu0 0.0
        %3844 = vmatprep.subr.mxu0 0.0
        %3845 = vmatpush1.msra.mxu0 0.0
        %3846 = vmatprep.mubr.f32.mxu0 0.0
        %v3847 = vand.u32 %v2216, 4294901760
        %3848 = vmatmul.mubr.f32.gmra.mrb[0].mxu0 %v3847
        %v3849 = vpop.f32.mrb[0].mxu0
        %v3850 = vadd.f32 %v3757, %v3849
        %v3851 = vpop.f32.mrb[0].mxu0
        %3852 = vmatprep.mubr.f32.mxu0 0.0
        %v3853 = vand.u32 %v2219, 4294901760
        %3854 = vmatmul.mubr.f32.gmra.mrb[0].mxu0 %v3853
        %v3855 = vpop.f32.mrb[0].mxu0
        %v3856 = vadd.f32 %v3763, %v3855
        %v3857 = vpop.f32.mrb[0].mxu0
        %3858 = vmatprep.mubr.f32.mxu0 0.0
        %v3859 = vand.u32 %v2222, 4294901760
        %3860 = vmatmul.mubr.f32.gmra.mrb[0].mxu0 %v3859
        %v3861 = vpop.f32.mrb[0].mxu0
        %v3862 = vadd.f32 %v3769, %v3861
        %v3863 = vpop.f32.mrb[0].mxu0
        %3864 = vmatprep.mubr.f32.mxu0 0.0
        %v3865 = vand.u32 %v2225, 4294901760
        %3866 = vmatmul.mubr.f32.gmra.mrb[0].mxu0 %v3865
        %v3867 = vpop.f32.mrb[0].mxu0
        %v3868 = vadd.f32 %v3775, %v3867
        %v3869 = vpop.f32.mrb[0].mxu0
        %3870 = vdwg.mxu0
        %v3871 = vmul.f32 %v3850, %v2109
        %v3872 = vmul.f32 %v3856, %v2109
        %v3873 = vmul.f32 %v3862, %v2109
        %v3874 = vmul.f32 %v3868, %v2109
        %3875 = vadd.xlane.f32.xlu0 %v3871
        %v3876 = vpop.xlane.xlu0 %3875
        %3877 = vadd.xlane.f32.xlu0 %v3872
        %v3878 = vpop.xlane.xlu0 %3877
        %3879 = vadd.xlane.f32.xlu0 %v3873
        %v3880 = vpop.xlane.xlu0 %3879
        %3881 = vadd.xlane.f32.xlu0 %v3874
        %v3882 = vpop.xlane.xlu0 %3881
        %v3883 = vld [vmem:[%s5] sm:$0xff]
        %v3884 = vld [vmem:[%s5 + $0x8] sm:$0xff]
        %v3885 = vld [vmem:[%s5 + $0x10] sm:$0xff]
        %v3886 = vld [vmem:[%s5 + $0x18] sm:$0xff]
        %v3887 = vmul.f32 %v3876, %v3883
        %v3888 = vmul.f32 %v3878, %v3884
        %v3889 = vmul.f32 %v3880, %v3885
        %v3890 = vmul.f32 %v3882, %v3886
        %vm3891 = vcmask 15360
        %v3892 = vsel %vm3891, %v3887, 0.0
        %v3893 = vsel %vm3891, %v3888, 0.0
        %v3894 = vadd.f32 %v3892, %v3893
        %v3895 = vsel %vm3891, %v3889, 0.0
        %v3896 = vadd.f32 %v3894, %v3895
        %v3897 = vsel %vm3891, %v3890, 0.0
        %v3898 = vadd.f32 %v3896, %v3897
        %v3899 = vrot.slane %v3898, 4
        %v3900 = vadd.f32 %v3898, %v3899
        %v3901 = vrot.slane %v3900, 2
        %v3902 = vadd.f32 %v3900, %v3901
        %v3903 = vrot.slane %v3902, 1
        %v3904 = vadd.f32 %v3902, %v3903
        %v3905 = vmax.f32 %v3904, 0.0
        %v3906 = vld [vmem:[%s6] sm:$0xff]
        %v3907 = vld [vmem:[%s6 + $0x8] sm:$0xff]
        %v3908 = vld [vmem:[%s6 + $0x10] sm:$0xff]
        %v3909 = vld [vmem:[%s6 + $0x18] sm:$0xff]
        %v3910 = vmul.f32 %v3906, %v3905
        %v3911 = vmul.f32 %v3907, %v3905
        %v3912 = vmul.f32 %v3908, %v3905
        %v3913 = vmul.f32 %v3909, %v3905
        %v3914 = vsel %vm3891, %v3910, 0.0
        %3915 = vadd.xlane.f32.xlu0 %v3914
        %v3916 = vpop.xlane.xlu0 %3915
        %v3917 = vsel %vm3891, %v3911, 0.0
        %3918 = vadd.xlane.f32.xlu0 %v3917
        %v3919 = vpop.xlane.xlu0 %3918
        %v3920 = vsel %vm3891, %v3912, 0.0
        %3921 = vadd.xlane.f32.xlu0 %v3920
        %v3922 = vpop.xlane.xlu0 %3921
        %v3923 = vsel %vm3891, %v3913, 0.0
        %3924 = vadd.xlane.f32.xlu0 %v3923
        %v3925 = vpop.xlane.xlu0 %3924
        %v3926 = vxor.u32 %v3916, 2147483648
        %v3927 = vxor.u32 %v3919, 2147483648
        %v3928 = vxor.u32 %v3922, 2147483648
        %v3929 = vxor.u32 %v3925, 2147483648
        %v3930 = vmul.f32 %v3926, 1.442695
        %v3931 = vpow.pop %v3930
        %v3932 = vmul.f32 %v3927, 1.442695
        %v3933 = vpow.pop %v3932
        %v3934 = vmul.f32 %v3928, 1.442695
        %v3935 = vpow.pop %v3934
        %v3936 = vmul.f32 %v3929, 1.442695
        %v3937 = vpow.pop %v3936
        %v3938 = vadd.f32 %v3931, 1.0
        %v3939 = vadd.f32 %v3933, 1.0
        %v3940 = vadd.f32 %v3935, 1.0
        %v3941 = vadd.f32 %v3937, 1.0
        %v3942 = vrcp.pop %v3938
        %v3943 = vmul.f32 1.0, %v3942
        %v3944 = vrcp.pop %v3939
        %v3945 = vmul.f32 1.0, %v3944
        %v3946 = vrcp.pop %v3940
        %v3947 = vmul.f32 1.0, %v3946
        %v3948 = vrcp.pop %v3941
        %v3949 = vmul.f32 1.0, %v3948
        %v3950 = vmul.f32 %v3871, %v3943
        %v3951 = vmul.f32 %v3872, %v3945
        %v3952 = vmul.f32 %v3873, %v3947
        %v3953 = vmul.f32 %v3874, %v3949
        %v3954 = vadd.f32 %v3950, %v340
        %v3955 = vadd.f32 %v3951, %v341
        %v3956 = vadd.f32 %v3952, %v342
        %v3957 = vadd.f32 %v3953, %v343
        %v3958 = vmax.f32 %v3954, 0.0
        %v3959 = vmax.f32 %v3955, 0.0
        %v3960 = vmax.f32 %v3956, 0.0
        %v3961 = vmax.f32 %v3957, 0.0
        %3962 = vst [vmem:[%s338] sm:$0xff] %v3958
        %3963 = vst [vmem:[%s338 + $0x8] sm:$0xff] %v3959
        %3964 = vst [vmem:[%s338 + $0x10] sm:$0xff] %v3960
        %3965 = vst [vmem:[%s338 + $0x18] sm:$0xff] %v3961
        %s3966 = sand.u32 %s207, 1
        %s3967 = scalar_lea.sflag [#allocation4], %s3966
        %s3968 = sand.u32 %s207, 1
        %s3969 = smul.addr %s3968, 32
        %s3970 = scalar_lea.vmem [#allocation7], %s3969
        // Predicated region
        $region61: #{tpu_custom_call.1} parent=51 // pred_check
          %p3971 = pneg %p217
        $region62: #{tpu_custom_call.1} parent=51 // pred_check_branch
          %3973 = sbr.rel (%p3971) target = $region64
        $region63: #{tpu_custom_call.1} parent=51 // pred_region
          %s3975 = ssub.s32 512, 512
          %3976 = vsyncadd %s3967, %s3975
          %s3977 = smul.addr %s26, 4
          %s3978 = smul.addr %s3977, 128
          %s3979 = scalar_lea.hbm %s8, %s3978
          %s3980 = sshll.u32 %s3970, 4
          %s3981 = int_to_ptr.vmem [resolvable:$true] %s3980
          %3986 = dma.vmem_to_hbm [thread:$0]  %s3981, 512, %s3979, %s3967, 128, 128, 8
        $region64: #{tpu_custom_call.1} parent=51 // pred_fallthru
          _
      $region52: #{tpu_custom_call.1} parent=5 // pred_fallthru
        _
      %p3987 = scmp.le.s32.totalorder 2, %s21
      // Predicated region
      $region65: #{tpu_custom_call.1} parent=5 // pred_check
        %p3988 = pneg %p3987
      $region66: #{tpu_custom_call.1} parent=5 // pred_check_branch
        %3990 = sbr.rel (%p3988) target = $region68
      $region67: #{tpu_custom_call.1} parent=5 // pred_region
        %s3991 = ssub.s32 %s21, 2
        // Predicated region
        $region69: #{tpu_custom_call.1} parent=67 // pred_check
          %p3992 = pneg %p223
        $region70: #{tpu_custom_call.1} parent=67 // pred_check_branch
          %3994 = sbr.rel (%p3992) target = $region72
        $region71: #{tpu_custom_call.1} parent=67 // pred_region
          %s3995 = sand.u32 %s208, 1
          %s3996 = scalar_lea.sflag [#allocation4], %s3995
          %s3997 = sand.u32 %s208, 1
          %s3998 = smul.addr %s3997, 32
          %s3999 = scalar_lea.vmem [#allocation7], %s3998
          %4000 = dma.done %s3996, 512
        $region72: #{tpu_custom_call.1} parent=67 // pred_fallthru
          _
      $region68: #{tpu_custom_call.1} parent=5 // pred_fallthru
        _
    $region6: #{tpu_custom_call.1} parent=1 // loop_footer
      %s25 = sadd.s32 1, %s21
    $region7: #{tpu_custom_call.1} parent=1 // loop_footer_branch
      %20 = sbr.rel target = $region3
    $region8: #{tpu_custom_call.1} parent=1 // loop_exit
      _
    %4001 = vsyncpa [#allocation3], 1
    %s4002 = scalar_lea.sflag [#allocation3], 1
    %4003 = vsyncpa %s4002, 1
    %4004 = vsyncpa [#allocation6], 1
    %4005 = vsyncpa [#allocation4], 1
    %s4006 = scalar_lea.sflag [#allocation4], 1
    %4007 = vsyncpa %s4006, 1

</llo_original>
